<compile_context>
chip_gen: v7x
topology: tpu7x:2x2x1
jax: 0.10.0
libtpu: 0.0.40
codegen_flags: <defaults>
</compile_context>

<pallas_src>
import functools

import jax
import jax.numpy as jnp
from jax import lax
from jax.experimental import pallas as pl
from jax.experimental.pallas import tpu as pltpu

LN_EPS = 1e-6
NEG_BIG = -1e9
BF16 = jnp.bfloat16
VMEM_CLAMP = 64 * 1024 * 1024   # physical VMEM of the smallest target (v7x)


# ----------------------------------------------------------------------------
# small in-kernel helpers
# ----------------------------------------------------------------------------
def _gelu(x):
    return 0.5 * x * (1.0 + jnp.tanh(0.7978845608028654 * (x + 0.044715 * x * x * x)))


def _layernorm(x, gamma, beta):
    mu = jnp.mean(x, axis=-1, keepdims=True)
    var = jnp.mean(jnp.square(x - mu), axis=-1, keepdims=True)
    return (x - mu) * lax.rsqrt(var + LN_EPS) * gamma + beta


def _dot(a, b):
    return jnp.dot(a, b, preferred_element_type=jnp.float32)


def _pick_tile(dim, pref, align):
    if dim <= pref:
        return dim
    t = (pref // align) * align
    while t >= align:
        if dim % t == 0:
            return t
        t -= align
    return dim


def _const_spec(a, grid_rank):
    nd = a.ndim
    if grid_rank == 1:
        return pl.BlockSpec(a.shape, lambda i, nd=nd: (0,) * nd)
    if grid_rank == 2:
        return pl.BlockSpec(a.shape, lambda i, j, nd=nd: (0,) * nd)
    return pl.BlockSpec(a.shape, lambda *args, nd=nd: (0,) * nd)


def _nbytes(*arrays):
    return sum(int(a.size) * a.dtype.itemsize for a in arrays)


def _compiler_params(semantics, est_vmem_bytes):
    limit = int(min(max(est_vmem_bytes * 5 // 4, 16 * 1024 * 1024), VMEM_CLAMP))
    return pltpu.CompilerParams(dimension_semantics=semantics,
                                vmem_limit_bytes=limit)


def _head_group(num_heads, head_dim):
    cap = max(1, 128 // head_dim)
    for g in range(min(cap, num_heads), 0, -1):
        if num_heads % g == 0:
            return g
    return 1


# ----------------------------------------------------------------------------
# kernel 1: fused transformer encoder layer (post-LN, BERT-style)
#   grid = (batch [parallel], query tiles [arbitrary]); QKV projected once per
#   batch element into scratch; attention heads processed in 128-lane groups.
# ----------------------------------------------------------------------------
def encoder_layer_kernel(x_ref, xq_ref, mask_ref,
                         wqkv_ref, bqkv_ref, wo_ref, bo_ref,
                         g1_ref, be1_ref, w1_ref, b1_ref, w2_ref, b2_ref,
                         g2_ref, be2_ref,
                         o_ref, qkv_s, ctx_s, *, num_heads, q_tile):
    qt = pl.program_id(1)
    S = x_ref.shape[1]
    H = x_ref.shape[2]
    hd = H // num_heads
    hpg = _head_group(num_heads, hd)        # heads per 128-lane group
    gw = hpg * hd
    scale = 1.0 / float(hd) ** 0.5

    # fused QKV projection for the whole sequence, once per batch element
    @pl.when(qt == 0)
    def _():
        x_full = x_ref[0]                                           # (S, H) f32
        qkv_s[...] = (_dot(x_full.astype(BF16), wqkv_ref[...])
                      + bqkv_ref[...]).astype(BF16)                 # (S, 3H)

    xq = xq_ref[0]                                                  # (tq, H) f32
    mbias = mask_ref[0]                                             # (1, S)
    row0 = pl.multiple_of(qt * q_tile, q_tile)

    # TODO(synk): per-head QK^T/PV contractions are K=N=hd (<256); a head-batched
    #             dot_general would need a head-major relayout of qkv_s.
    for g in range(num_heads // hpg):
        c0 = g * gw
        qg = qkv_s[pl.ds(row0, q_tile), pl.ds(c0, gw)]              # (tq, gw) lane-dense
        kg = qkv_s[:, pl.ds(H + c0, gw)]                            # (S, gw)
        vg = qkv_s[:, pl.ds(2 * H + c0, gw)]                        # (S, gw)
        parts = []
        for i in range(hpg):
            q_h = qg[:, i * hd:(i + 1) * hd]
            k_h = kg[:, i * hd:(i + 1) * hd]
            v_h = vg[:, i * hd:(i + 1) * hd]
            s = lax.dot_general(q_h, k_h, (((1,), (1,)), ((), ())),
                                preferred_element_type=jnp.float32)  # (tq, S)
            s = s * scale + mbias
            s = s - jnp.max(s, axis=-1, keepdims=True)
            p = jnp.exp(s)
            p = p * pl.reciprocal(jnp.sum(p, axis=-1, keepdims=True), approx=True)
            parts.append(_dot(p.astype(BF16), v_h).astype(BF16))
        # single 128-lane-dense store per head group
        ctx_s[:, pl.ds(c0, gw)] = jnp.concatenate(parts, axis=-1)

    attn_out = _dot(ctx_s[...], wo_ref[...]) + bo_ref[...]
    y = _layernorm(xq + attn_out, g1_ref[...], be1_ref[...])
    hmid = _gelu(_dot(y.astype(BF16), w1_ref[...]) + b1_ref[...])
    ffn = _dot(hmid.astype(BF16), w2_ref[...]) + b2_ref[...]
    o_ref[0] = _layernorm(y + ffn, g2_ref[...], be2_ref[...])


def encoder_layer_forward(x, mask_bias, p, num_heads, *, q_tile_pref=256):
    B, S, H = x.shape
    I = p["w1"].shape[1]
    tq = _pick_tile(S, q_tile_pref, 8)
    names = ("wqkv", "bqkv", "wo", "bo", "ln1_g", "ln1_b",
             "w1", "b1", "w2", "b2", "ln2_g", "ln2_b")
    ws = [p[k] for k in names]

    est = (2 * _nbytes(*ws)                         # constant weights (double-buffered)
           + 2 * (S * H * 4) + 2 * (tq * H * 4)     # x (full) + x (q-tile) blocks
           + 2 * (S * 4)                            # mask block
           + 2 * (tq * H * 4)                       # output block
           + S * 3 * H * 2 + tq * H * 2             # qkv / ctx scratch
           + 2 * tq * S * 4 + tq * I * 4)           # live fp32 intermediates

    return pl.pallas_call(
        functools.partial(encoder_layer_kernel, num_heads=num_heads, q_tile=tq),
        out_shape=jax.ShapeDtypeStruct((B, S, H), jnp.float32),
        grid=(B, S // tq),
        in_specs=[pl.BlockSpec((1, S, H), lambda b, q: (b, 0, 0)),   # full seq (QKV proj)
                  pl.BlockSpec((1, tq, H), lambda b, q: (b, q, 0)),  # q-tile rows (residual)
                  pl.BlockSpec((1, 1, S), lambda b, q: (b, 0, 0))]
                 + [_const_spec(w, 2) for w in ws],
        out_specs=pl.BlockSpec((1, tq, H), lambda b, q: (b, q, 0)),
        scratch_shapes=[pltpu.VMEM((S, 3 * H), BF16),
                        pltpu.VMEM((tq, H), BF16)],
        compiler_params=_compiler_params(("parallel", "arbitrary"), est),
    )(x, x, mask_bias, *ws)


# ----------------------------------------------------------------------------
# kernel 2: classification head (shared by MLM and TCR)
#   grid = (row tiles [parallel], vocab tiles [arbitrary]); `u` computed once
#   per row tile into scratch, online logsumexp + running target logit in
#   scratch; per-row-tile (loss, correct, count) partials, reduced in JAX.
# ----------------------------------------------------------------------------
def cls_head_kernel(x_ref, lab_ref, wu_ref, bu_ref, g_ref, b_ref,
                    wp_ref, bp_ref, out_ref, u_s, m_s, l_s, tgt_s):
    vj = pl.program_id(1)
    nvj = pl.num_programs(1)

    @pl.when(vj == 0)
    def _():
        x = x_ref[...]                                             # (tn, H) f32
        u = _layernorm(_gelu(_dot(x.astype(BF16), wu_ref[...]) + bu_ref[...]),
                       g_ref[...], b_ref[...])
        u_s[...] = u.astype(BF16)
        m_s[...] = jnp.full_like(m_s, NEG_BIG)
        l_s[...] = jnp.zeros_like(l_s)
        tgt_s[...] = jnp.zeros_like(tgt_s)

    logits = _dot(u_s[...], wp_ref[...]) + bp_ref[...]             # (tn, tv) f32
    tn, tv = logits.shape
    lab = lab_ref[...]                                             # (tn, 1) int32, -1 = ignore
    col = lax.broadcasted_iota(jnp.int32, (tn, tv), 1) + vj * tv
    tgt_s[...] += jnp.sum(jnp.where(col == lab, logits, 0.0), axis=-1, keepdims=True)

    m_tile = jnp.max(logits, axis=-1, keepdims=True)
    m_new = jnp.maximum(m_s[...], m_tile)
    l_s[...] = (l_s[...] * jnp.exp(m_s[...] - m_new)
                + jnp.sum(jnp.exp(logits - m_new), axis=-1, keepdims=True))
    m_s[...] = m_new

    @pl.when(vj == nvj - 1)
    def _():
        lse = m_s[...] + jnp.log(l_s[...])
        nll = lse - tgt_s[...]
        valid = lab > -1
        validf = valid.astype(jnp.float32)
        # ties with the max count as correct
        correct = jnp.where(valid & (tgt_s[...] >= m_s[...]), 1.0, 0.0)
        loss_sum = jnp.sum(nll * validf, keepdims=True).reshape(1, 1)
        cor_sum = jnp.sum(correct, keepdims=True).reshape(1, 1)
        cnt_sum = jnp.sum(validf, keepdims=True).reshape(1, 1)
        row = lax.broadcasted_iota(jnp.int32, (8, 128), 0)
        lane = lax.broadcasted_iota(jnp.int32, (8, 128), 1)
        first = row == 0
        out_ref[0] = (jnp.where(first & (lane == 0), loss_sum, 0.0)
                      + jnp.where(first & (lane == 1), cor_sum, 0.0)
                      + jnp.where(first & (lane == 2), cnt_sum, 0.0))


def cls_head_forward(encoded, label, p, *, row_tile=1024, vocab_tile=2048):
    B, S, H = encoded.shape
    N = B * S
    x = encoded.reshape(N, H)
    lab = label.reshape(N, 1).astype(jnp.int32)
    wu, bu, g, b, wp, bp = p["wu"], p["bu"], p["ln_g"], p["ln_b"], p["wp"], p["bp"]
    V = wp.shape[1]

    tn = _pick_tile(N, row_tile, 8)
    tv = _pick_tile(V, vocab_tile, 128)
    R, VT = N // tn, V // tv

    est = (2 * (tn * H * 4 + tn * 4)            # x / label blocks
           + 2 * (H * tv * 2 + tv * 4)          # wp / bp tiles
           + 2 * _nbytes(wu, bu, g, b)          # constant transform weights
           + 2 * 8 * 128 * 4                    # output block
           + tn * H * 2 + 3 * tn * 4            # scratch
           + tn * tv * 4)                       # logits tile

    parts = pl.pallas_call(
        cls_head_kernel,
        out_shape=jax.ShapeDtypeStruct((R, 8, 128), jnp.float32),
        grid=(R, VT),
        in_specs=[
            pl.BlockSpec((tn, H), lambda ri, vj: (ri, 0)),
            pl.BlockSpec((tn, 1), lambda ri, vj: (ri, 0)),
            _const_spec(wu, 2), _const_spec(bu, 2),
            _const_spec(g, 2), _const_spec(b, 2),
            pl.BlockSpec((H, tv), lambda ri, vj: (0, vj)),
            pl.BlockSpec((1, tv), lambda ri, vj: (0, vj)),
        ],
        out_specs=pl.BlockSpec((1, 8, 128), lambda ri, vj: (ri, 0, 0)),
        scratch_shapes=[
            pltpu.VMEM((tn, H), BF16),
            pltpu.VMEM((tn, 1), jnp.float32),
            pltpu.VMEM((tn, 1), jnp.float32),
            pltpu.VMEM((tn, 1), jnp.float32),
        ],
        compiler_params=_compiler_params(("parallel", "arbitrary"), est),
    )(x, lab, wu, bu, g, b, wp, bp)

    loss_sum = jnp.sum(parts[:, 0, 0])
    correct = jnp.sum(parts[:, 0, 1])
    count = jnp.sum(parts[:, 0, 2])
    loss = loss_sum / jnp.maximum(count, 1e-6)
    return loss, correct, count


def tcr_head_forward(encoded, indicator, label, p):
    # TODO(synk): exact TcrHead semantics reconstructed as 2-way token
    #             classification with label == -1 ignored; indicator unused here.
    del indicator
    return cls_head_forward(encoded, label, p, vocab_tile=128)


# ----------------------------------------------------------------------------
# kernel 3: CLC head — in-sequence similarity matching, sep/tok triples
#   grid over batch ("parallel"); per-batch partial sums reduced in JAX.
# TODO(synk): clc_label encoding reconstructed: label>0 marks blanked-cell [SEP]
#             rows, label<0 marks candidate-token rows, |label|-1 = target pos.
# ----------------------------------------------------------------------------
def clc_head_kernel(x_ref, ind_ref, lab_ref, wu_ref, bu_ref, g_ref, b_ref, out_ref):
    x = x_ref[0]                                   # (S, H)
    ind = ind_ref[0]                               # (1, S)
    lab = lab_ref[0]                               # (S, 1)
    S = x.shape[0]
    H = x.shape[1]
    scale = 1.0 / float(H) ** 0.5

    u = _layernorm(_gelu(_dot(x.astype(BF16), wu_ref[...]) + bu_ref[...]),
                   g_ref[...], b_ref[...])
    ub = u.astype(BF16)
    s = lax.dot_general(ub, ub, (((1,), (1,)), ((), ())),
                        preferred_element_type=jnp.float32) * scale      # (S, S)
    row_i = lax.broadcasted_iota(jnp.int32, (S, S), 0)
    col_i = lax.broadcasted_iota(jnp.int32, (S, S), 1)
    s = jnp.where(ind == 0, NEG_BIG, s)            # mask padding candidates
    s = jnp.where(row_i == col_i, NEG_BIG, s)      # mask self-match

    m = jnp.max(s, axis=-1, keepdims=True)
    lse = m + jnp.log(jnp.sum(jnp.exp(s - m), axis=-1, keepdims=True))
    logp = s - lse

    tgt = jnp.abs(lab) - 1                         # (S, 1); label 0 -> -1 (ignored)
    lp_t = jnp.sum(jnp.where(col_i == tgt, logp, 0.0), axis=-1, keepdims=True)
    hit = (lp_t >= jnp.max(logp, axis=-1, keepdims=True)).astype(jnp.float32)

    sep_m = (lab > 0).astype(jnp.float32)
    tok_m = (lab < 0).astype(jnp.float32)

    vals = (jnp.sum(-lp_t * sep_m, keepdims=True).reshape(1, 1),
            jnp.sum(hit * sep_m, keepdims=True).reshape(1, 1),
            jnp.sum(sep_m, keepdims=True).reshape(1, 1),
            jnp.sum(-lp_t * tok_m, keepdims=True).reshape(1, 1),
            jnp.sum(hit * tok_m, keepdims=True).reshape(1, 1),
            jnp.sum(tok_m, keepdims=True).reshape(1, 1))
    row = lax.broadcasted_iota(jnp.int32, (8, 128), 0)
    lane = lax.broadcasted_iota(jnp.int32, (8, 128), 1)
    out = jnp.zeros((8, 128), jnp.float32)
    for i, v in enumerate(vals):
        out = out + jnp.where((row == 0) & (lane == i), v, 0.0)
    out_ref[0] = out


def clc_head_forward(encoded, indicator, clc_label, p):
    B, S, H = encoded.shape
    ind = indicator.reshape(B, 1, S).astype(jnp.int32)
    lab = clc_label.reshape(B, S, 1).astype(jnp.int32)
    wu, bu, g, b = p["wu"], p["bu"], p["ln_g"], p["ln_b"]

    est = (2 * (S * H * 4 + S * 4 + S * 4)
           + 2 * _nbytes(wu, bu, g, b)
           + 2 * 8 * 128 * 4
           + 3 * S * S * 4 + 2 * S * H * 4)

    parts = pl.pallas_call(
        clc_head_kernel,
        out_shape=jax.ShapeDtypeStruct((B, 8, 128), jnp.float32),
        grid=(B,),
        in_specs=[
            pl.BlockSpec((1, S, H), lambda bb: (bb, 0, 0)),
            pl.BlockSpec((1, 1, S), lambda bb: (bb, 0, 0)),
            pl.BlockSpec((1, S, 1), lambda bb: (bb, 0, 0)),
            _const_spec(wu, 1), _const_spec(bu, 1),
            _const_spec(g, 1), _const_spec(b, 1),
        ],
        out_specs=pl.BlockSpec((1, 8, 128), lambda bb: (bb, 0, 0)),
        compiler_params=_compiler_params(("parallel",), est),
    )(encoded, ind, lab, wu, bu, g, b)

    sep_loss_sum = jnp.sum(parts[:, 0, 0])
    sep_cor = jnp.sum(parts[:, 0, 1])
    sep_cnt = jnp.sum(parts[:, 0, 2])
    tok_loss_sum = jnp.sum(parts[:, 0, 3])
    tok_cor = jnp.sum(parts[:, 0, 4])
    tok_cnt = jnp.sum(parts[:, 0, 5])
    sep_triple = (sep_loss_sum / jnp.maximum(sep_cnt, 1e-6), sep_cor, sep_cnt)
    tok_triple = (tok_loss_sum / jnp.maximum(tok_cnt, 1e-6), tok_cor, tok_cnt)
    return sep_triple, tok_triple


# ----------------------------------------------------------------------------
# parameters (torch-like init, then one-time fuse/cast outside the step)
# ----------------------------------------------------------------------------
def init_params(key, cfg):
    keys = iter(jax.random.split(key, 64))

    def nrm(shape):
        return jax.random.normal(next(keys), shape, jnp.float32) * 0.02

    H = cfg["hidden_size"]
    V = cfg["vocab_size"]
    I = cfg["intermediate_size"]

    def ones(n): return jnp.ones((1, n), jnp.float32)
    def zeros(n): return jnp.zeros((1, n), jnp.float32)

    emb = dict(
        token=nrm((V, H)),
        mag=nrm((cfg["magnitude_size"] + 2, H)),
        pre=nrm((cfg["precision_size"] + 2, H)),
        top=nrm((cfg["top_digit_size"] + 2, H)),
        low=nrm((cfg["low_digit_size"] + 2, H)),
        order=nrm((cfg["max_cell_length"], H)),
        pos_top=nrm((cfg["row_size"] + 1, H)),
        pos_left=nrm((cfg["column_size"] + 1, H)),
        fmt_w=nrm((cfg["num_format_feature"], H)),
        ln_g=ones(H), ln_b=zeros(H),
    )
    layers = []
    for _ in range(cfg["num_layers"]):
        layers.append(dict(
            wq=nrm((H, H)), bq=zeros(H), wk=nrm((H, H)), bk=zeros(H),
            wv=nrm((H, H)), bv=zeros(H), wo=nrm((H, H)), bo=zeros(H),
            ln1_g=ones(H), ln1_b=zeros(H),
            w1=nrm((H, I)), b1=zeros(I), w2=nrm((I, H)), b2=zeros(H),
            ln2_g=ones(H), ln2_b=zeros(H),
        ))
    mlm = dict(wu=nrm((H, H)), bu=zeros(H), ln_g=ones(H), ln_b=zeros(H),
               wp=nrm((H, V)), bp=zeros(V))
    clc = dict(wu=nrm((H, H)), bu=zeros(H), ln_g=ones(H), ln_b=zeros(H))
    tcr = dict(wu=nrm((H, H)), bu=zeros(H), ln_g=ones(H), ln_b=zeros(H),
               wp=nrm((H, 2)), bp=zeros(2))
    return dict(emb=emb, layers=layers, mlm=mlm, clc=clc, tcr=tcr)


def prepare_params(params):
    """One-time weight fuse / bf16 cast / TCR padding, done OUTSIDE the jitted step."""
    layers = []
    for lp in params["layers"]:
        layers.append(dict(
            wqkv=jnp.concatenate([lp["wq"], lp["wk"], lp["wv"]], axis=1).astype(BF16),
            bqkv=jnp.concatenate([lp["bq"], lp["bk"], lp["bv"]], axis=1),
            wo=lp["wo"].astype(BF16), bo=lp["bo"],
            ln1_g=lp["ln1_g"], ln1_b=lp["ln1_b"],
            w1=lp["w1"].astype(BF16), b1=lp["b1"],
            w2=lp["w2"].astype(BF16), b2=lp["b2"],
            ln2_g=lp["ln2_g"], ln2_b=lp["ln2_b"]))
    mlm = dict(params["mlm"],
               wu=params["mlm"]["wu"].astype(BF16),
               wp=params["mlm"]["wp"].astype(BF16))
    clc = dict(params["clc"], wu=params["clc"]["wu"].astype(BF16))
    t = params["tcr"]
    H = t["wp"].shape[0]
    # pad 2-class projection to a lane-dense 128-wide matmul; padded columns get
    # a -1e9 bias so they never win the softmax / argmax.
    wp_pad = jnp.zeros((H, 128), jnp.float32).at[:, :2].set(t["wp"]).astype(BF16)
    bp_pad = jnp.full((1, 128), NEG_BIG, jnp.float32).at[:, :2].set(t["bp"])
    tcr = dict(t, wu=t["wu"].astype(BF16), wp=wp_pad, bp=bp_pad)
    return dict(emb=params["emb"], layers=layers, mlm=mlm, clc=clc, tcr=tcr)


# ----------------------------------------------------------------------------
# full model forward
# ----------------------------------------------------------------------------
def tuta_base_forward(params, cfg, token_id, num_mag, num_pre, num_top, num_low,
                      token_order, pos_top, pos_left, format_vec, indicator,
                      mlm_label, clc_label, tcr_label):
    B, S = token_id.shape
    e = params["emb"]

    # Backbone embedding: gathers + sum + format linear + LayerNorm in XLA as a
    # single fused producer of `hidden` (no emb_sum HBM round trip).
    # TODO(synk): pull the gathers into a Pallas kernel via scalar-prefetch DMA
    #             gather if the tables must stay out of XLA.
    x = (e["token"][token_id] + e["order"][token_order]
         + e["mag"][num_mag] + e["pre"][num_pre]
         + e["top"][num_top] + e["low"][num_low]
         + e["pos_top"][pos_top] + e["pos_left"][pos_left]).astype(jnp.float32)
    x = x + jnp.einsum("bsf,fh->bsh", format_vec.astype(jnp.float32), e["fmt_w"])
    mu = jnp.mean(x, axis=-1, keepdims=True)
    var = jnp.mean(jnp.square(x - mu), axis=-1, keepdims=True)
    hidden = (x - mu) * lax.rsqrt(var + LN_EPS) * e["ln_g"] + e["ln_b"]

    # TODO(synk): attention-mask construction assumed: "indicator == 0 is padding".
    mask_bias = jnp.where(indicator == 0, -10000.0, 0.0).astype(jnp.float32).reshape(B, 1, S)
    for layer_p in params["layers"]:
        hidden = encoder_layer_forward(hidden, mask_bias, layer_p, cfg["num_heads"])

    mlm_triple = cls_head_forward(hidden, mlm_label, params["mlm"])
    sep_triple, tok_triple = clc_head_forward(hidden, indicator, clc_label, params["clc"])
    tcr_triple = tcr_head_forward(hidden, indicator, tcr_label, params["tcr"])
    return mlm_triple, sep_triple, tok_triple, tcr_triple


# ----------------------------------------------------------------------------
# main
# ----------------------------------------------------------------------------
if __name__ == "__main__":
    cfg = dict(vocab_size=64, hidden_size=32, num_heads=4, num_layers=2,
               intermediate_size=64, magnitude_size=10, precision_size=10,
               top_digit_size=10, low_digit_size=10, max_cell_length=8,
               row_size=32, column_size=32, num_format_feature=11)
    B, S = 2, 16

    key = jax.random.PRNGKey(0)
    kp, *ks = jax.random.split(key, 16)
    params = prepare_params(init_params(kp, cfg))

    token_id = jax.random.randint(ks[0], (B, S), 0, cfg["vocab_size"])
    num_mag = jax.random.randint(ks[1], (B, S), 0, cfg["magnitude_size"] + 2)
    num_pre = jax.random.randint(ks[2], (B, S), 0, cfg["precision_size"] + 2)
    num_top = jax.random.randint(ks[3], (B, S), 0, cfg["top_digit_size"] + 2)
    num_low = jax.random.randint(ks[4], (B, S), 0, cfg["low_digit_size"] + 2)
    token_order = jax.random.randint(ks[5], (B, S), 0, cfg["max_cell_length"])
    pos_top = jax.random.randint(ks[6], (B, S), 0, cfg["row_size"] + 1)
    pos_left = jax.random.randint(ks[7], (B, S), 0, cfg["column_size"] + 1)
    format_vec = jax.random.uniform(ks[8], (B, S, cfg["num_format_feature"]), jnp.float32)

    valid_len = 12
    cell_ids = jnp.arange(S) // 4 + 1
    indicator = jnp.broadcast_to(
        jnp.where(jnp.arange(S) < valid_len, cell_ids, 0), (B, S)).astype(jnp.int32)

    mlm_pick = jax.random.uniform(ks[9], (B, S)) < 0.25
    mlm_rand = jax.random.randint(ks[10], (B, S), 0, cfg["vocab_size"])
    mlm_label = jnp.where(mlm_pick & (indicator > 0), mlm_rand, -1).astype(jnp.int32)

    clc_label = jnp.zeros((B, S), jnp.int32)
    clc_label = clc_label.at[:, 0].set(9)    # sep row 0  -> target position 8
    clc_label = clc_label.at[:, 4].set(10)   # sep row 4  -> target position 9
    clc_label = clc_label.at[:, 8].set(-1)   # tok row 8  -> target position 0
    clc_label = clc_label.at[:, 9].set(-5)   # tok row 9  -> target position 4

    tcr_label = -jnp.ones((B, S), jnp.int32)
    tcr_label = tcr_label.at[:, 0].set(1)
    tcr_label = tcr_label.at[:, 4].set(0)

    @jax.jit
    def fwd(params, *inputs):
        return tuta_base_forward(params, cfg, *inputs)

    out = fwd(params, token_id, num_mag, num_pre, num_top, num_low, token_order,
              pos_top, pos_left, format_vec, indicator, mlm_label, clc_label,
              tcr_label)
    jax.block_until_ready(out)
    print("KERNEL_OK")
</pallas_src>

<mosaic_0001>
module attributes {stable_mosaic.version = 11 : i64} {
  func.func @clc_head_kernel(%arg0: i32, %arg1: memref<1x16x32xf32, #tpu.memory_space<vmem>>, %arg2: memref<1x1x16xi32, #tpu.memory_space<vmem>>, %arg3: memref<1x16x1xi32, #tpu.memory_space<vmem>>, %arg4: memref<32x32xbf16, #tpu.memory_space<vmem>>, %arg5: memref<1x32xf32, #tpu.memory_space<vmem>>, %arg6: memref<1x32xf32, #tpu.memory_space<vmem>>, %arg7: memref<1x32xf32, #tpu.memory_space<vmem>>, %arg8: memref<1x8x128xf32, #tpu.memory_space<vmem>>) attributes {dimension_semantics = [#tpu.dimension_semantics<parallel>], iteration_bounds = array<i64: 2>, scalar_prefetch = 0 : i64, scratch_operands = 0 : i64, tpu.core_type = #tpu.core_type<tc>, window_params = [{transform_indices = @transform_0, window_bounds = array<i64: 1, 16, 32>}, {transform_indices = @transform_1, window_bounds = array<i64: 1, 1, 16>}, {transform_indices = @transform_2, window_bounds = array<i64: 1, 16, 1>}, {pipeline_mode = #tpu.pipeline_mode<synchronous>, transform_indices = @transform_3, window_bounds = array<i64: 32, 32>}, {pipeline_mode = #tpu.pipeline_mode<synchronous>, transform_indices = @transform_4, window_bounds = array<i64: 1, 32>}, {pipeline_mode = #tpu.pipeline_mode<synchronous>, transform_indices = @transform_5, window_bounds = array<i64: 1, 32>}, {pipeline_mode = #tpu.pipeline_mode<synchronous>, transform_indices = @transform_6, window_bounds = array<i64: 1, 32>}, {transform_indices = @transform_7, window_bounds = array<i64: 1, 8, 128>}]} {
    %c0 = arith.constant 0 : index
    %c0_0 = arith.constant 0 : index
    %c0_1 = arith.constant 0 : index
    %0 = vector.load %arg1[%c0, %c0_0, %c0_1] : memref<1x16x32xf32, #tpu.memory_space<vmem>>, vector<1x16x32xf32>
    %1 = vector.shape_cast %0 : vector<1x16x32xf32> to vector<16x32xf32>
    %c0_2 = arith.constant 0 : index
    %c0_3 = arith.constant 0 : index
    %c0_4 = arith.constant 0 : index
    %2 = vector.load %arg2[%c0_2, %c0_3, %c0_4] : memref<1x1x16xi32, #tpu.memory_space<vmem>>, vector<1x1x16xi32>
    %3 = vector.shape_cast %2 : vector<1x1x16xi32> to vector<1x16xi32>
    %c0_5 = arith.constant 0 : index
    %c0_6 = arith.constant 0 : index
    %c0_7 = arith.constant 0 : index
    %4 = vector.load %arg3[%c0_5, %c0_6, %c0_7] : memref<1x16x1xi32, #tpu.memory_space<vmem>>, vector<1x16x1xi32>
    %5 = vector.shape_cast %4 : vector<1x16x1xi32> to vector<16x1xi32>
    %6 = arith.truncf %1 : vector<16x32xf32> to vector<16x32xbf16>
    %c0_8 = arith.constant 0 : index
    %c0_9 = arith.constant 0 : index
    %7 = vector.load %arg4[%c0_8, %c0_9] : memref<32x32xbf16, #tpu.memory_space<vmem>>, vector<32x32xbf16>
    %cst = arith.constant dense<0.000000e+00> : vector<16x32xf32>
    %8 = tpu.matmul %6, %7, %cst {dimension_numbers = #tpu.dot_dimension_numbers<[1], [0], [0], [1], [0, 0, 1, 1], [], []>} : vector<16x32xbf16>, vector<32x32xbf16>, vector<16x32xf32> -> vector<16x32xf32>
    %c0_10 = arith.constant 0 : index
    %c0_11 = arith.constant 0 : index
    %9 = vector.load %arg5[%c0_10, %c0_11] : memref<1x32xf32, #tpu.memory_space<vmem>>, vector<1x32xf32>
    %10 = vector.broadcast %9 : vector<1x32xf32> to vector<16x32xf32>
    %11 = arith.addf %8, %10 : vector<16x32xf32>
    %cst_12 = arith.constant 5.000000e-01 : f32
    %12 = vector.broadcast %cst_12 : f32 to vector<16x32xf32>
    %13 = arith.mulf %12, %11 : vector<16x32xf32>
    %cst_13 = arith.constant 4.471500e-02 : f32
    %14 = vector.broadcast %cst_13 : f32 to vector<16x32xf32>
    %15 = arith.mulf %14, %11 : vector<16x32xf32>
    %16 = arith.mulf %15, %11 : vector<16x32xf32>
    %17 = arith.mulf %16, %11 : vector<16x32xf32>
    %18 = arith.addf %11, %17 : vector<16x32xf32>
    %cst_14 = arith.constant 0.797884583 : f32
    %19 = vector.broadcast %cst_14 : f32 to vector<16x32xf32>
    %20 = arith.mulf %19, %18 : vector<16x32xf32>
    %21 = math.tanh %20 : vector<16x32xf32>
    %cst_15 = arith.constant 1.000000e+00 : f32
    %22 = vector.broadcast %cst_15 : f32 to vector<16x32xf32>
    %23 = arith.addf %22, %21 : vector<16x32xf32>
    %24 = arith.mulf %13, %23 : vector<16x32xf32>
    %c0_16 = arith.constant 0 : index
    %c0_17 = arith.constant 0 : index
    %25 = vector.load %arg6[%c0_16, %c0_17] : memref<1x32xf32, #tpu.memory_space<vmem>>, vector<1x32xf32>
    %c0_18 = arith.constant 0 : index
    %c0_19 = arith.constant 0 : index
    %26 = vector.load %arg7[%c0_18, %c0_19] : memref<1x32xf32, #tpu.memory_space<vmem>>, vector<1x32xf32>
    %cst_20 = arith.constant dense<0.000000e+00> : vector<16xf32>
    %27 = vector.multi_reduction <add>, %24, %cst_20 [1] : vector<16x32xf32> to vector<16xf32>
    %28 = vector.shape_cast %27 : vector<16xf32> to vector<16x1xf32>
    %cst_21 = arith.constant 3.200000e+01 : f32
    %29 = vector.broadcast %cst_21 : f32 to vector<16x1xf32>
    %30 = arith.divf %28, %29 : vector<16x1xf32>
    %31 = vector.broadcast %30 : vector<16x1xf32> to vector<16x32xf32>
    %32 = arith.subf %24, %31 : vector<16x32xf32>
    %33 = arith.mulf %32, %32 : vector<16x32xf32>
    %cst_22 = arith.constant dense<0.000000e+00> : vector<16xf32>
    %34 = vector.multi_reduction <add>, %33, %cst_22 [1] : vector<16x32xf32> to vector<16xf32>
    %35 = vector.shape_cast %34 : vector<16xf32> to vector<16x1xf32>
    %cst_23 = arith.constant 3.200000e+01 : f32
    %36 = vector.broadcast %cst_23 : f32 to vector<16x1xf32>
    %37 = arith.divf %35, %36 : vector<16x1xf32>
    %38 = vector.broadcast %30 : vector<16x1xf32> to vector<16x32xf32>
    %39 = arith.subf %24, %38 : vector<16x32xf32>
    %cst_24 = arith.constant 9.99999997E-7 : f32
    %40 = vector.broadcast %cst_24 : f32 to vector<16x1xf32>
    %41 = arith.addf %37, %40 : vector<16x1xf32>
    %42 = math.rsqrt %41 : vector<16x1xf32>
    %43 = vector.broadcast %42 : vector<16x1xf32> to vector<16x32xf32>
    %44 = arith.mulf %39, %43 : vector<16x32xf32>
    %45 = vector.broadcast %25 : vector<1x32xf32> to vector<16x32xf32>
    %46 = arith.mulf %44, %45 : vector<16x32xf32>
    %47 = vector.broadcast %26 : vector<1x32xf32> to vector<16x32xf32>
    %48 = arith.addf %46, %47 : vector<16x32xf32>
    %49 = arith.truncf %48 : vector<16x32xf32> to vector<16x32xbf16>
    %cst_25 = arith.constant dense<0.000000e+00> : vector<16x16xf32>
    %50 = tpu.matmul %49, %49, %cst_25 {dimension_numbers = #tpu.dot_dimension_numbers<[1], [1], [0], [0], [0, 0, 1, 0], [], []>} : vector<16x32xbf16>, vector<16x32xbf16>, vector<16x16xf32> -> vector<16x16xf32>
    %cst_26 = arith.constant 0.176776692 : f32
    %51 = vector.broadcast %cst_26 : f32 to vector<16x16xf32>
    %52 = arith.mulf %50, %51 : vector<16x16xf32>
    %53 = tpu.iota {dimensions = array<i32: 0>} : vector<16x16xi32>
    %54 = tpu.iota {dimensions = array<i32: 1>} : vector<16x16xi32>
    %c0_i32 = arith.constant 0 : i32
    %55 = vector.broadcast %c0_i32 : i32 to vector<1x16xi32>
    %56 = arith.cmpi eq, %3, %55 : vector<1x16xi32>
    %cst_27 = arith.constant -1.000000e+09 : f32
    %57 = vector.shape_cast %56 : vector<1x16xi1> to vector<1x16xi1>
    %58 = vector.broadcast %57 : vector<1x16xi1> to vector<16x16xi1>
    %59 = vector.broadcast %cst_27 : f32 to vector<16x16xf32>
    %60 = arith.select %58, %59, %52 : vector<16x16xi1>, vector<16x16xf32>
    %61 = arith.cmpi eq, %53, %54 : vector<16x16xi32>
    %cst_28 = arith.constant -1.000000e+09 : f32
    %62 = vector.broadcast %cst_28 : f32 to vector<16x16xf32>
    %63 = arith.select %61, %62, %60 : vector<16x16xi1>, vector<16x16xf32>
    %cst_29 = arith.constant dense<0xFF800000> : vector<16xf32>
    %64 = vector.multi_reduction <maximumf>, %63, %cst_29 [1] : vector<16x16xf32> to vector<16xf32>
    %65 = vector.shape_cast %64 : vector<16xf32> to vector<16x1xf32>
    %66 = vector.broadcast %65 : vector<16x1xf32> to vector<16x16xf32>
    %67 = arith.subf %63, %66 : vector<16x16xf32>
    %68 = math.exp %67 : vector<16x16xf32>
    %cst_30 = arith.constant dense<0.000000e+00> : vector<16xf32>
    %69 = vector.multi_reduction <add>, %68, %cst_30 [1] : vector<16x16xf32> to vector<16xf32>
    %70 = vector.shape_cast %69 : vector<16xf32> to vector<16x1xf32>
    %71 = math.log %70 : vector<16x1xf32>
    %72 = arith.addf %65, %71 : vector<16x1xf32>
    %73 = vector.broadcast %72 : vector<16x1xf32> to vector<16x16xf32>
    %74 = arith.subf %63, %73 : vector<16x16xf32>
    %75 = math.absi %5 : vector<16x1xi32>
    %c1_i32 = arith.constant 1 : i32
    %76 = vector.broadcast %c1_i32 : i32 to vector<16x1xi32>
    %77 = arith.subi %75, %76 : vector<16x1xi32>
    %78 = vector.broadcast %77 : vector<16x1xi32> to vector<16x16xi32>
    %79 = arith.cmpi eq, %54, %78 : vector<16x16xi32>
    %cst_31 = arith.constant 0.000000e+00 : f32
    %80 = vector.broadcast %cst_31 : f32 to vector<16x16xf32>
    %81 = arith.select %79, %74, %80 : vector<16x16xi1>, vector<16x16xf32>
    %cst_32 = arith.constant dense<0.000000e+00> : vector<16xf32>
    %82 = vector.multi_reduction <add>, %81, %cst_32 [1] : vector<16x16xf32> to vector<16xf32>
    %83 = vector.shape_cast %82 : vector<16xf32> to vector<16x1xf32>
    %cst_33 = arith.constant dense<0xFF800000> : vector<16xf32>
    %84 = vector.multi_reduction <maximumf>, %74, %cst_33 [1] : vector<16x16xf32> to vector<16xf32>
    %85 = vector.shape_cast %84 : vector<16xf32> to vector<16x1xf32>
    %86 = arith.cmpf oge, %83, %85 : vector<16x1xf32>
    %87 = arith.extui %86 : vector<16x1xi1> to vector<16x1xi32>
    %88 = arith.sitofp %87 : vector<16x1xi32> to vector<16x1xf32>
    %c0_i32_34 = arith.constant 0 : i32
    %89 = vector.broadcast %c0_i32_34 : i32 to vector<16x1xi32>
    %90 = arith.cmpi sgt, %5, %89 : vector<16x1xi32>
    %91 = arith.extui %90 : vector<16x1xi1> to vector<16x1xi32>
    %92 = arith.sitofp %91 : vector<16x1xi32> to vector<16x1xf32>
    %c0_i32_35 = arith.constant 0 : i32
    %93 = vector.broadcast %c0_i32_35 : i32 to vector<16x1xi32>
    %94 = arith.cmpi slt, %5, %93 : vector<16x1xi32>
    %95 = arith.extui %94 : vector<16x1xi1> to vector<16x1xi32>
    %96 = arith.sitofp %95 : vector<16x1xi32> to vector<16x1xf32>
    %cst_36 = arith.constant 0.000000e+00 : f32
    %97 = vector.broadcast %cst_36 : f32 to vector<16x1xf32>
    %98 = arith.subf %97, %83 : vector<16x1xf32>
    %99 = arith.mulf %98, %92 : vector<16x1xf32>
    %100 = vector.shape_cast %99 : vector<16x1xf32> to vector<1x16x1xf32>
    %cst_37 = arith.constant dense<0.000000e+00> : vector<1xf32>
    %101 = vector.multi_reduction <add>, %100, %cst_37 [1, 2] : vector<1x16x1xf32> to vector<1xf32>
    %102 = vector.shape_cast %101 : vector<1xf32> to vector<1x1x1xf32>
    %103 = vector.extract %102[0, 0, 0] : f32 from vector<1x1x1xf32>
    %104 = vector.broadcast %103 : f32 to vector<1x1xf32>
    %105 = arith.mulf %88, %92 : vector<16x1xf32>
    %106 = vector.shape_cast %105 : vector<16x1xf32> to vector<1x16x1xf32>
    %cst_38 = arith.constant dense<0.000000e+00> : vector<1xf32>
    %107 = vector.multi_reduction <add>, %106, %cst_38 [1, 2] : vector<1x16x1xf32> to vector<1xf32>
    %108 = vector.shape_cast %107 : vector<1xf32> to vector<1x1x1xf32>
    %109 = vector.extract %108[0, 0, 0] : f32 from vector<1x1x1xf32>
    %110 = vector.broadcast %109 : f32 to vector<1x1xf32>
    %111 = vector.shape_cast %92 : vector<16x1xf32> to vector<1x16x1xf32>
    %cst_39 = arith.constant dense<0.000000e+00> : vector<1xf32>
    %112 = vector.multi_reduction <add>, %111, %cst_39 [1, 2] : vector<1x16x1xf32> to vector<1xf32>
    %113 = vector.shape_cast %112 : vector<1xf32> to vector<1x1x1xf32>
    %114 = vector.extract %113[0, 0, 0] : f32 from vector<1x1x1xf32>
    %115 = vector.broadcast %114 : f32 to vector<1x1xf32>
    %cst_40 = arith.constant 0.000000e+00 : f32
    %116 = vector.broadcast %cst_40 : f32 to vector<16x1xf32>
    %117 = arith.subf %116, %83 : vector<16x1xf32>
    %118 = arith.mulf %117, %96 : vector<16x1xf32>
    %119 = vector.shape_cast %118 : vector<16x1xf32> to vector<1x16x1xf32>
    %cst_41 = arith.constant dense<0.000000e+00> : vector<1xf32>
    %120 = vector.multi_reduction <add>, %119, %cst_41 [1, 2] : vector<1x16x1xf32> to vector<1xf32>
    %121 = vector.shape_cast %120 : vector<1xf32> to vector<1x1x1xf32>
    %122 = vector.extract %121[0, 0, 0] : f32 from vector<1x1x1xf32>
    %123 = vector.broadcast %122 : f32 to vector<1x1xf32>
    %124 = arith.mulf %88, %96 : vector<16x1xf32>
    %125 = vector.shape_cast %124 : vector<16x1xf32> to vector<1x16x1xf32>
    %cst_42 = arith.constant dense<0.000000e+00> : vector<1xf32>
    %126 = vector.multi_reduction <add>, %125, %cst_42 [1, 2] : vector<1x16x1xf32> to vector<1xf32>
    %127 = vector.shape_cast %126 : vector<1xf32> to vector<1x1x1xf32>
    %128 = vector.extract %127[0, 0, 0] : f32 from vector<1x1x1xf32>
    %129 = vector.broadcast %128 : f32 to vector<1x1xf32>
    %130 = vector.shape_cast %96 : vector<16x1xf32> to vector<1x16x1xf32>
    %cst_43 = arith.constant dense<0.000000e+00> : vector<1xf32>
    %131 = vector.multi_reduction <add>, %130, %cst_43 [1, 2] : vector<1x16x1xf32> to vector<1xf32>
    %132 = vector.shape_cast %131 : vector<1xf32> to vector<1x1x1xf32>
    %133 = vector.extract %132[0, 0, 0] : f32 from vector<1x1x1xf32>
    %134 = vector.broadcast %133 : f32 to vector<1x1xf32>
    %135 = tpu.iota {dimensions = array<i32: 0>} : vector<8x128xi32>
    %136 = tpu.iota {dimensions = array<i32: 1>} : vector<8x128xi32>
    %cst_44 = arith.constant 0.000000e+00 : f32
    %137 = vector.broadcast %cst_44 : f32 to vector<8x128xf32>
    %c0_i32_45 = arith.constant 0 : i32
    %138 = vector.broadcast %c0_i32_45 : i32 to vector<8x128xi32>
    %139 = arith.cmpi eq, %135, %138 : vector<8x128xi32>
    %c0_i32_46 = arith.constant 0 : i32
    %140 = vector.broadcast %c0_i32_46 : i32 to vector<8x128xi32>
    %141 = arith.cmpi eq, %136, %140 : vector<8x128xi32>
    %142 = arith.andi %139, %141 : vector<8x128xi1>
    %cst_47 = arith.constant 0.000000e+00 : f32
    %143 = vector.shape_cast %104 : vector<1x1xf32> to vector<1x1xf32>
    %144 = vector.broadcast %143 : vector<1x1xf32> to vector<8x128xf32>
    %145 = vector.broadcast %cst_47 : f32 to vector<8x128xf32>
    %146 = arith.select %142, %144, %145 : vector<8x128xi1>, vector<8x128xf32>
    %147 = arith.addf %137, %146 : vector<8x128xf32>
    %c0_i32_48 = arith.constant 0 : i32
    %148 = vector.broadcast %c0_i32_48 : i32 to vector<8x128xi32>
    %149 = arith.cmpi eq, %135, %148 : vector<8x128xi32>
    %c1_i32_49 = arith.constant 1 : i32
    %150 = vector.broadcast %c1_i32_49 : i32 to vector<8x128xi32>
    %151 = arith.cmpi eq, %136, %150 : vector<8x128xi32>
    %152 = arith.andi %149, %151 : vector<8x128xi1>
    %cst_50 = arith.constant 0.000000e+00 : f32
    %153 = vector.shape_cast %110 : vector<1x1xf32> to vector<1x1xf32>
    %154 = vector.broadcast %153 : vector<1x1xf32> to vector<8x128xf32>
    %155 = vector.broadcast %cst_50 : f32 to vector<8x128xf32>
    %156 = arith.select %152, %154, %155 : vector<8x128xi1>, vector<8x128xf32>
    %157 = arith.addf %147, %156 : vector<8x128xf32>
    %c0_i32_51 = arith.constant 0 : i32
    %158 = vector.broadcast %c0_i32_51 : i32 to vector<8x128xi32>
    %159 = arith.cmpi eq, %135, %158 : vector<8x128xi32>
    %c2_i32 = arith.constant 2 : i32
    %160 = vector.broadcast %c2_i32 : i32 to vector<8x128xi32>
    %161 = arith.cmpi eq, %136, %160 : vector<8x128xi32>
    %162 = arith.andi %159, %161 : vector<8x128xi1>
    %cst_52 = arith.constant 0.000000e+00 : f32
    %163 = vector.shape_cast %115 : vector<1x1xf32> to vector<1x1xf32>
    %164 = vector.broadcast %163 : vector<1x1xf32> to vector<8x128xf32>
    %165 = vector.broadcast %cst_52 : f32 to vector<8x128xf32>
    %166 = arith.select %162, %164, %165 : vector<8x128xi1>, vector<8x128xf32>
    %167 = arith.addf %157, %166 : vector<8x128xf32>
    %c0_i32_53 = arith.constant 0 : i32
    %168 = vector.broadcast %c0_i32_53 : i32 to vector<8x128xi32>
    %169 = arith.cmpi eq, %135, %168 : vector<8x128xi32>
    %c3_i32 = arith.constant 3 : i32
    %170 = vector.broadcast %c3_i32 : i32 to vector<8x128xi32>
    %171 = arith.cmpi eq, %136, %170 : vector<8x128xi32>
    %172 = arith.andi %169, %171 : vector<8x128xi1>
    %cst_54 = arith.constant 0.000000e+00 : f32
    %173 = vector.shape_cast %123 : vector<1x1xf32> to vector<1x1xf32>
    %174 = vector.broadcast %173 : vector<1x1xf32> to vector<8x128xf32>
    %175 = vector.broadcast %cst_54 : f32 to vector<8x128xf32>
    %176 = arith.select %172, %174, %175 : vector<8x128xi1>, vector<8x128xf32>
    %177 = arith.addf %167, %176 : vector<8x128xf32>
    %c0_i32_55 = arith.constant 0 : i32
    %178 = vector.broadcast %c0_i32_55 : i32 to vector<8x128xi32>
    %179 = arith.cmpi eq, %135, %178 : vector<8x128xi32>
    %c4_i32 = arith.constant 4 : i32
    %180 = vector.broadcast %c4_i32 : i32 to vector<8x128xi32>
    %181 = arith.cmpi eq, %136, %180 : vector<8x128xi32>
    %182 = arith.andi %179, %181 : vector<8x128xi1>
    %cst_56 = arith.constant 0.000000e+00 : f32
    %183 = vector.shape_cast %129 : vector<1x1xf32> to vector<1x1xf32>
    %184 = vector.broadcast %183 : vector<1x1xf32> to vector<8x128xf32>
    %185 = vector.broadcast %cst_56 : f32 to vector<8x128xf32>
    %186 = arith.select %182, %184, %185 : vector<8x128xi1>, vector<8x128xf32>
    %187 = arith.addf %177, %186 : vector<8x128xf32>
    %c0_i32_57 = arith.constant 0 : i32
    %188 = vector.broadcast %c0_i32_57 : i32 to vector<8x128xi32>
    %189 = arith.cmpi eq, %135, %188 : vector<8x128xi32>
    %c5_i32 = arith.constant 5 : i32
    %190 = vector.broadcast %c5_i32 : i32 to vector<8x128xi32>
    %191 = arith.cmpi eq, %136, %190 : vector<8x128xi32>
    %192 = arith.andi %189, %191 : vector<8x128xi1>
    %cst_58 = arith.constant 0.000000e+00 : f32
    %193 = vector.shape_cast %134 : vector<1x1xf32> to vector<1x1xf32>
    %194 = vector.broadcast %193 : vector<1x1xf32> to vector<8x128xf32>
    %195 = vector.broadcast %cst_58 : f32 to vector<8x128xf32>
    %196 = arith.select %192, %194, %195 : vector<8x128xi1>, vector<8x128xf32>
    %197 = arith.addf %187, %196 : vector<8x128xf32>
    %c0_59 = arith.constant 0 : index
    %c0_60 = arith.constant 0 : index
    %c0_61 = arith.constant 0 : index
    %198 = vector.load %arg8[%c0_59, %c0_60, %c0_61] : memref<1x8x128xf32, #tpu.memory_space<vmem>>, vector<1x8x128xf32>
    %199 = vector.shape_cast %198 : vector<1x8x128xf32> to vector<8x128xf32>
    %200 = vector.shape_cast %197 : vector<8x128xf32> to vector<1x8x128xf32>
    tpu.vector_store %arg8[%c0_59, %c0_60, %c0_61], %200 {strides = array<i32>} : memref<1x8x128xf32, #tpu.memory_space<vmem>>, vector<1x8x128xf32>,
    return
  }
  func.func @transform_0(%arg0: i32) -> (i32, i32, i32) {
    %c0_i32 = arith.constant 0 : i32
    %c0_i32_0 = arith.constant 0 : i32
    %c0_i32_1 = arith.constant 0 : i32
    return %arg0, %c0_i32, %c0_i32_0 : i32, i32, i32
  }
  func.func @transform_1(%arg0: i32) -> (i32, i32, i32) {
    %c0_i32 = arith.constant 0 : i32
    %c0_i32_0 = arith.constant 0 : i32
    %c0_i32_1 = arith.constant 0 : i32
    return %arg0, %c0_i32, %c0_i32_0 : i32, i32, i32
  }
  func.func @transform_2(%arg0: i32) -> (i32, i32, i32) {
    %c0_i32 = arith.constant 0 : i32
    %c0_i32_0 = arith.constant 0 : i32
    %c0_i32_1 = arith.constant 0 : i32
    return %arg0, %c0_i32, %c0_i32_0 : i32, i32, i32
  }
  func.func @transform_3(%arg0: i32) -> (i32, i32) {
    %c0_i32 = arith.constant 0 : i32
    %c0_i32_0 = arith.constant 0 : i32
    %c0_i32_1 = arith.constant 0 : i32
    return %c0_i32, %c0_i32_0 : i32, i32
  }
  func.func @transform_4(%arg0: i32) -> (i32, i32) {
    %c0_i32 = arith.constant 0 : i32
    %c0_i32_0 = arith.constant 0 : i32
    %c0_i32_1 = arith.constant 0 : i32
    return %c0_i32, %c0_i32_0 : i32, i32
  }
  func.func @transform_5(%arg0: i32) -> (i32, i32) {
    %c0_i32 = arith.constant 0 : i32
    %c0_i32_0 = arith.constant 0 : i32
    %c0_i32_1 = arith.constant 0 : i32
    return %c0_i32, %c0_i32_0 : i32, i32
  }
  func.func @transform_6(%arg0: i32) -> (i32, i32) {
    %c0_i32 = arith.constant 0 : i32
    %c0_i32_0 = arith.constant 0 : i32
    %c0_i32_1 = arith.constant 0 : i32
    return %c0_i32, %c0_i32_0 : i32, i32
  }
  func.func @transform_7(%arg0: i32) -> (i32, i32, i32) {
    %c0_i32 = arith.constant 0 : i32
    %c0_i32_0 = arith.constant 0 : i32
    %c0_i32_1 = arith.constant 0 : i32
    return %arg0, %c0_i32, %c0_i32_0 : i32, i32, i32
  }
}

module attributes {stable_mosaic.version = 11 : i64} {
  func.func @cls_head_kernel(%arg0: i32, %arg1: i32, %arg2: memref<32x32xf32, #tpu.memory_space<vmem>>, %arg3: memref<32x1xi32, #tpu.memory_space<vmem>>, %arg4: memref<32x32xbf16, #tpu.memory_space<vmem>>, %arg5: memref<1x32xf32, #tpu.memory_space<vmem>>, %arg6: memref<1x32xf32, #tpu.memory_space<vmem>>, %arg7: memref<1x32xf32, #tpu.memory_space<vmem>>, %arg8: memref<32x64xbf16, #tpu.memory_space<vmem>>, %arg9: memref<1x64xf32, #tpu.memory_space<vmem>>, %arg10: memref<1x8x128xf32, #tpu.memory_space<vmem>>, %arg11: memref<32x32xbf16, #tpu.memory_space<vmem>>, %arg12: memref<32x1xf32, #tpu.memory_space<vmem>>, %arg13: memref<32x1xf32, #tpu.memory_space<vmem>>, %arg14: memref<32x1xf32, #tpu.memory_space<vmem>>) attributes {dimension_semantics = [#tpu.dimension_semantics<parallel>, #tpu.dimension_semantics<arbitrary>], iteration_bounds = array<i64: 1, 1>, scalar_prefetch = 0 : i64, scratch_operands = 4 : i64, tpu.core_type = #tpu.core_type<tc>, window_params = [{transform_indices = @transform_0, window_bounds = array<i64: 32, 32>}, {transform_indices = @transform_1, window_bounds = array<i64: 32, 1>}, {pipeline_mode = #tpu.pipeline_mode<synchronous>, transform_indices = @transform_2, window_bounds = array<i64: 32, 32>}, {pipeline_mode = #tpu.pipeline_mode<synchronous>, transform_indices = @transform_3, window_bounds = array<i64: 1, 32>}, {pipeline_mode = #tpu.pipeline_mode<synchronous>, transform_indices = @transform_4, window_bounds = array<i64: 1, 32>}, {pipeline_mode = #tpu.pipeline_mode<synchronous>, transform_indices = @transform_5, window_bounds = array<i64: 1, 32>}, {transform_indices = @transform_6, window_bounds = array<i64: 32, 64>}, {transform_indices = @transform_7, window_bounds = array<i64: 1, 64>}, {transform_indices = @transform_8, window_bounds = array<i64: 1, 8, 128>}]} {
    %c0_i32 = arith.constant 0 : i32
    %0 = arith.cmpi eq, %arg1, %c0_i32 : i32
    %1 = arith.extui %0 : i1 to i32
    %c0_i32_0 = arith.constant 0 : i32
    %2 = arith.cmpi ne, %1, %c0_i32_0 : i32
    scf.if %2 {
      %c0_28 = arith.constant 0 : index
      %c0_29 = arith.constant 0 : index
      %43 = vector.load %arg2[%c0_28, %c0_29] : memref<32x32xf32, #tpu.memory_space<vmem>>, vector<32x32xf32>
      %44 = arith.truncf %43 : vector<32x32xf32> to vector<32x32xbf16>
      %c0_30 = arith.constant 0 : index
      %c0_31 = arith.constant 0 : index
      %45 = vector.load %arg4[%c0_30, %c0_31] : memref<32x32xbf16, #tpu.memory_space<vmem>>, vector<32x32xbf16>
      %cst_32 = arith.constant dense<0.000000e+00> : vector<32x32xf32>
      %46 = tpu.matmul %44, %45, %cst_32 {dimension_numbers = #tpu.dot_dimension_numbers<[1], [0], [0], [1], [0, 0, 1, 1], [], []>} : vector<32x32xbf16>, vector<32x32xbf16>, vector<32x32xf32> -> vector<32x32xf32>
      %c0_33 = arith.constant 0 : index
      %c0_34 = arith.constant 0 : index
      %47 = vector.load %arg5[%c0_33, %c0_34] : memref<1x32xf32, #tpu.memory_space<vmem>>, vector<1x32xf32>
      %48 = vector.broadcast %47 : vector<1x32xf32> to vector<32x32xf32>
      %49 = arith.addf %46, %48 : vector<32x32xf32>
      %cst_35 = arith.constant 5.000000e-01 : f32
      %50 = vector.broadcast %cst_35 : f32 to vector<32x32xf32>
      %51 = arith.mulf %50, %49 : vector<32x32xf32>
      %cst_36 = arith.constant 4.471500e-02 : f32
      %52 = vector.broadcast %cst_36 : f32 to vector<32x32xf32>
      %53 = arith.mulf %52, %49 : vector<32x32xf32>
      %54 = arith.mulf %53, %49 : vector<32x32xf32>
      %55 = arith.mulf %54, %49 : vector<32x32xf32>
      %56 = arith.addf %49, %55 : vector<32x32xf32>
      %cst_37 = arith.constant 0.797884583 : f32
      %57 = vector.broadcast %cst_37 : f32 to vector<32x32xf32>
      %58 = arith.mulf %57, %56 : vector<32x32xf32>
      %59 = math.tanh %58 : vector<32x32xf32>
      %cst_38 = arith.constant 1.000000e+00 : f32
      %60 = vector.broadcast %cst_38 : f32 to vector<32x32xf32>
      %61 = arith.addf %60, %59 : vector<32x32xf32>
      %62 = arith.mulf %51, %61 : vector<32x32xf32>
      %c0_39 = arith.constant 0 : index
      %c0_40 = arith.constant 0 : index
      %63 = vector.load %arg6[%c0_39, %c0_40] : memref<1x32xf32, #tpu.memory_space<vmem>>, vector<1x32xf32>
      %c0_41 = arith.constant 0 : index
      %c0_42 = arith.constant 0 : index
      %64 = vector.load %arg7[%c0_41, %c0_42] : memref<1x32xf32, #tpu.memory_space<vmem>>, vector<1x32xf32>
      %cst_43 = arith.constant dense<0.000000e+00> : vector<32xf32>
      %65 = vector.multi_reduction <add>, %62, %cst_43 [1] : vector<32x32xf32> to vector<32xf32>
      %66 = vector.shape_cast %65 : vector<32xf32> to vector<32x1xf32>
      %cst_44 = arith.constant 3.200000e+01 : f32
      %67 = vector.broadcast %cst_44 : f32 to vector<32x1xf32>
      %68 = arith.divf %66, %67 : vector<32x1xf32>
      %69 = vector.broadcast %68 : vector<32x1xf32> to vector<32x32xf32>
      %70 = arith.subf %62, %69 : vector<32x32xf32>
      %71 = arith.mulf %70, %70 : vector<32x32xf32>
      %cst_45 = arith.constant dense<0.000000e+00> : vector<32xf32>
      %72 = vector.multi_reduction <add>, %71, %cst_45 [1] : vector<32x32xf32> to vector<32xf32>
      %73 = vector.shape_cast %72 : vector<32xf32> to vector<32x1xf32>
      %cst_46 = arith.constant 3.200000e+01 : f32
      %74 = vector.broadcast %cst_46 : f32 to vector<32x1xf32>
      %75 = arith.divf %73, %74 : vector<32x1xf32>
      %76 = vector.broadcast %68 : vector<32x1xf32> to vector<32x32xf32>
      %77 = arith.subf %62, %76 : vector<32x32xf32>
      %cst_47 = arith.constant 9.99999997E-7 : f32
      %78 = vector.broadcast %cst_47 : f32 to vector<32x1xf32>
      %79 = arith.addf %75, %78 : vector<32x1xf32>
      %80 = math.rsqrt %79 : vector<32x1xf32>
      %81 = vector.broadcast %80 : vector<32x1xf32> to vector<32x32xf32>
      %82 = arith.mulf %77, %81 : vector<32x32xf32>
      %83 = vector.broadcast %63 : vector<1x32xf32> to vector<32x32xf32>
      %84 = arith.mulf %82, %83 : vector<32x32xf32>
      %85 = vector.broadcast %64 : vector<1x32xf32> to vector<32x32xf32>
      %86 = arith.addf %84, %85 : vector<32x32xf32>
      %87 = arith.truncf %86 : vector<32x32xf32> to vector<32x32xbf16>
      %c0_48 = arith.constant 0 : index
      %c0_49 = arith.constant 0 : index
      %88 = vector.load %arg11[%c0_48, %c0_49] : memref<32x32xbf16, #tpu.memory_space<vmem>>, vector<32x32xbf16>
      tpu.vector_store %arg11[%c0_48, %c0_49], %87 {strides = array<i32>} : memref<32x32xbf16, #tpu.memory_space<vmem>>, vector<32x32xbf16>,
      %cst_50 = arith.constant -1.000000e+09 : f32
      %89 = vector.broadcast %cst_50 : f32 to vector<32x1xf32>
      %c0_51 = arith.constant 0 : index
      %c0_52 = arith.constant 0 : index
      %90 = vector.load %arg12[%c0_51, %c0_52] : memref<32x1xf32, #tpu.memory_space<vmem>>, vector<32x1xf32>
      tpu.vector_store %arg12[%c0_51, %c0_52], %89 {strides = array<i32>} : memref<32x1xf32, #tpu.memory_space<vmem>>, vector<32x1xf32>,
      %cst_53 = arith.constant 0.000000e+00 : f32
      %91 = vector.broadcast %cst_53 : f32 to vector<32x1xf32>
      %c0_54 = arith.constant 0 : index
      %c0_55 = arith.constant 0 : index
      %92 = vector.load %arg13[%c0_54, %c0_55] : memref<32x1xf32, #tpu.memory_space<vmem>>, vector<32x1xf32>
      tpu.vector_store %arg13[%c0_54, %c0_55], %91 {strides = array<i32>} : memref<32x1xf32, #tpu.memory_space<vmem>>, vector<32x1xf32>,
      %cst_56 = arith.constant 0.000000e+00 : f32
      %93 = vector.broadcast %cst_56 : f32 to vector<32x1xf32>
      %c0_57 = arith.constant 0 : index
      %c0_58 = arith.constant 0 : index
      %94 = vector.load %arg14[%c0_57, %c0_58] : memref<32x1xf32, #tpu.memory_space<vmem>>, vector<32x1xf32>
      tpu.vector_store %arg14[%c0_57, %c0_58], %93 {strides = array<i32>} : memref<32x1xf32, #tpu.memory_space<vmem>>, vector<32x1xf32>,
    } else {
    }
    %c0 = arith.constant 0 : index
    %c0_1 = arith.constant 0 : index
    %3 = vector.load %arg11[%c0, %c0_1] : memref<32x32xbf16, #tpu.memory_space<vmem>>, vector<32x32xbf16>
    %c0_2 = arith.constant 0 : index
    %c0_3 = arith.constant 0 : index
    %4 = vector.load %arg8[%c0_2, %c0_3] : memref<32x64xbf16, #tpu.memory_space<vmem>>, vector<32x64xbf16>
    %cst = arith.constant dense<0.000000e+00> : vector<32x64xf32>
    %5 = tpu.matmul %3, %4, %cst {dimension_numbers = #tpu.dot_dimension_numbers<[1], [0], [0], [1], [0, 0, 1, 1], [], []>} : vector<32x32xbf16>, vector<32x64xbf16>, vector<32x64xf32> -> vector<32x64xf32>
    %c0_4 = arith.constant 0 : index
    %c0_5 = arith.constant 0 : index
    %6 = vector.load %arg9[%c0_4, %c0_5] : memref<1x64xf32, #tpu.memory_space<vmem>>, vector<1x64xf32>
    %7 = vector.broadcast %6 : vector<1x64xf32> to vector<32x64xf32>
    %8 = arith.addf %5, %7 : vector<32x64xf32>
    %c0_6 = arith.constant 0 : index
    %c0_7 = arith.constant 0 : index
    %9 = vector.load %arg3[%c0_6, %c0_7] : memref<32x1xi32, #tpu.memory_space<vmem>>, vector<32x1xi32>
    %10 = tpu.iota {dimensions = array<i32: 1>} : vector<32x64xi32>
    %c64_i32 = arith.constant 64 : i32
    %11 = arith.muli %arg1, %c64_i32 : i32
    %12 = vector.broadcast %11 : i32 to vector<32x64xi32>
    %13 = arith.addi %10, %12 : vector<32x64xi32>
    %c0_8 = arith.constant 0 : index
    %c0_9 = arith.constant 0 : index
    %14 = vector.load %arg14[%c0_8, %c0_9] : memref<32x1xf32, #tpu.memory_space<vmem>>, vector<32x1xf32>
    %15 = vector.broadcast %9 : vector<32x1xi32> to vector<32x64xi32>
    %16 = arith.cmpi eq, %13, %15 : vector<32x64xi32>
    %cst_10 = arith.constant 0.000000e+00 : f32
    %17 = vector.broadcast %cst_10 : f32 to vector<32x64xf32>
    %18 = arith.select %16, %8, %17 : vector<32x64xi1>, vector<32x64xf32>
    %cst_11 = arith.constant dense<0.000000e+00> : vector<32xf32>
    %19 = vector.multi_reduction <add>, %18, %cst_11 [1] : vector<32x64xf32> to vector<32xf32>
    %20 = vector.shape_cast %19 : vector<32xf32> to vector<32x1xf32>
    %21 = arith.addf %14, %20 : vector<32x1xf32>
    %c0_12 = arith.constant 0 : index
    %c0_13 = arith.constant 0 : index
    %22 = vector.load %arg14[%c0_12, %c0_13] : memref<32x1xf32, #tpu.memory_space<vmem>>, vector<32x1xf32>
    tpu.vector_store %arg14[%c0_12, %c0_13], %21 {strides = array<i32>} : memref<32x1xf32, #tpu.memory_space<vmem>>, vector<32x1xf32>,
    %cst_14 = arith.constant dense<0xFF800000> : vector<32xf32>
    %23 = vector.multi_reduction <maximumf>, %8, %cst_14 [1] : vector<32x64xf32> to vector<32xf32>
    %24 = vector.shape_cast %23 : vector<32xf32> to vector<32x1xf32>
    %c0_15 = arith.constant 0 : index
    %c0_16 = arith.constant 0 : index
    %25 = vector.load %arg12[%c0_15, %c0_16] : memref<32x1xf32, #tpu.memory_space<vmem>>, vector<32x1xf32>
    %26 = arith.maximumf %25, %24 : vector<32x1xf32>
    %c0_17 = arith.constant 0 : index
    %c0_18 = arith.constant 0 : index
    %27 = vector.load %arg13[%c0_17, %c0_18] : memref<32x1xf32, #tpu.memory_space<vmem>>, vector<32x1xf32>
    %c0_19 = arith.constant 0 : index
    %c0_20 = arith.constant 0 : index
    %28 = vector.load %arg12[%c0_19, %c0_20] : memref<32x1xf32, #tpu.memory_space<vmem>>, vector<32x1xf32>
    %29 = arith.subf %28, %26 : vector<32x1xf32>
    %30 = math.exp %29 : vector<32x1xf32>
    %31 = arith.mulf %27, %30 : vector<32x1xf32>
    %32 = vector.broadcast %26 : vector<32x1xf32> to vector<32x64xf32>
    %33 = arith.subf %8, %32 : vector<32x64xf32>
    %34 = math.exp %33 : vector<32x64xf32>
    %cst_21 = arith.constant dense<0.000000e+00> : vector<32xf32>
    %35 = vector.multi_reduction <add>, %34, %cst_21 [1] : vector<32x64xf32> to vector<32xf32>
    %36 = vector.shape_cast %35 : vector<32xf32> to vector<32x1xf32>
    %37 = arith.addf %31, %36 : vector<32x1xf32>
    %c0_22 = arith.constant 0 : index
    %c0_23 = arith.constant 0 : index
    %38 = vector.load %arg13[%c0_22, %c0_23] : memref<32x1xf32, #tpu.memory_space<vmem>>, vector<32x1xf32>
    tpu.vector_store %arg13[%c0_22, %c0_23], %37 {strides = array<i32>} : memref<32x1xf32, #tpu.memory_space<vmem>>, vector<32x1xf32>,
    %c0_24 = arith.constant 0 : index
    %c0_25 = arith.constant 0 : index
    %39 = vector.load %arg12[%c0_24, %c0_25] : memref<32x1xf32, #tpu.memory_space<vmem>>, vector<32x1xf32>
    tpu.vector_store %arg12[%c0_24, %c0_25], %26 {strides = array<i32>} : memref<32x1xf32, #tpu.memory_space<vmem>>, vector<32x1xf32>,
    %c0_i32_26 = arith.constant 0 : i32
    %40 = arith.cmpi eq, %arg1, %c0_i32_26 : i32
    %41 = arith.extui %40 : i1 to i32
    %c0_i32_27 = arith.constant 0 : i32
    %42 = arith.cmpi ne, %41, %c0_i32_27 : i32
    scf.if %42 {
      %c0_28 = arith.constant 0 : index
      %c0_29 = arith.constant 0 : index
      %43 = vector.load %arg12[%c0_28, %c0_29] : memref<32x1xf32, #tpu.memory_space<vmem>>, vector<32x1xf32>
      %c0_30 = arith.constant 0 : index
      %c0_31 = arith.constant 0 : index
      %44 = vector.load %arg13[%c0_30, %c0_31] : memref<32x1xf32, #tpu.memory_space<vmem>>, vector<32x1xf32>
      %45 = math.log %44 : vector<32x1xf32>
      %46 = arith.addf %43, %45 : vector<32x1xf32>
      %c0_32 = arith.constant 0 : index
      %c0_33 = arith.constant 0 : index
      %47 = vector.load %arg14[%c0_32, %c0_33] : memref<32x1xf32, #tpu.memory_space<vmem>>, vector<32x1xf32>
      %48 = arith.subf %46, %47 : vector<32x1xf32>
      %c-1_i32 = arith.constant -1 : i32
      %49 = vector.broadcast %c-1_i32 : i32 to vector<32x1xi32>
      %50 = arith.cmpi sgt, %9, %49 : vector<32x1xi32>
      %51 = arith.extui %50 : vector<32x1xi1> to vector<32x1xi32>
      %52 = arith.sitofp %51 : vector<32x1xi32> to vector<32x1xf32>
      %c0_34 = arith.constant 0 : index
      %c0_35 = arith.constant 0 : index
      %53 = vector.load %arg14[%c0_34, %c0_35] : memref<32x1xf32, #tpu.memory_space<vmem>>, vector<32x1xf32>
      %c0_36 = arith.constant 0 : index
      %c0_37 = arith.constant 0 : index
      %54 = vector.load %arg12[%c0_36, %c0_37] : memref<32x1xf32, #tpu.memory_space<vmem>>, vector<32x1xf32>
      %55 = arith.cmpf oge, %53, %54 : vector<32x1xf32>
      %56 = arith.andi %50, %55 : vector<32x1xi1>
      %cst_38 = arith.constant 1.000000e+00 : f32
      %cst_39 = arith.constant 0.000000e+00 : f32
      %57 = vector.broadcast %cst_38 : f32 to vector<32x1xf32>
      %58 = vector.broadcast %cst_39 : f32 to vector<32x1xf32>
      %59 = arith.select %56, %57, %58 : vector<32x1xi1>, vector<32x1xf32>
      %60 = arith.mulf %48, %52 : vector<32x1xf32>
      %61 = vector.shape_cast %60 : vector<32x1xf32> to vector<1x32x1xf32>
      %cst_40 = arith.constant dense<0.000000e+00> : vector<1xf32>
      %62 = vector.multi_reduction <add>, %61, %cst_40 [1, 2] : vector<1x32x1xf32> to vector<1xf32>
      %63 = vector.shape_cast %62 : vector<1xf32> to vector<1x1x1xf32>
      %64 = vector.extract %63[0, 0, 0] : f32 from vector<1x1x1xf32>
      %65 = vector.broadcast %64 : f32 to vector<1x1xf32>
      %66 = vector.shape_cast %59 : vector<32x1xf32> to vector<1x32x1xf32>
      %cst_41 = arith.constant dense<0.000000e+00> : vector<1xf32>
      %67 = vector.multi_reduction <add>, %66, %cst_41 [1, 2] : vector<1x32x1xf32> to vector<1xf32>
      %68 = vector.shape_cast %67 : vector<1xf32> to vector<1x1x1xf32>
      %69 = vector.extract %68[0, 0, 0] : f32 from vector<1x1x1xf32>
      %70 = vector.broadcast %69 : f32 to vector<1x1xf32>
      %71 = vector.shape_cast %52 : vector<32x1xf32> to vector<1x32x1xf32>
      %cst_42 = arith.constant dense<0.000000e+00> : vector<1xf32>
      %72 = vector.multi_reduction <add>, %71, %cst_42 [1, 2] : vector<1x32x1xf32> to vector<1xf32>
      %73 = vector.shape_cast %72 : vector<1xf32> to vector<1x1x1xf32>
      %74 = vector.extract %73[0, 0, 0] : f32 from vector<1x1x1xf32>
      %75 = vector.broadcast %74 : f32 to vector<1x1xf32>
      %76 = tpu.iota {dimensions = array<i32: 0>} : vector<8x128xi32>
      %77 = tpu.iota {dimensions = array<i32: 1>} : vector<8x128xi32>
      %c0_i32_43 = arith.constant 0 : i32
      %78 = vector.broadcast %c0_i32_43 : i32 to vector<8x128xi32>
      %79 = arith.cmpi eq, %76, %78 : vector<8x128xi32>
      %c0_i32_44 = arith.constant 0 : i32
      %80 = vector.broadcast %c0_i32_44 : i32 to vector<8x128xi32>
      %81 = arith.cmpi eq, %77, %80 : vector<8x128xi32>
      %82 = arith.andi %79, %81 : vector<8x128xi1>
      %cst_45 = arith.constant 0.000000e+00 : f32
      %83 = vector.shape_cast %65 : vector<1x1xf32> to vector<1x1xf32>
      %84 = vector.broadcast %83 : vector<1x1xf32> to vector<8x128xf32>
      %85 = vector.broadcast %cst_45 : f32 to vector<8x128xf32>
      %86 = arith.select %82, %84, %85 : vector<8x128xi1>, vector<8x128xf32>
      %c1_i32 = arith.constant 1 : i32
      %87 = vector.broadcast %c1_i32 : i32 to vector<8x128xi32>
      %88 = arith.cmpi eq, %77, %87 : vector<8x128xi32>
      %89 = arith.andi %79, %88 : vector<8x128xi1>
      %cst_46 = arith.constant 0.000000e+00 : f32
      %90 = vector.shape_cast %70 : vector<1x1xf32> to vector<1x1xf32>
      %91 = vector.broadcast %90 : vector<1x1xf32> to vector<8x128xf32>
      %92 = vector.broadcast %cst_46 : f32 to vector<8x128xf32>
      %93 = arith.select %89, %91, %92 : vector<8x128xi1>, vector<8x128xf32>
      %94 = arith.addf %86, %93 : vector<8x128xf32>
      %c2_i32 = arith.constant 2 : i32
      %95 = vector.broadcast %c2_i32 : i32 to vector<8x128xi32>
      %96 = arith.cmpi eq, %77, %95 : vector<8x128xi32>
      %97 = arith.andi %79, %96 : vector<8x128xi1>
      %cst_47 = arith.constant 0.000000e+00 : f32
      %98 = vector.shape_cast %75 : vector<1x1xf32> to vector<1x1xf32>
      %99 = vector.broadcast %98 : vector<1x1xf32> to vector<8x128xf32>
      %100 = vector.broadcast %cst_47 : f32 to vector<8x128xf32>
      %101 = arith.select %97, %99, %100 : vector<8x128xi1>, vector<8x128xf32>
      %102 = arith.addf %94, %101 : vector<8x128xf32>
      %c0_48 = arith.constant 0 : index
      %c0_49 = arith.constant 0 : index
      %c0_50 = arith.constant 0 : index
      %103 = vector.load %arg10[%c0_48, %c0_49, %c0_50] : memref<1x8x128xf32, #tpu.memory_space<vmem>>, vector<1x8x128xf32>
      %104 = vector.shape_cast %103 : vector<1x8x128xf32> to vector<8x128xf32>
      %105 = vector.shape_cast %102 : vector<8x128xf32> to vector<1x8x128xf32>
      tpu.vector_store %arg10[%c0_48, %c0_49, %c0_50], %105 {strides = array<i32>} : memref<1x8x128xf32, #tpu.memory_space<vmem>>, vector<1x8x128xf32>,
    } else {
    }
    return
  }
  func.func @transform_0(%arg0: i32, %arg1: i32) -> (i32, i32) {
    %c0_i32 = arith.constant 0 : i32
    %c0_i32_0 = arith.constant 0 : i32
    return %arg0, %c0_i32 : i32, i32
  }
  func.func @transform_1(%arg0: i32, %arg1: i32) -> (i32, i32) {
    %c0_i32 = arith.constant 0 : i32
    %c0_i32_0 = arith.constant 0 : i32
    return %arg0, %c0_i32 : i32, i32
  }
  func.func @transform_2(%arg0: i32, %arg1: i32) -> (i32, i32) {
    %c0_i32 = arith.constant 0 : i32
    %c0_i32_0 = arith.constant 0 : i32
    %c0_i32_1 = arith.constant 0 : i32
    return %c0_i32, %c0_i32_0 : i32, i32
  }
  func.func @transform_3(%arg0: i32, %arg1: i32) -> (i32, i32) {
    %c0_i32 = arith.constant 0 : i32
    %c0_i32_0 = arith.constant 0 : i32
    %c0_i32_1 = arith.constant 0 : i32
    return %c0_i32, %c0_i32_0 : i32, i32
  }
  func.func @transform_4(%arg0: i32, %arg1: i32) -> (i32, i32) {
    %c0_i32 = arith.constant 0 : i32
    %c0_i32_0 = arith.constant 0 : i32
    %c0_i32_1 = arith.constant 0 : i32
    return %c0_i32, %c0_i32_0 : i32, i32
  }
  func.func @transform_5(%arg0: i32, %arg1: i32) -> (i32, i32) {
    %c0_i32 = arith.constant 0 : i32
    %c0_i32_0 = arith.constant 0 : i32
    %c0_i32_1 = arith.constant 0 : i32
    return %c0_i32, %c0_i32_0 : i32, i32
  }
  func.func @transform_6(%arg0: i32, %arg1: i32) -> (i32, i32) {
    %c0_i32 = arith.constant 0 : i32
    %c0_i32_0 = arith.constant 0 : i32
    return %c0_i32, %arg1 : i32, i32
  }
  func.func @transform_7(%arg0: i32, %arg1: i32) -> (i32, i32) {
    %c0_i32 = arith.constant 0 : i32
    %c0_i32_0 = arith.constant 0 : i32
    return %c0_i32, %arg1 : i32, i32
  }
  func.func @transform_8(%arg0: i32, %arg1: i32) -> (i32, i32, i32) {
    %c0_i32 = arith.constant 0 : i32
    %c0_i32_0 = arith.constant 0 : i32
    %c0_i32_1 = arith.constant 0 : i32
    return %arg0, %c0_i32, %c0_i32_0 : i32, i32, i32
  }
}

module attributes {stable_mosaic.version = 11 : i64} {
  func.func @encoder_layer_kernel(%arg0: i32, %arg1: i32, %arg2: memref<1x16x32xf32, #tpu.memory_space<vmem>>, %arg3: memref<1x16x32xf32, #tpu.memory_space<vmem>>, %arg4: memref<1x1x16xf32, #tpu.memory_space<vmem>>, %arg5: memref<32x96xbf16, #tpu.memory_space<vmem>>, %arg6: memref<1x96xf32, #tpu.memory_space<vmem>>, %arg7: memref<32x32xbf16, #tpu.memory_space<vmem>>, %arg8: memref<1x32xf32, #tpu.memory_space<vmem>>, %arg9: memref<1x32xf32, #tpu.memory_space<vmem>>, %arg10: memref<1x32xf32, #tpu.memory_space<vmem>>, %arg11: memref<32x64xbf16, #tpu.memory_space<vmem>>, %arg12: memref<1x64xf32, #tpu.memory_space<vmem>>, %arg13: memref<64x32xbf16, #tpu.memory_space<vmem>>, %arg14: memref<1x32xf32, #tpu.memory_space<vmem>>, %arg15: memref<1x32xf32, #tpu.memory_space<vmem>>, %arg16: memref<1x32xf32, #tpu.memory_space<vmem>>, %arg17: memref<1x16x32xf32, #tpu.memory_space<vmem>>, %arg18: memref<16x96xbf16, #tpu.memory_space<vmem>>, %arg19: memref<16x32xbf16, #tpu.memory_space<vmem>>) attributes {dimension_semantics = [#tpu.dimension_semantics<parallel>, #tpu.dimension_semantics<arbitrary>], iteration_bounds = array<i64: 2, 1>, scalar_prefetch = 0 : i64, scratch_operands = 2 : i64, tpu.core_type = #tpu.core_type<tc>, window_params = [{transform_indices = @transform_0, window_bounds = array<i64: 1, 16, 32>}, {transform_indices = @transform_1, window_bounds = array<i64: 1, 16, 32>}, {transform_indices = @transform_2, window_bounds = array<i64: 1, 1, 16>}, {pipeline_mode = #tpu.pipeline_mode<synchronous>, transform_indices = @transform_3, window_bounds = array<i64: 32, 96>}, {pipeline_mode = #tpu.pipeline_mode<synchronous>, transform_indices = @transform_4, window_bounds = array<i64: 1, 96>}, {pipeline_mode = #tpu.pipeline_mode<synchronous>, transform_indices = @transform_5, window_bounds = array<i64: 32, 32>}, {pipeline_mode = #tpu.pipeline_mode<synchronous>, transform_indices = @transform_6, window_bounds = array<i64: 1, 32>}, {pipeline_mode = #tpu.pipeline_mode<synchronous>, transform_indices = @transform_7, window_bounds = array<i64: 1, 32>}, {pipeline_mode = #tpu.pipeline_mode<synchronous>, transform_indices = @transform_8, window_bounds = array<i64: 1, 32>}, {pipeline_mode = #tpu.pipeline_mode<synchronous>, transform_indices = @transform_9, window_bounds = array<i64: 32, 64>}, {pipeline_mode = #tpu.pipeline_mode<synchronous>, transform_indices = @transform_10, window_bounds = array<i64: 1, 64>}, {pipeline_mode = #tpu.pipeline_mode<synchronous>, transform_indices = @transform_11, window_bounds = array<i64: 64, 32>}, {pipeline_mode = #tpu.pipeline_mode<synchronous>, transform_indices = @transform_12, window_bounds = array<i64: 1, 32>}, {pipeline_mode = #tpu.pipeline_mode<synchronous>, transform_indices = @transform_13, window_bounds = array<i64: 1, 32>}, {pipeline_mode = #tpu.pipeline_mode<synchronous>, transform_indices = @transform_14, window_bounds = array<i64: 1, 32>}, {transform_indices = @transform_15, window_bounds = array<i64: 1, 16, 32>}]} {
    %c0_i32 = arith.constant 0 : i32
    %0 = arith.cmpi eq, %arg1, %c0_i32 : i32
    %1 = arith.extui %0 : i1 to i32
    %c0_i32_0 = arith.constant 0 : i32
    %2 = arith.cmpi ne, %1, %c0_i32_0 : i32
    scf.if %2 {
      %c0_72 = arith.constant 0 : index
      %c0_73 = arith.constant 0 : index
      %c0_74 = arith.constant 0 : index
      %183 = vector.load %arg2[%c0_72, %c0_73, %c0_74] : memref<1x16x32xf32, #tpu.memory_space<vmem>>, vector<1x16x32xf32>
      %184 = vector.shape_cast %183 : vector<1x16x32xf32> to vector<16x32xf32>
      %185 = arith.truncf %184 : vector<16x32xf32> to vector<16x32xbf16>
      %c0_75 = arith.constant 0 : index
      %c0_76 = arith.constant 0 : index
      %186 = vector.load %arg5[%c0_75, %c0_76] : memref<32x96xbf16, #tpu.memory_space<vmem>>, vector<32x96xbf16>
      %cst_77 = arith.constant dense<0.000000e+00> : vector<16x96xf32>
      %187 = tpu.matmul %185, %186, %cst_77 {dimension_numbers = #tpu.dot_dimension_numbers<[1], [0], [0], [1], [0, 0, 1, 1], [], []>} : vector<16x32xbf16>, vector<32x96xbf16>, vector<16x96xf32> -> vector<16x96xf32>
      %c0_78 = arith.constant 0 : index
      %c0_79 = arith.constant 0 : index
      %188 = vector.load %arg6[%c0_78, %c0_79] : memref<1x96xf32, #tpu.memory_space<vmem>>, vector<1x96xf32>
      %189 = vector.broadcast %188 : vector<1x96xf32> to vector<16x96xf32>
      %190 = arith.addf %187, %189 : vector<16x96xf32>
      %191 = arith.truncf %190 : vector<16x96xf32> to vector<16x96xbf16>
      %c0_80 = arith.constant 0 : index
      %c0_81 = arith.constant 0 : index
      %192 = vector.load %arg18[%c0_80, %c0_81] : memref<16x96xbf16, #tpu.memory_space<vmem>>, vector<16x96xbf16>
      tpu.vector_store %arg18[%c0_80, %c0_81], %191 {strides = array<i32>} : memref<16x96xbf16, #tpu.memory_space<vmem>>, vector<16x96xbf16>,
    } else {
    }
    %c0 = arith.constant 0 : index
    %c0_1 = arith.constant 0 : index
    %c0_2 = arith.constant 0 : index
    %3 = vector.load %arg3[%c0, %c0_1, %c0_2] : memref<1x16x32xf32, #tpu.memory_space<vmem>>, vector<1x16x32xf32>
    %4 = vector.shape_cast %3 : vector<1x16x32xf32> to vector<16x32xf32>
    %c0_3 = arith.constant 0 : index
    %c0_4 = arith.constant 0 : index
    %c0_5 = arith.constant 0 : index
    %5 = vector.load %arg4[%c0_3, %c0_4, %c0_5] : memref<1x1x16xf32, #tpu.memory_space<vmem>>, vector<1x1x16xf32>
    %6 = vector.shape_cast %5 : vector<1x1x16xf32> to vector<1x16xf32>
    %c16_i32 = arith.constant 16 : i32
    %7 = arith.muli %arg1, %c16_i32 : i32
    %8 = tpu.assume_multiple %7, 16 : i32
    %9 = arith.index_cast %8 : i32 to index
    %c0_6 = arith.constant 0 : index
    %10 = vector.load %arg18[%9, %c0_6] : memref<16x96xbf16, #tpu.memory_space<vmem>>, vector<16x32xbf16>
    %c0_7 = arith.constant 0 : index
    %c32 = arith.constant 32 : index
    %11 = vector.load %arg18[%c0_7, %c32] : memref<16x96xbf16, #tpu.memory_space<vmem>>, vector<16x32xbf16>
    %c0_8 = arith.constant 0 : index
    %c64 = arith.constant 64 : index
    %12 = vector.load %arg18[%c0_8, %c64] : memref<16x96xbf16, #tpu.memory_space<vmem>>, vector<16x32xbf16>
    %13 = vector.extract_strided_slice %10 {offsets = [0, 0], sizes = [16, 8], strides = [1, 1]} : vector<16x32xbf16> to vector<16x8xbf16>
    %14 = vector.extract_strided_slice %11 {offsets = [0, 0], sizes = [16, 8], strides = [1, 1]} : vector<16x32xbf16> to vector<16x8xbf16>
    %15 = vector.extract_strided_slice %12 {offsets = [0, 0], sizes = [16, 8], strides = [1, 1]} : vector<16x32xbf16> to vector<16x8xbf16>
    %cst = arith.constant dense<0.000000e+00> : vector<16x16xf32>
    %16 = tpu.matmul %13, %14, %cst {dimension_numbers = #tpu.dot_dimension_numbers<[1], [1], [0], [0], [0, 0, 1, 0], [], []>} : vector<16x8xbf16>, vector<16x8xbf16>, vector<16x16xf32> -> vector<16x16xf32>
    %cst_9 = arith.constant 0.353553385 : f32
    %17 = vector.broadcast %cst_9 : f32 to vector<16x16xf32>
    %18 = arith.mulf %16, %17 : vector<16x16xf32>
    %19 = vector.broadcast %6 : vector<1x16xf32> to vector<16x16xf32>
    %20 = arith.addf %18, %19 : vector<16x16xf32>
    %cst_10 = arith.constant dense<0xFF800000> : vector<16xf32>
    %21 = vector.multi_reduction <maximumf>, %20, %cst_10 [1] : vector<16x16xf32> to vector<16xf32>
    %22 = vector.shape_cast %21 : vector<16xf32> to vector<16x1xf32>
    %23 = vector.broadcast %22 : vector<16x1xf32> to vector<16x16xf32>
    %24 = arith.subf %20, %23 : vector<16x16xf32>
    %25 = math.exp %24 : vector<16x16xf32>
    %cst_11 = arith.constant dense<0.000000e+00> : vector<16xf32>
    %26 = vector.multi_reduction <add>, %25, %cst_11 [1] : vector<16x16xf32> to vector<16xf32>
    %27 = vector.shape_cast %26 : vector<16xf32> to vector<16x1xf32>
    %28 = tpu.reciprocal %27 {approx = true} : vector<16x1xf32> -> vector<16x1xf32>
    %29 = vector.broadcast %28 : vector<16x1xf32> to vector<16x16xf32>
    %30 = arith.mulf %25, %29 : vector<16x16xf32>
    %31 = arith.truncf %30 : vector<16x16xf32> to vector<16x16xbf16>
    %cst_12 = arith.constant dense<0.000000e+00> : vector<16x8xf32>
    %32 = tpu.matmul %31, %15, %cst_12 {dimension_numbers = #tpu.dot_dimension_numbers<[1], [0], [0], [1], [0, 0, 1, 1], [], []>} : vector<16x16xbf16>, vector<16x8xbf16>, vector<16x8xf32> -> vector<16x8xf32>
    %33 = arith.truncf %32 : vector<16x8xf32> to vector<16x8xbf16>
    %34 = vector.extract_strided_slice %10 {offsets = [0, 8], sizes = [16, 8], strides = [1, 1]} : vector<16x32xbf16> to vector<16x8xbf16>
    %35 = vector.extract_strided_slice %11 {offsets = [0, 8], sizes = [16, 8], strides = [1, 1]} : vector<16x32xbf16> to vector<16x8xbf16>
    %36 = vector.extract_strided_slice %12 {offsets = [0, 8], sizes = [16, 8], strides = [1, 1]} : vector<16x32xbf16> to vector<16x8xbf16>
    %cst_13 = arith.constant dense<0.000000e+00> : vector<16x16xf32>
    %37 = tpu.matmul %34, %35, %cst_13 {dimension_numbers = #tpu.dot_dimension_numbers<[1], [1], [0], [0], [0, 0, 1, 0], [], []>} : vector<16x8xbf16>, vector<16x8xbf16>, vector<16x16xf32> -> vector<16x16xf32>
    %cst_14 = arith.constant 0.353553385 : f32
    %38 = vector.broadcast %cst_14 : f32 to vector<16x16xf32>
    %39 = arith.mulf %37, %38 : vector<16x16xf32>
    %40 = vector.broadcast %6 : vector<1x16xf32> to vector<16x16xf32>
    %41 = arith.addf %39, %40 : vector<16x16xf32>
    %cst_15 = arith.constant dense<0xFF800000> : vector<16xf32>
    %42 = vector.multi_reduction <maximumf>, %41, %cst_15 [1] : vector<16x16xf32> to vector<16xf32>
    %43 = vector.shape_cast %42 : vector<16xf32> to vector<16x1xf32>
    %44 = vector.broadcast %43 : vector<16x1xf32> to vector<16x16xf32>
    %45 = arith.subf %41, %44 : vector<16x16xf32>
    %46 = math.exp %45 : vector<16x16xf32>
    %cst_16 = arith.constant dense<0.000000e+00> : vector<16xf32>
    %47 = vector.multi_reduction <add>, %46, %cst_16 [1] : vector<16x16xf32> to vector<16xf32>
    %48 = vector.shape_cast %47 : vector<16xf32> to vector<16x1xf32>
    %49 = tpu.reciprocal %48 {approx = true} : vector<16x1xf32> -> vector<16x1xf32>
    %50 = vector.broadcast %49 : vector<16x1xf32> to vector<16x16xf32>
    %51 = arith.mulf %46, %50 : vector<16x16xf32>
    %52 = arith.truncf %51 : vector<16x16xf32> to vector<16x16xbf16>
    %cst_17 = arith.constant dense<0.000000e+00> : vector<16x8xf32>
    %53 = tpu.matmul %52, %36, %cst_17 {dimension_numbers = #tpu.dot_dimension_numbers<[1], [0], [0], [1], [0, 0, 1, 1], [], []>} : vector<16x16xbf16>, vector<16x8xbf16>, vector<16x8xf32> -> vector<16x8xf32>
    %54 = arith.truncf %53 : vector<16x8xf32> to vector<16x8xbf16>
    %55 = vector.extract_strided_slice %10 {offsets = [0, 16], sizes = [16, 8], strides = [1, 1]} : vector<16x32xbf16> to vector<16x8xbf16>
    %56 = vector.extract_strided_slice %11 {offsets = [0, 16], sizes = [16, 8], strides = [1, 1]} : vector<16x32xbf16> to vector<16x8xbf16>
    %57 = vector.extract_strided_slice %12 {offsets = [0, 16], sizes = [16, 8], strides = [1, 1]} : vector<16x32xbf16> to vector<16x8xbf16>
    %cst_18 = arith.constant dense<0.000000e+00> : vector<16x16xf32>
    %58 = tpu.matmul %55, %56, %cst_18 {dimension_numbers = #tpu.dot_dimension_numbers<[1], [1], [0], [0], [0, 0, 1, 0], [], []>} : vector<16x8xbf16>, vector<16x8xbf16>, vector<16x16xf32> -> vector<16x16xf32>
    %cst_19 = arith.constant 0.353553385 : f32
    %59 = vector.broadcast %cst_19 : f32 to vector<16x16xf32>
    %60 = arith.mulf %58, %59 : vector<16x16xf32>
    %61 = vector.broadcast %6 : vector<1x16xf32> to vector<16x16xf32>
    %62 = arith.addf %60, %61 : vector<16x16xf32>
    %cst_20 = arith.constant dense<0xFF800000> : vector<16xf32>
    %63 = vector.multi_reduction <maximumf>, %62, %cst_20 [1] : vector<16x16xf32> to vector<16xf32>
    %64 = vector.shape_cast %63 : vector<16xf32> to vector<16x1xf32>
    %65 = vector.broadcast %64 : vector<16x1xf32> to vector<16x16xf32>
    %66 = arith.subf %62, %65 : vector<16x16xf32>
    %67 = math.exp %66 : vector<16x16xf32>
    %cst_21 = arith.constant dense<0.000000e+00> : vector<16xf32>
    %68 = vector.multi_reduction <add>, %67, %cst_21 [1] : vector<16x16xf32> to vector<16xf32>
    %69 = vector.shape_cast %68 : vector<16xf32> to vector<16x1xf32>
    %70 = tpu.reciprocal %69 {approx = true} : vector<16x1xf32> -> vector<16x1xf32>
    %71 = vector.broadcast %70 : vector<16x1xf32> to vector<16x16xf32>
    %72 = arith.mulf %67, %71 : vector<16x16xf32>
    %73 = arith.truncf %72 : vector<16x16xf32> to vector<16x16xbf16>
    %cst_22 = arith.constant dense<0.000000e+00> : vector<16x8xf32>
    %74 = tpu.matmul %73, %57, %cst_22 {dimension_numbers = #tpu.dot_dimension_numbers<[1], [0], [0], [1], [0, 0, 1, 1], [], []>} : vector<16x16xbf16>, vector<16x8xbf16>, vector<16x8xf32> -> vector<16x8xf32>
    %75 = arith.truncf %74 : vector<16x8xf32> to vector<16x8xbf16>
    %76 = vector.extract_strided_slice %10 {offsets = [0, 24], sizes = [16, 8], strides = [1, 1]} : vector<16x32xbf16> to vector<16x8xbf16>
    %77 = vector.extract_strided_slice %11 {offsets = [0, 24], sizes = [16, 8], strides = [1, 1]} : vector<16x32xbf16> to vector<16x8xbf16>
    %78 = vector.extract_strided_slice %12 {offsets = [0, 24], sizes = [16, 8], strides = [1, 1]} : vector<16x32xbf16> to vector<16x8xbf16>
    %cst_23 = arith.constant dense<0.000000e+00> : vector<16x16xf32>
    %79 = tpu.matmul %76, %77, %cst_23 {dimension_numbers = #tpu.dot_dimension_numbers<[1], [1], [0], [0], [0, 0, 1, 0], [], []>} : vector<16x8xbf16>, vector<16x8xbf16>, vector<16x16xf32> -> vector<16x16xf32>
    %cst_24 = arith.constant 0.353553385 : f32
    %80 = vector.broadcast %cst_24 : f32 to vector<16x16xf32>
    %81 = arith.mulf %79, %80 : vector<16x16xf32>
    %82 = vector.broadcast %6 : vector<1x16xf32> to vector<16x16xf32>
    %83 = arith.addf %81, %82 : vector<16x16xf32>
    %cst_25 = arith.constant dense<0xFF800000> : vector<16xf32>
    %84 = vector.multi_reduction <maximumf>, %83, %cst_25 [1] : vector<16x16xf32> to vector<16xf32>
    %85 = vector.shape_cast %84 : vector<16xf32> to vector<16x1xf32>
    %86 = vector.broadcast %85 : vector<16x1xf32> to vector<16x16xf32>
    %87 = arith.subf %83, %86 : vector<16x16xf32>
    %88 = math.exp %87 : vector<16x16xf32>
    %cst_26 = arith.constant dense<0.000000e+00> : vector<16xf32>
    %89 = vector.multi_reduction <add>, %88, %cst_26 [1] : vector<16x16xf32> to vector<16xf32>
    %90 = vector.shape_cast %89 : vector<16xf32> to vector<16x1xf32>
    %91 = tpu.reciprocal %90 {approx = true} : vector<16x1xf32> -> vector<16x1xf32>
    %92 = vector.broadcast %91 : vector<16x1xf32> to vector<16x16xf32>
    %93 = arith.mulf %88, %92 : vector<16x16xf32>
    %94 = arith.truncf %93 : vector<16x16xf32> to vector<16x16xbf16>
    %cst_27 = arith.constant dense<0.000000e+00> : vector<16x8xf32>
    %95 = tpu.matmul %94, %78, %cst_27 {dimension_numbers = #tpu.dot_dimension_numbers<[1], [0], [0], [1], [0, 0, 1, 1], [], []>} : vector<16x16xbf16>, vector<16x8xbf16>, vector<16x8xf32> -> vector<16x8xf32>
    %96 = arith.truncf %95 : vector<16x8xf32> to vector<16x8xbf16>
    %97 = tpu.concatenate %33, %54, %75, %96 in 1 : vector<16x8xbf16>, vector<16x8xbf16>, vector<16x8xbf16>, vector<16x8xbf16> -> vector<16x32xbf16>
    %c0_28 = arith.constant 0 : index
    %c0_29 = arith.constant 0 : index
    %98 = vector.load %arg19[%c0_28, %c0_29] : memref<16x32xbf16, #tpu.memory_space<vmem>>, vector<16x32xbf16>
    tpu.vector_store %arg19[%c0_28, %c0_29], %97 {strides = array<i32>} : memref<16x32xbf16, #tpu.memory_space<vmem>>, vector<16x32xbf16>,
    %c0_30 = arith.constant 0 : index
    %c0_31 = arith.constant 0 : index
    %99 = vector.load %arg19[%c0_30, %c0_31] : memref<16x32xbf16, #tpu.memory_space<vmem>>, vector<16x32xbf16>
    %c0_32 = arith.constant 0 : index
    %c0_33 = arith.constant 0 : index
    %100 = vector.load %arg7[%c0_32, %c0_33] : memref<32x32xbf16, #tpu.memory_space<vmem>>, vector<32x32xbf16>
    %cst_34 = arith.constant dense<0.000000e+00> : vector<16x32xf32>
    %101 = tpu.matmul %99, %100, %cst_34 {dimension_numbers = #tpu.dot_dimension_numbers<[1], [0], [0], [1], [0, 0, 1, 1], [], []>} : vector<16x32xbf16>, vector<32x32xbf16>, vector<16x32xf32> -> vector<16x32xf32>
    %c0_35 = arith.constant 0 : index
    %c0_36 = arith.constant 0 : index
    %102 = vector.load %arg8[%c0_35, %c0_36] : memref<1x32xf32, #tpu.memory_space<vmem>>, vector<1x32xf32>
    %103 = vector.broadcast %102 : vector<1x32xf32> to vector<16x32xf32>
    %104 = arith.addf %101, %103 : vector<16x32xf32>
    %105 = arith.addf %4, %104 : vector<16x32xf32>
    %c0_37 = arith.constant 0 : index
    %c0_38 = arith.constant 0 : index
    %106 = vector.load %arg9[%c0_37, %c0_38] : memref<1x32xf32, #tpu.memory_space<vmem>>, vector<1x32xf32>
    %c0_39 = arith.constant 0 : index
    %c0_40 = arith.constant 0 : index
    %107 = vector.load %arg10[%c0_39, %c0_40] : memref<1x32xf32, #tpu.memory_space<vmem>>, vector<1x32xf32>
    %cst_41 = arith.constant dense<0.000000e+00> : vector<16xf32>
    %108 = vector.multi_reduction <add>, %105, %cst_41 [1] : vector<16x32xf32> to vector<16xf32>
    %109 = vector.shape_cast %108 : vector<16xf32> to vector<16x1xf32>
    %cst_42 = arith.constant 3.200000e+01 : f32
    %110 = vector.broadcast %cst_42 : f32 to vector<16x1xf32>
    %111 = arith.divf %109, %110 : vector<16x1xf32>
    %112 = vector.broadcast %111 : vector<16x1xf32> to vector<16x32xf32>
    %113 = arith.subf %105, %112 : vector<16x32xf32>
    %114 = arith.mulf %113, %113 : vector<16x32xf32>
    %cst_43 = arith.constant dense<0.000000e+00> : vector<16xf32>
    %115 = vector.multi_reduction <add>, %114, %cst_43 [1] : vector<16x32xf32> to vector<16xf32>
    %116 = vector.shape_cast %115 : vector<16xf32> to vector<16x1xf32>
    %cst_44 = arith.constant 3.200000e+01 : f32
    %117 = vector.broadcast %cst_44 : f32 to vector<16x1xf32>
    %118 = arith.divf %116, %117 : vector<16x1xf32>
    %119 = vector.broadcast %111 : vector<16x1xf32> to vector<16x32xf32>
    %120 = arith.subf %105, %119 : vector<16x32xf32>
    %cst_45 = arith.constant 9.99999997E-7 : f32
    %121 = vector.broadcast %cst_45 : f32 to vector<16x1xf32>
    %122 = arith.addf %118, %121 : vector<16x1xf32>
    %123 = math.rsqrt %122 : vector<16x1xf32>
    %124 = vector.broadcast %123 : vector<16x1xf32> to vector<16x32xf32>
    %125 = arith.mulf %120, %124 : vector<16x32xf32>
    %126 = vector.broadcast %106 : vector<1x32xf32> to vector<16x32xf32>
    %127 = arith.mulf %125, %126 : vector<16x32xf32>
    %128 = vector.broadcast %107 : vector<1x32xf32> to vector<16x32xf32>
    %129 = arith.addf %127, %128 : vector<16x32xf32>
    %130 = arith.truncf %129 : vector<16x32xf32> to vector<16x32xbf16>
    %c0_46 = arith.constant 0 : index
    %c0_47 = arith.constant 0 : index
    %131 = vector.load %arg11[%c0_46, %c0_47] : memref<32x64xbf16, #tpu.memory_space<vmem>>, vector<32x64xbf16>
    %cst_48 = arith.constant dense<0.000000e+00> : vector<16x64xf32>
    %132 = tpu.matmul %130, %131, %cst_48 {dimension_numbers = #tpu.dot_dimension_numbers<[1], [0], [0], [1], [0, 0, 1, 1], [], []>} : vector<16x32xbf16>, vector<32x64xbf16>, vector<16x64xf32> -> vector<16x64xf32>
    %c0_49 = arith.constant 0 : index
    %c0_50 = arith.constant 0 : index
    %133 = vector.load %arg12[%c0_49, %c0_50] : memref<1x64xf32, #tpu.memory_space<vmem>>, vector<1x64xf32>
    %134 = vector.broadcast %133 : vector<1x64xf32> to vector<16x64xf32>
    %135 = arith.addf %132, %134 : vector<16x64xf32>
    %cst_51 = arith.constant 5.000000e-01 : f32
    %136 = vector.broadcast %cst_51 : f32 to vector<16x64xf32>
    %137 = arith.mulf %136, %135 : vector<16x64xf32>
    %cst_52 = arith.constant 4.471500e-02 : f32
    %138 = vector.broadcast %cst_52 : f32 to vector<16x64xf32>
    %139 = arith.mulf %138, %135 : vector<16x64xf32>
    %140 = arith.mulf %139, %135 : vector<16x64xf32>
    %141 = arith.mulf %140, %135 : vector<16x64xf32>
    %142 = arith.addf %135, %141 : vector<16x64xf32>
    %cst_53 = arith.constant 0.797884583 : f32
    %143 = vector.broadcast %cst_53 : f32 to vector<16x64xf32>
    %144 = arith.mulf %143, %142 : vector<16x64xf32>
    %145 = math.tanh %144 : vector<16x64xf32>
    %cst_54 = arith.constant 1.000000e+00 : f32
    %146 = vector.broadcast %cst_54 : f32 to vector<16x64xf32>
    %147 = arith.addf %146, %145 : vector<16x64xf32>
    %148 = arith.mulf %137, %147 : vector<16x64xf32>
    %149 = arith.truncf %148 : vector<16x64xf32> to vector<16x64xbf16>
    %c0_55 = arith.constant 0 : index
    %c0_56 = arith.constant 0 : index
    %150 = vector.load %arg13[%c0_55, %c0_56] : memref<64x32xbf16, #tpu.memory_space<vmem>>, vector<64x32xbf16>
    %cst_57 = arith.constant dense<0.000000e+00> : vector<16x32xf32>
    %151 = tpu.matmul %149, %150, %cst_57 {dimension_numbers = #tpu.dot_dimension_numbers<[1], [0], [0], [1], [0, 0, 1, 1], [], []>} : vector<16x64xbf16>, vector<64x32xbf16>, vector<16x32xf32> -> vector<16x32xf32>
    %c0_58 = arith.constant 0 : index
    %c0_59 = arith.constant 0 : index
    %152 = vector.load %arg14[%c0_58, %c0_59] : memref<1x32xf32, #tpu.memory_space<vmem>>, vector<1x32xf32>
    %153 = vector.broadcast %152 : vector<1x32xf32> to vector<16x32xf32>
    %154 = arith.addf %151, %153 : vector<16x32xf32>
    %155 = arith.addf %129, %154 : vector<16x32xf32>
    %c0_60 = arith.constant 0 : index
    %c0_61 = arith.constant 0 : index
    %156 = vector.load %arg15[%c0_60, %c0_61] : memref<1x32xf32, #tpu.memory_space<vmem>>, vector<1x32xf32>
    %c0_62 = arith.constant 0 : index
    %c0_63 = arith.constant 0 : index
    %157 = vector.load %arg16[%c0_62, %c0_63] : memref<1x32xf32, #tpu.memory_space<vmem>>, vector<1x32xf32>
    %cst_64 = arith.constant dense<0.000000e+00> : vector<16xf32>
    %158 = vector.multi_reduction <add>, %155, %cst_64 [1] : vector<16x32xf32> to vector<16xf32>
    %159 = vector.shape_cast %158 : vector<16xf32> to vector<16x1xf32>
    %cst_65 = arith.constant 3.200000e+01 : f32
    %160 = vector.broadcast %cst_65 : f32 to vector<16x1xf32>
    %161 = arith.divf %159, %160 : vector<16x1xf32>
    %162 = vector.broadcast %161 : vector<16x1xf32> to vector<16x32xf32>
    %163 = arith.subf %155, %162 : vector<16x32xf32>
    %164 = arith.mulf %163, %163 : vector<16x32xf32>
    %cst_66 = arith.constant dense<0.000000e+00> : vector<16xf32>
    %165 = vector.multi_reduction <add>, %164, %cst_66 [1] : vector<16x32xf32> to vector<16xf32>
    %166 = vector.shape_cast %165 : vector<16xf32> to vector<16x1xf32>
    %cst_67 = arith.constant 3.200000e+01 : f32
    %167 = vector.broadcast %cst_67 : f32 to vector<16x1xf32>
    %168 = arith.divf %166, %167 : vector<16x1xf32>
    %169 = vector.broadcast %161 : vector<16x1xf32> to vector<16x32xf32>
    %170 = arith.subf %155, %169 : vector<16x32xf32>
    %cst_68 = arith.constant 9.99999997E-7 : f32
    %171 = vector.broadcast %cst_68 : f32 to vector<16x1xf32>
    %172 = arith.addf %168, %171 : vector<16x1xf32>
    %173 = math.rsqrt %172 : vector<16x1xf32>
    %174 = vector.broadcast %173 : vector<16x1xf32> to vector<16x32xf32>
    %175 = arith.mulf %170, %174 : vector<16x32xf32>
    %176 = vector.broadcast %156 : vector<1x32xf32> to vector<16x32xf32>
    %177 = arith.mulf %175, %176 : vector<16x32xf32>
    %178 = vector.broadcast %157 : vector<1x32xf32> to vector<16x32xf32>
    %179 = arith.addf %177, %178 : vector<16x32xf32>
    %c0_69 = arith.constant 0 : index
    %c0_70 = arith.constant 0 : index
    %c0_71 = arith.constant 0 : index
    %180 = vector.load %arg17[%c0_69, %c0_70, %c0_71] : memref<1x16x32xf32, #tpu.memory_space<vmem>>, vector<1x16x32xf32>
    %181 = vector.shape_cast %180 : vector<1x16x32xf32> to vector<16x32xf32>
    %182 = vector.shape_cast %179 : vector<16x32xf32> to vector<1x16x32xf32>
    tpu.vector_store %arg17[%c0_69, %c0_70, %c0_71], %182 {strides = array<i32>} : memref<1x16x32xf32, #tpu.memory_space<vmem>>, vector<1x16x32xf32>,
    return
  }
  func.func @transform_0(%arg0: i32, %arg1: i32) -> (i32, i32, i32) {
    %c0_i32 = arith.constant 0 : i32
    %c0_i32_0 = arith.constant 0 : i32
    %c0_i32_1 = arith.constant 0 : i32
    return %arg0, %c0_i32, %c0_i32_0 : i32, i32, i32
  }
  func.func @transform_1(%arg0: i32, %arg1: i32) -> (i32, i32, i32) {
    %c0_i32 = arith.constant 0 : i32
    %c0_i32_0 = arith.constant 0 : i32
    return %arg0, %arg1, %c0_i32 : i32, i32, i32
  }
  func.func @transform_2(%arg0: i32, %arg1: i32) -> (i32, i32, i32) {
    %c0_i32 = arith.constant 0 : i32
    %c0_i32_0 = arith.constant 0 : i32
    %c0_i32_1 = arith.constant 0 : i32
    return %arg0, %c0_i32, %c0_i32_0 : i32, i32, i32
  }
  func.func @transform_3(%arg0: i32, %arg1: i32) -> (i32, i32) {
    %c0_i32 = arith.constant 0 : i32
    %c0_i32_0 = arith.constant 0 : i32
    %c0_i32_1 = arith.constant 0 : i32
    return %c0_i32, %c0_i32_0 : i32, i32
  }
  func.func @transform_4(%arg0: i32, %arg1: i32) -> (i32, i32) {
    %c0_i32 = arith.constant 0 : i32
    %c0_i32_0 = arith.constant 0 : i32
    %c0_i32_1 = arith.constant 0 : i32
    return %c0_i32, %c0_i32_0 : i32, i32
  }
  func.func @transform_5(%arg0: i32, %arg1: i32) -> (i32, i32) {
    %c0_i32 = arith.constant 0 : i32
    %c0_i32_0 = arith.constant 0 : i32
    %c0_i32_1 = arith.constant 0 : i32
    return %c0_i32, %c0_i32_0 : i32, i32
  }
  func.func @transform_6(%arg0: i32, %arg1: i32) -> (i32, i32) {
    %c0_i32 = arith.constant 0 : i32
    %c0_i32_0 = arith.constant 0 : i32
    %c0_i32_1 = arith.constant 0 : i32
    return %c0_i32, %c0_i32_0 : i32, i32
  }
  func.func @transform_7(%arg0: i32, %arg1: i32) -> (i32, i32) {
    %c0_i32 = arith.constant 0 : i32
    %c0_i32_0 = arith.constant 0 : i32
    %c0_i32_1 = arith.constant 0 : i32
    return %c0_i32, %c0_i32_0 : i32, i32
  }
  func.func @transform_8(%arg0: i32, %arg1: i32) -> (i32, i32) {
    %c0_i32 = arith.constant 0 : i32
    %c0_i32_0 = arith.constant 0 : i32
    %c0_i32_1 = arith.constant 0 : i32
    return %c0_i32, %c0_i32_0 : i32, i32
  }
  func.func @transform_9(%arg0: i32, %arg1: i32) -> (i32, i32) {
    %c0_i32 = arith.constant 0 : i32
    %c0_i32_0 = arith.constant 0 : i32
    %c0_i32_1 = arith.constant 0 : i32
    return %c0_i32, %c0_i32_0 : i32, i32
  }
  func.func @transform_10(%arg0: i32, %arg1: i32) -> (i32, i32) {
    %c0_i32 = arith.constant 0 : i32
    %c0_i32_0 = arith.constant 0 : i32
    %c0_i32_1 = arith.constant 0 : i32
    return %c0_i32, %c0_i32_0 : i32, i32
  }
  func.func @transform_11(%arg0: i32, %arg1: i32) -> (i32, i32) {
    %c0_i32 = arith.constant 0 : i32
    %c0_i32_0 = arith.constant 0 : i32
    %c0_i32_1 = arith.constant 0 : i32
    return %c0_i32, %c0_i32_0 : i32, i32
  }
  func.func @transform_12(%arg0: i32, %arg1: i32) -> (i32, i32) {
    %c0_i32 = arith.constant 0 : i32
    %c0_i32_0 = arith.constant 0 : i32
    %c0_i32_1 = arith.constant 0 : i32
    return %c0_i32, %c0_i32_0 : i32, i32
  }
  func.func @transform_13(%arg0: i32, %arg1: i32) -> (i32, i32) {
    %c0_i32 = arith.constant 0 : i32
    %c0_i32_0 = arith.constant 0 : i32
    %c0_i32_1 = arith.constant 0 : i32
    return %c0_i32, %c0_i32_0 : i32, i32
  }
  func.func @transform_14(%arg0: i32, %arg1: i32) -> (i32, i32) {
    %c0_i32 = arith.constant 0 : i32
    %c0_i32_0 = arith.constant 0 : i32
    %c0_i32_1 = arith.constant 0 : i32
    return %c0_i32, %c0_i32_0 : i32, i32
  }
  func.func @transform_15(%arg0: i32, %arg1: i32) -> (i32, i32, i32) {
    %c0_i32 = arith.constant 0 : i32
    %c0_i32_0 = arith.constant 0 : i32
    return %arg0, %arg1, %c0_i32 : i32, i32, i32
  }
}

module attributes {stable_mosaic.version = 11 : i64} {
  func.func @cls_head_kernel(%arg0: i32, %arg1: i32, %arg2: memref<32x32xf32, #tpu.memory_space<vmem>>, %arg3: memref<32x1xi32, #tpu.memory_space<vmem>>, %arg4: memref<32x32xbf16, #tpu.memory_space<vmem>>, %arg5: memref<1x32xf32, #tpu.memory_space<vmem>>, %arg6: memref<1x32xf32, #tpu.memory_space<vmem>>, %arg7: memref<1x32xf32, #tpu.memory_space<vmem>>, %arg8: memref<32x128xbf16, #tpu.memory_space<vmem>>, %arg9: memref<1x128xf32, #tpu.memory_space<vmem>>, %arg10: memref<1x8x128xf32, #tpu.memory_space<vmem>>, %arg11: memref<32x32xbf16, #tpu.memory_space<vmem>>, %arg12: memref<32x1xf32, #tpu.memory_space<vmem>>, %arg13: memref<32x1xf32, #tpu.memory_space<vmem>>, %arg14: memref<32x1xf32, #tpu.memory_space<vmem>>) attributes {dimension_semantics = [#tpu.dimension_semantics<parallel>, #tpu.dimension_semantics<arbitrary>], iteration_bounds = array<i64: 1, 1>, scalar_prefetch = 0 : i64, scratch_operands = 4 : i64, tpu.core_type = #tpu.core_type<tc>, window_params = [{transform_indices = @transform_0, window_bounds = array<i64: 32, 32>}, {transform_indices = @transform_1, window_bounds = array<i64: 32, 1>}, {pipeline_mode = #tpu.pipeline_mode<synchronous>, transform_indices = @transform_2, window_bounds = array<i64: 32, 32>}, {pipeline_mode = #tpu.pipeline_mode<synchronous>, transform_indices = @transform_3, window_bounds = array<i64: 1, 32>}, {pipeline_mode = #tpu.pipeline_mode<synchronous>, transform_indices = @transform_4, window_bounds = array<i64: 1, 32>}, {pipeline_mode = #tpu.pipeline_mode<synchronous>, transform_indices = @transform_5, window_bounds = array<i64: 1, 32>}, {transform_indices = @transform_6, window_bounds = array<i64: 32, 128>}, {transform_indices = @transform_7, window_bounds = array<i64: 1, 128>}, {transform_indices = @transform_8, window_bounds = array<i64: 1, 8, 128>}]} {
    %c0_i32 = arith.constant 0 : i32
    %0 = arith.cmpi eq, %arg1, %c0_i32 : i32
    %1 = arith.extui %0 : i1 to i32
    %c0_i32_0 = arith.constant 0 : i32
    %2 = arith.cmpi ne, %1, %c0_i32_0 : i32
    scf.if %2 {
      %c0_28 = arith.constant 0 : index
      %c0_29 = arith.constant 0 : index
      %43 = vector.load %arg2[%c0_28, %c0_29] : memref<32x32xf32, #tpu.memory_space<vmem>>, vector<32x32xf32>
      %44 = arith.truncf %43 : vector<32x32xf32> to vector<32x32xbf16>
      %c0_30 = arith.constant 0 : index
      %c0_31 = arith.constant 0 : index
      %45 = vector.load %arg4[%c0_30, %c0_31] : memref<32x32xbf16, #tpu.memory_space<vmem>>, vector<32x32xbf16>
      %cst_32 = arith.constant dense<0.000000e+00> : vector<32x32xf32>
      %46 = tpu.matmul %44, %45, %cst_32 {dimension_numbers = #tpu.dot_dimension_numbers<[1], [0], [0], [1], [0, 0, 1, 1], [], []>} : vector<32x32xbf16>, vector<32x32xbf16>, vector<32x32xf32> -> vector<32x32xf32>
      %c0_33 = arith.constant 0 : index
      %c0_34 = arith.constant 0 : index
      %47 = vector.load %arg5[%c0_33, %c0_34] : memref<1x32xf32, #tpu.memory_space<vmem>>, vector<1x32xf32>
      %48 = vector.broadcast %47 : vector<1x32xf32> to vector<32x32xf32>
      %49 = arith.addf %46, %48 : vector<32x32xf32>
      %cst_35 = arith.constant 5.000000e-01 : f32
      %50 = vector.broadcast %cst_35 : f32 to vector<32x32xf32>
      %51 = arith.mulf %50, %49 : vector<32x32xf32>
      %cst_36 = arith.constant 4.471500e-02 : f32
      %52 = vector.broadcast %cst_36 : f32 to vector<32x32xf32>
      %53 = arith.mulf %52, %49 : vector<32x32xf32>
      %54 = arith.mulf %53, %49 : vector<32x32xf32>
      %55 = arith.mulf %54, %49 : vector<32x32xf32>
      %56 = arith.addf %49, %55 : vector<32x32xf32>
      %cst_37 = arith.constant 0.797884583 : f32
      %57 = vector.broadcast %cst_37 : f32 to vector<32x32xf32>
      %58 = arith.mulf %57, %56 : vector<32x32xf32>
      %59 = math.tanh %58 : vector<32x32xf32>
      %cst_38 = arith.constant 1.000000e+00 : f32
      %60 = vector.broadcast %cst_38 : f32 to vector<32x32xf32>
      %61 = arith.addf %60, %59 : vector<32x32xf32>
      %62 = arith.mulf %51, %61 : vector<32x32xf32>
      %c0_39 = arith.constant 0 : index
      %c0_40 = arith.constant 0 : index
      %63 = vector.load %arg6[%c0_39, %c0_40] : memref<1x32xf32, #tpu.memory_space<vmem>>, vector<1x32xf32>
      %c0_41 = arith.constant 0 : index
      %c0_42 = arith.constant 0 : index
      %64 = vector.load %arg7[%c0_41, %c0_42] : memref<1x32xf32, #tpu.memory_space<vmem>>, vector<1x32xf32>
      %cst_43 = arith.constant dense<0.000000e+00> : vector<32xf32>
      %65 = vector.multi_reduction <add>, %62, %cst_43 [1] : vector<32x32xf32> to vector<32xf32>
      %66 = vector.shape_cast %65 : vector<32xf32> to vector<32x1xf32>
      %cst_44 = arith.constant 3.200000e+01 : f32
      %67 = vector.broadcast %cst_44 : f32 to vector<32x1xf32>
      %68 = arith.divf %66, %67 : vector<32x1xf32>
      %69 = vector.broadcast %68 : vector<32x1xf32> to vector<32x32xf32>
      %70 = arith.subf %62, %69 : vector<32x32xf32>
      %71 = arith.mulf %70, %70 : vector<32x32xf32>
      %cst_45 = arith.constant dense<0.000000e+00> : vector<32xf32>
      %72 = vector.multi_reduction <add>, %71, %cst_45 [1] : vector<32x32xf32> to vector<32xf32>
      %73 = vector.shape_cast %72 : vector<32xf32> to vector<32x1xf32>
      %cst_46 = arith.constant 3.200000e+01 : f32
      %74 = vector.broadcast %cst_46 : f32 to vector<32x1xf32>
      %75 = arith.divf %73, %74 : vector<32x1xf32>
      %76 = vector.broadcast %68 : vector<32x1xf32> to vector<32x32xf32>
      %77 = arith.subf %62, %76 : vector<32x32xf32>
      %cst_47 = arith.constant 9.99999997E-7 : f32
      %78 = vector.broadcast %cst_47 : f32 to vector<32x1xf32>
      %79 = arith.addf %75, %78 : vector<32x1xf32>
      %80 = math.rsqrt %79 : vector<32x1xf32>
      %81 = vector.broadcast %80 : vector<32x1xf32> to vector<32x32xf32>
      %82 = arith.mulf %77, %81 : vector<32x32xf32>
      %83 = vector.broadcast %63 : vector<1x32xf32> to vector<32x32xf32>
      %84 = arith.mulf %82, %83 : vector<32x32xf32>
      %85 = vector.broadcast %64 : vector<1x32xf32> to vector<32x32xf32>
      %86 = arith.addf %84, %85 : vector<32x32xf32>
      %87 = arith.truncf %86 : vector<32x32xf32> to vector<32x32xbf16>
      %c0_48 = arith.constant 0 : index
      %c0_49 = arith.constant 0 : index
      %88 = vector.load %arg11[%c0_48, %c0_49] : memref<32x32xbf16, #tpu.memory_space<vmem>>, vector<32x32xbf16>
      tpu.vector_store %arg11[%c0_48, %c0_49], %87 {strides = array<i32>} : memref<32x32xbf16, #tpu.memory_space<vmem>>, vector<32x32xbf16>,
      %cst_50 = arith.constant -1.000000e+09 : f32
      %89 = vector.broadcast %cst_50 : f32 to vector<32x1xf32>
      %c0_51 = arith.constant 0 : index
      %c0_52 = arith.constant 0 : index
      %90 = vector.load %arg12[%c0_51, %c0_52] : memref<32x1xf32, #tpu.memory_space<vmem>>, vector<32x1xf32>
      tpu.vector_store %arg12[%c0_51, %c0_52], %89 {strides = array<i32>} : memref<32x1xf32, #tpu.memory_space<vmem>>, vector<32x1xf32>,
      %cst_53 = arith.constant 0.000000e+00 : f32
      %91 = vector.broadcast %cst_53 : f32 to vector<32x1xf32>
      %c0_54 = arith.constant 0 : index
      %c0_55 = arith.constant 0 : index
      %92 = vector.load %arg13[%c0_54, %c0_55] : memref<32x1xf32, #tpu.memory_space<vmem>>, vector<32x1xf32>
      tpu.vector_store %arg13[%c0_54, %c0_55], %91 {strides = array<i32>} : memref<32x1xf32, #tpu.memory_space<vmem>>, vector<32x1xf32>,
      %cst_56 = arith.constant 0.000000e+00 : f32
      %93 = vector.broadcast %cst_56 : f32 to vector<32x1xf32>
      %c0_57 = arith.constant 0 : index
      %c0_58 = arith.constant 0 : index
      %94 = vector.load %arg14[%c0_57, %c0_58] : memref<32x1xf32, #tpu.memory_space<vmem>>, vector<32x1xf32>
      tpu.vector_store %arg14[%c0_57, %c0_58], %93 {strides = array<i32>} : memref<32x1xf32, #tpu.memory_space<vmem>>, vector<32x1xf32>,
    } else {
    }
    %c0 = arith.constant 0 : index
    %c0_1 = arith.constant 0 : index
    %3 = vector.load %arg11[%c0, %c0_1] : memref<32x32xbf16, #tpu.memory_space<vmem>>, vector<32x32xbf16>
    %c0_2 = arith.constant 0 : index
    %c0_3 = arith.constant 0 : index
    %4 = vector.load %arg8[%c0_2, %c0_3] : memref<32x128xbf16, #tpu.memory_space<vmem>>, vector<32x128xbf16>
    %cst = arith.constant dense<0.000000e+00> : vector<32x128xf32>
    %5 = tpu.matmul %3, %4, %cst {dimension_numbers = #tpu.dot_dimension_numbers<[1], [0], [0], [1], [0, 0, 1, 1], [], []>} : vector<32x32xbf16>, vector<32x128xbf16>, vector<32x128xf32> -> vector<32x128xf32>
    %c0_4 = arith.constant 0 : index
    %c0_5 = arith.constant 0 : index
    %6 = vector.load %arg9[%c0_4, %c0_5] : memref<1x128xf32, #tpu.memory_space<vmem>>, vector<1x128xf32>
    %7 = vector.broadcast %6 : vector<1x128xf32> to vector<32x128xf32>
    %8 = arith.addf %5, %7 : vector<32x128xf32>
    %c0_6 = arith.constant 0 : index
    %c0_7 = arith.constant 0 : index
    %9 = vector.load %arg3[%c0_6, %c0_7] : memref<32x1xi32, #tpu.memory_space<vmem>>, vector<32x1xi32>
    %10 = tpu.iota {dimensions = array<i32: 1>} : vector<32x128xi32>
    %c128_i32 = arith.constant 128 : i32
    %11 = arith.muli %arg1, %c128_i32 : i32
    %12 = vector.broadcast %11 : i32 to vector<32x128xi32>
    %13 = arith.addi %10, %12 : vector<32x128xi32>
    %c0_8 = arith.constant 0 : index
    %c0_9 = arith.constant 0 : index
    %14 = vector.load %arg14[%c0_8, %c0_9] : memref<32x1xf32, #tpu.memory_space<vmem>>, vector<32x1xf32>
    %15 = vector.broadcast %9 : vector<32x1xi32> to vector<32x128xi32>
    %16 = arith.cmpi eq, %13, %15 : vector<32x128xi32>
    %cst_10 = arith.constant 0.000000e+00 : f32
    %17 = vector.broadcast %cst_10 : f32 to vector<32x128xf32>
    %18 = arith.select %16, %8, %17 : vector<32x128xi1>, vector<32x128xf32>
    %cst_11 = arith.constant dense<0.000000e+00> : vector<32xf32>
    %19 = vector.multi_reduction <add>, %18, %cst_11 [1] : vector<32x128xf32> to vector<32xf32>
    %20 = vector.shape_cast %19 : vector<32xf32> to vector<32x1xf32>
    %21 = arith.addf %14, %20 : vector<32x1xf32>
    %c0_12 = arith.constant 0 : index
    %c0_13 = arith.constant 0 : index
    %22 = vector.load %arg14[%c0_12, %c0_13] : memref<32x1xf32, #tpu.memory_space<vmem>>, vector<32x1xf32>
    tpu.vector_store %arg14[%c0_12, %c0_13], %21 {strides = array<i32>} : memref<32x1xf32, #tpu.memory_space<vmem>>, vector<32x1xf32>,
    %cst_14 = arith.constant dense<0xFF800000> : vector<32xf32>
    %23 = vector.multi_reduction <maximumf>, %8, %cst_14 [1] : vector<32x128xf32> to vector<32xf32>
    %24 = vector.shape_cast %23 : vector<32xf32> to vector<32x1xf32>
    %c0_15 = arith.constant 0 : index
    %c0_16 = arith.constant 0 : index
    %25 = vector.load %arg12[%c0_15, %c0_16] : memref<32x1xf32, #tpu.memory_space<vmem>>, vector<32x1xf32>
    %26 = arith.maximumf %25, %24 : vector<32x1xf32>
    %c0_17 = arith.constant 0 : index
    %c0_18 = arith.constant 0 : index
    %27 = vector.load %arg13[%c0_17, %c0_18] : memref<32x1xf32, #tpu.memory_space<vmem>>, vector<32x1xf32>
    %c0_19 = arith.constant 0 : index
    %c0_20 = arith.constant 0 : index
    %28 = vector.load %arg12[%c0_19, %c0_20] : memref<32x1xf32, #tpu.memory_space<vmem>>, vector<32x1xf32>
    %29 = arith.subf %28, %26 : vector<32x1xf32>
    %30 = math.exp %29 : vector<32x1xf32>
    %31 = arith.mulf %27, %30 : vector<32x1xf32>
    %32 = vector.broadcast %26 : vector<32x1xf32> to vector<32x128xf32>
    %33 = arith.subf %8, %32 : vector<32x128xf32>
    %34 = math.exp %33 : vector<32x128xf32>
    %cst_21 = arith.constant dense<0.000000e+00> : vector<32xf32>
    %35 = vector.multi_reduction <add>, %34, %cst_21 [1] : vector<32x128xf32> to vector<32xf32>
    %36 = vector.shape_cast %35 : vector<32xf32> to vector<32x1xf32>
    %37 = arith.addf %31, %36 : vector<32x1xf32>
    %c0_22 = arith.constant 0 : index
    %c0_23 = arith.constant 0 : index
    %38 = vector.load %arg13[%c0_22, %c0_23] : memref<32x1xf32, #tpu.memory_space<vmem>>, vector<32x1xf32>
    tpu.vector_store %arg13[%c0_22, %c0_23], %37 {strides = array<i32>} : memref<32x1xf32, #tpu.memory_space<vmem>>, vector<32x1xf32>,
    %c0_24 = arith.constant 0 : index
    %c0_25 = arith.constant 0 : index
    %39 = vector.load %arg12[%c0_24, %c0_25] : memref<32x1xf32, #tpu.memory_space<vmem>>, vector<32x1xf32>
    tpu.vector_store %arg12[%c0_24, %c0_25], %26 {strides = array<i32>} : memref<32x1xf32, #tpu.memory_space<vmem>>, vector<32x1xf32>,
    %c0_i32_26 = arith.constant 0 : i32
    %40 = arith.cmpi eq, %arg1, %c0_i32_26 : i32
    %41 = arith.extui %40 : i1 to i32
    %c0_i32_27 = arith.constant 0 : i32
    %42 = arith.cmpi ne, %41, %c0_i32_27 : i32
    scf.if %42 {
      %c0_28 = arith.constant 0 : index
      %c0_29 = arith.constant 0 : index
      %43 = vector.load %arg12[%c0_28, %c0_29] : memref<32x1xf32, #tpu.memory_space<vmem>>, vector<32x1xf32>
      %c0_30 = arith.constant 0 : index
      %c0_31 = arith.constant 0 : index
      %44 = vector.load %arg13[%c0_30, %c0_31] : memref<32x1xf32, #tpu.memory_space<vmem>>, vector<32x1xf32>
      %45 = math.log %44 : vector<32x1xf32>
      %46 = arith.addf %43, %45 : vector<32x1xf32>
      %c0_32 = arith.constant 0 : index
      %c0_33 = arith.constant 0 : index
      %47 = vector.load %arg14[%c0_32, %c0_33] : memref<32x1xf32, #tpu.memory_space<vmem>>, vector<32x1xf32>
      %48 = arith.subf %46, %47 : vector<32x1xf32>
      %c-1_i32 = arith.constant -1 : i32
      %49 = vector.broadcast %c-1_i32 : i32 to vector<32x1xi32>
      %50 = arith.cmpi sgt, %9, %49 : vector<32x1xi32>
      %51 = arith.extui %50 : vector<32x1xi1> to vector<32x1xi32>
      %52 = arith.sitofp %51 : vector<32x1xi32> to vector<32x1xf32>
      %c0_34 = arith.constant 0 : index
      %c0_35 = arith.constant 0 : index
      %53 = vector.load %arg14[%c0_34, %c0_35] : memref<32x1xf32, #tpu.memory_space<vmem>>, vector<32x1xf32>
      %c0_36 = arith.constant 0 : index
      %c0_37 = arith.constant 0 : index
      %54 = vector.load %arg12[%c0_36, %c0_37] : memref<32x1xf32, #tpu.memory_space<vmem>>, vector<32x1xf32>
      %55 = arith.cmpf oge, %53, %54 : vector<32x1xf32>
      %56 = arith.andi %50, %55 : vector<32x1xi1>
      %cst_38 = arith.constant 1.000000e+00 : f32
      %cst_39 = arith.constant 0.000000e+00 : f32
      %57 = vector.broadcast %cst_38 : f32 to vector<32x1xf32>
      %58 = vector.broadcast %cst_39 : f32 to vector<32x1xf32>
      %59 = arith.select %56, %57, %58 : vector<32x1xi1>, vector<32x1xf32>
      %60 = arith.mulf %48, %52 : vector<32x1xf32>
      %61 = vector.shape_cast %60 : vector<32x1xf32> to vector<1x32x1xf32>
      %cst_40 = arith.constant dense<0.000000e+00> : vector<1xf32>
      %62 = vector.multi_reduction <add>, %61, %cst_40 [1, 2] : vector<1x32x1xf32> to vector<1xf32>
      %63 = vector.shape_cast %62 : vector<1xf32> to vector<1x1x1xf32>
      %64 = vector.extract %63[0, 0, 0] : f32 from vector<1x1x1xf32>
      %65 = vector.broadcast %64 : f32 to vector<1x1xf32>
      %66 = vector.shape_cast %59 : vector<32x1xf32> to vector<1x32x1xf32>
      %cst_41 = arith.constant dense<0.000000e+00> : vector<1xf32>
      %67 = vector.multi_reduction <add>, %66, %cst_41 [1, 2] : vector<1x32x1xf32> to vector<1xf32>
      %68 = vector.shape_cast %67 : vector<1xf32> to vector<1x1x1xf32>
      %69 = vector.extract %68[0, 0, 0] : f32 from vector<1x1x1xf32>
      %70 = vector.broadcast %69 : f32 to vector<1x1xf32>
      %71 = vector.shape_cast %52 : vector<32x1xf32> to vector<1x32x1xf32>
      %cst_42 = arith.constant dense<0.000000e+00> : vector<1xf32>
      %72 = vector.multi_reduction <add>, %71, %cst_42 [1, 2] : vector<1x32x1xf32> to vector<1xf32>
      %73 = vector.shape_cast %72 : vector<1xf32> to vector<1x1x1xf32>
      %74 = vector.extract %73[0, 0, 0] : f32 from vector<1x1x1xf32>
      %75 = vector.broadcast %74 : f32 to vector<1x1xf32>
      %76 = tpu.iota {dimensions = array<i32: 0>} : vector<8x128xi32>
      %77 = tpu.iota {dimensions = array<i32: 1>} : vector<8x128xi32>
      %c0_i32_43 = arith.constant 0 : i32
      %78 = vector.broadcast %c0_i32_43 : i32 to vector<8x128xi32>
      %79 = arith.cmpi eq, %76, %78 : vector<8x128xi32>
      %c0_i32_44 = arith.constant 0 : i32
      %80 = vector.broadcast %c0_i32_44 : i32 to vector<8x128xi32>
      %81 = arith.cmpi eq, %77, %80 : vector<8x128xi32>
      %82 = arith.andi %79, %81 : vector<8x128xi1>
      %cst_45 = arith.constant 0.000000e+00 : f32
      %83 = vector.shape_cast %65 : vector<1x1xf32> to vector<1x1xf32>
      %84 = vector.broadcast %83 : vector<1x1xf32> to vector<8x128xf32>
      %85 = vector.broadcast %cst_45 : f32 to vector<8x128xf32>
      %86 = arith.select %82, %84, %85 : vector<8x128xi1>, vector<8x128xf32>
      %c1_i32 = arith.constant 1 : i32
      %87 = vector.broadcast %c1_i32 : i32 to vector<8x128xi32>
      %88 = arith.cmpi eq, %77, %87 : vector<8x128xi32>
      %89 = arith.andi %79, %88 : vector<8x128xi1>
      %cst_46 = arith.constant 0.000000e+00 : f32
      %90 = vector.shape_cast %70 : vector<1x1xf32> to vector<1x1xf32>
      %91 = vector.broadcast %90 : vector<1x1xf32> to vector<8x128xf32>
      %92 = vector.broadcast %cst_46 : f32 to vector<8x128xf32>
      %93 = arith.select %89, %91, %92 : vector<8x128xi1>, vector<8x128xf32>
      %94 = arith.addf %86, %93 : vector<8x128xf32>
      %c2_i32 = arith.constant 2 : i32
      %95 = vector.broadcast %c2_i32 : i32 to vector<8x128xi32>
      %96 = arith.cmpi eq, %77, %95 : vector<8x128xi32>
      %97 = arith.andi %79, %96 : vector<8x128xi1>
      %cst_47 = arith.constant 0.000000e+00 : f32
      %98 = vector.shape_cast %75 : vector<1x1xf32> to vector<1x1xf32>
      %99 = vector.broadcast %98 : vector<1x1xf32> to vector<8x128xf32>
      %100 = vector.broadcast %cst_47 : f32 to vector<8x128xf32>
      %101 = arith.select %97, %99, %100 : vector<8x128xi1>, vector<8x128xf32>
      %102 = arith.addf %94, %101 : vector<8x128xf32>
      %c0_48 = arith.constant 0 : index
      %c0_49 = arith.constant 0 : index
      %c0_50 = arith.constant 0 : index
      %103 = vector.load %arg10[%c0_48, %c0_49, %c0_50] : memref<1x8x128xf32, #tpu.memory_space<vmem>>, vector<1x8x128xf32>
      %104 = vector.shape_cast %103 : vector<1x8x128xf32> to vector<8x128xf32>
      %105 = vector.shape_cast %102 : vector<8x128xf32> to vector<1x8x128xf32>
      tpu.vector_store %arg10[%c0_48, %c0_49, %c0_50], %105 {strides = array<i32>} : memref<1x8x128xf32, #tpu.memory_space<vmem>>, vector<1x8x128xf32>,
    } else {
    }
    return
  }
  func.func @transform_0(%arg0: i32, %arg1: i32) -> (i32, i32) {
    %c0_i32 = arith.constant 0 : i32
    %c0_i32_0 = arith.constant 0 : i32
    return %arg0, %c0_i32 : i32, i32
  }
  func.func @transform_1(%arg0: i32, %arg1: i32) -> (i32, i32) {
    %c0_i32 = arith.constant 0 : i32
    %c0_i32_0 = arith.constant 0 : i32
    return %arg0, %c0_i32 : i32, i32
  }
  func.func @transform_2(%arg0: i32, %arg1: i32) -> (i32, i32) {
    %c0_i32 = arith.constant 0 : i32
    %c0_i32_0 = arith.constant 0 : i32
    %c0_i32_1 = arith.constant 0 : i32
    return %c0_i32, %c0_i32_0 : i32, i32
  }
  func.func @transform_3(%arg0: i32, %arg1: i32) -> (i32, i32) {
    %c0_i32 = arith.constant 0 : i32
    %c0_i32_0 = arith.constant 0 : i32
    %c0_i32_1 = arith.constant 0 : i32
    return %c0_i32, %c0_i32_0 : i32, i32
  }
  func.func @transform_4(%arg0: i32, %arg1: i32) -> (i32, i32) {
    %c0_i32 = arith.constant 0 : i32
    %c0_i32_0 = arith.constant 0 : i32
    %c0_i32_1 = arith.constant 0 : i32
    return %c0_i32, %c0_i32_0 : i32, i32
  }
  func.func @transform_5(%arg0: i32, %arg1: i32) -> (i32, i32) {
    %c0_i32 = arith.constant 0 : i32
    %c0_i32_0 = arith.constant 0 : i32
    %c0_i32_1 = arith.constant 0 : i32
    return %c0_i32, %c0_i32_0 : i32, i32
  }
  func.func @transform_6(%arg0: i32, %arg1: i32) -> (i32, i32) {
    %c0_i32 = arith.constant 0 : i32
    %c0_i32_0 = arith.constant 0 : i32
    return %c0_i32, %arg1 : i32, i32
  }
  func.func @transform_7(%arg0: i32, %arg1: i32) -> (i32, i32) {
    %c0_i32 = arith.constant 0 : i32
    %c0_i32_0 = arith.constant 0 : i32
    return %c0_i32, %arg1 : i32, i32
  }
  func.func @transform_8(%arg0: i32, %arg1: i32) -> (i32, i32, i32) {
    %c0_i32 = arith.constant 0 : i32
    %c0_i32_0 = arith.constant 0 : i32
    %c0_i32_1 = arith.constant 0 : i32
    return %arg0, %c0_i32, %c0_i32_0 : i32, i32, i32
  }
}

</mosaic_0001>

<llo_original>
// kernel: fwd.8
$region0: #{fwd.8}
  #allocation0 [shape = 'u32[]', space=smem, size = 0x4, offset = 0x4, fixed_abs, tag = 'smem constant byte address 0x4 - core index']
  #allocation1 [shape = 'u32[144,128]{1,0:T(1,128)}', space=vmem, size = 0x12000, scoped, tag = 'internal scratch']
  %s0 = inlined_call_operand.vmem [shape: f32[2,16,32], index: 0, kind: input, shape index: {}]
  %s1 = inlined_call_operand.vmem [shape: s32[2,1,16], index: 1, kind: input, shape index: {}]
  %s2 = inlined_call_operand.vmem [shape: s32[2,16,1], index: 2, kind: input, shape index: {}]
  %s3 = inlined_call_operand.vmem [shape: bf16[32,32], index: 3, kind: input, shape index: {}]
  %s4 = inlined_call_operand.vmem [shape: f32[1,32], index: 4, kind: input, shape index: {}]
  %s5 = inlined_call_operand.vmem [shape: f32[1,32], index: 5, kind: input, shape index: {}]
  %s6 = inlined_call_operand.vmem [shape: f32[1,32], index: 6, kind: input, shape index: {}]
  %s7 = inlined_call_operand.vmem [shape: f32[2,8,128], index: 7, kind: output, shape index: {}]
  %s8 = sld [smem:[#allocation0]]
  $region61: #{fwd.8} parent=0
    _
  %s10 = ssub.s32 1, %s8
  %s11 = scalar_select 0, %s10, %s8
  loop: start=0, step=1, limit=4
  $region2: #{fwd.8} parent=0 // loop_pre_header
    _
  $region3: #{fwd.8} parent=0 // loop_header
    %s13 = sphi 0, %s17
    %p14 = scmp.ge.s32.totalorder %s13, 4
    %s23 = sphi 0, %s25
    %s26 = sphi 0, %s23
    %s27 = sphi 0, %s26
    %s43 = sphi 0, %s27
    %s49 = sphi 0, %s51
    %s52 = sphi 0, %s49
    %s53 = sphi 0, %s52
    %s69 = sphi 0, %s53
    %s75 = sphi 0, %s77
    %s78 = sphi 0, %s75
    %s79 = sphi 0, %s78
    %s95 = sphi 0, %s79
    %s99 = sphi 0, %s99
    %s101 = sphi 0, %s99
    %s102 = sphi 0, %s101
    %s116 = sphi 0, %s102
    %s120 = sphi 0, %s120
    %s122 = sphi 0, %s120
    %s123 = sphi 0, %s122
    %s137 = sphi 0, %s123
    %s141 = sphi 0, %s141
    %s143 = sphi 0, %s141
    %s144 = sphi 0, %s143
    %s158 = sphi 0, %s144
    %s162 = sphi 0, %s162
    %s164 = sphi 0, %s162
    %s165 = sphi 0, %s164
    %s179 = sphi 0, %s165
    %s185 = sphi 0, %s187
    %s188 = sphi 0, %s185
    %s189 = sphi 0, %s188
    %s205 = sphi 0, %s189
  $region4: #{fwd.8} parent=0 // loop_header_branch
    %16 = sbr.rel (%p14) target = $region8
  $region5: #{fwd.8} parent=0 // loop_body
    %s18 = ssub.s32 %s13, 1
    %s19 = ssub.s32 %s13, 2
    %s20 = sadd.s32 %s13, 1
    %s21 = ssub.s32 %s13, %s20
    %p22 = scmp.eq.s32.totalorder %s21, 0
    %s24 = sadd.s32 %s23, 1
    %s25 = scalar_select %p22, %s23, %s24
    %p28 = pneg %p22
    %p29 = scmp.eq.s32.totalorder %s13, 1
    %p30 = por %p28, %p29
    %p31 = scmp.ne.s32.totalorder %s23, %s26
    %p32 = scmp.eq.s32.totalorder %s13, 0
    %p33 = por %p31, %p32
    %p34 = scmp.ne.s32.totalorder %s23, %s26
    %p35 = scmp.eq.s32.totalorder %s18, 1
    %p36 = por %p34, %p35
    %p37 = scmp.ne.s32.totalorder %s26, %s27
    %p38 = scmp.eq.s32.totalorder %s18, 0
    %p39 = por %p37, %p38
    %p40 = scmp.ne.s32.totalorder %s26, %s27
    %p41 = scmp.eq.s32.totalorder %s19, 1
    %p42 = por %p40, %p41
    %p44 = scmp.ne.s32.totalorder %s27, %s43
    %p45 = scmp.eq.s32.totalorder %s19, 0
    %p46 = por %p44, %p45
    %s47 = ssub.s32 %s13, %s20
    %p48 = scmp.eq.s32.totalorder %s47, 0
    %s50 = sadd.s32 %s49, 1
    %s51 = scalar_select %p48, %s49, %s50
    %p54 = pneg %p48
    %p55 = scmp.eq.s32.totalorder %s13, 1
    %p56 = por %p54, %p55
    %p57 = scmp.ne.s32.totalorder %s49, %s52
    %p58 = scmp.eq.s32.totalorder %s13, 0
    %p59 = por %p57, %p58
    %p60 = scmp.ne.s32.totalorder %s49, %s52
    %p61 = scmp.eq.s32.totalorder %s18, 1
    %p62 = por %p60, %p61
    %p63 = scmp.ne.s32.totalorder %s52, %s53
    %p64 = scmp.eq.s32.totalorder %s18, 0
    %p65 = por %p63, %p64
    %p66 = scmp.ne.s32.totalorder %s52, %s53
    %p67 = scmp.eq.s32.totalorder %s19, 1
    %p68 = por %p66, %p67
    %p70 = scmp.ne.s32.totalorder %s53, %s69
    %p71 = scmp.eq.s32.totalorder %s19, 0
    %p72 = por %p70, %p71
    %s73 = ssub.s32 %s13, %s20
    %p74 = scmp.eq.s32.totalorder %s73, 0
    %s76 = sadd.s32 %s75, 1
    %s77 = scalar_select %p74, %s75, %s76
    %p80 = pneg %p74
    %p81 = scmp.eq.s32.totalorder %s13, 1
    %p82 = por %p80, %p81
    %p83 = scmp.ne.s32.totalorder %s75, %s78
    %p84 = scmp.eq.s32.totalorder %s13, 0
    %p85 = por %p83, %p84
    %p86 = scmp.ne.s32.totalorder %s75, %s78
    %p87 = scmp.eq.s32.totalorder %s18, 1
    %p88 = por %p86, %p87
    %p89 = scmp.ne.s32.totalorder %s78, %s79
    %p90 = scmp.eq.s32.totalorder %s18, 0
    %p91 = por %p89, %p90
    %p92 = scmp.ne.s32.totalorder %s78, %s79
    %p93 = scmp.eq.s32.totalorder %s19, 1
    %p94 = por %p92, %p93
    %p96 = scmp.ne.s32.totalorder %s79, %s95
    %p97 = scmp.eq.s32.totalorder %s19, 0
    %p98 = por %p96, %p97
    %s100 = sadd.s32 %s99, 1
    %p103 = scmp.eq.s32.totalorder %s13, 1
    %p104 = scmp.ne.s32.totalorder %s99, %s101
    %p105 = scmp.eq.s32.totalorder %s13, 0
    %p106 = por %p104, %p105
    %p107 = scmp.ne.s32.totalorder %s99, %s101
    %p108 = scmp.eq.s32.totalorder %s18, 1
    %p109 = por %p107, %p108
    %p110 = scmp.ne.s32.totalorder %s101, %s102
    %p111 = scmp.eq.s32.totalorder %s18, 0
    %p112 = por %p110, %p111
    %p113 = scmp.ne.s32.totalorder %s101, %s102
    %p114 = scmp.eq.s32.totalorder %s19, 1
    %p115 = por %p113, %p114
    %p117 = scmp.ne.s32.totalorder %s102, %s116
    %p118 = scmp.eq.s32.totalorder %s19, 0
    %p119 = por %p117, %p118
    %s121 = sadd.s32 %s120, 1
    %p124 = scmp.eq.s32.totalorder %s13, 1
    %p125 = scmp.ne.s32.totalorder %s120, %s122
    %p126 = scmp.eq.s32.totalorder %s13, 0
    %p127 = por %p125, %p126
    %p128 = scmp.ne.s32.totalorder %s120, %s122
    %p129 = scmp.eq.s32.totalorder %s18, 1
    %p130 = por %p128, %p129
    %p131 = scmp.ne.s32.totalorder %s122, %s123
    %p132 = scmp.eq.s32.totalorder %s18, 0
    %p133 = por %p131, %p132
    %p134 = scmp.ne.s32.totalorder %s122, %s123
    %p135 = scmp.eq.s32.totalorder %s19, 1
    %p136 = por %p134, %p135
    %p138 = scmp.ne.s32.totalorder %s123, %s137
    %p139 = scmp.eq.s32.totalorder %s19, 0
    %p140 = por %p138, %p139
    %s142 = sadd.s32 %s141, 1
    %p145 = scmp.eq.s32.totalorder %s13, 1
    %p146 = scmp.ne.s32.totalorder %s141, %s143
    %p147 = scmp.eq.s32.totalorder %s13, 0
    %p148 = por %p146, %p147
    %p149 = scmp.ne.s32.totalorder %s141, %s143
    %p150 = scmp.eq.s32.totalorder %s18, 1
    %p151 = por %p149, %p150
    %p152 = scmp.ne.s32.totalorder %s143, %s144
    %p153 = scmp.eq.s32.totalorder %s18, 0
    %p154 = por %p152, %p153
    %p155 = scmp.ne.s32.totalorder %s143, %s144
    %p156 = scmp.eq.s32.totalorder %s19, 1
    %p157 = por %p155, %p156
    %p159 = scmp.ne.s32.totalorder %s144, %s158
    %p160 = scmp.eq.s32.totalorder %s19, 0
    %p161 = por %p159, %p160
    %s163 = sadd.s32 %s162, 1
    %p166 = scmp.eq.s32.totalorder %s13, 1
    %p167 = scmp.ne.s32.totalorder %s162, %s164
    %p168 = scmp.eq.s32.totalorder %s13, 0
    %p169 = por %p167, %p168
    %p170 = scmp.ne.s32.totalorder %s162, %s164
    %p171 = scmp.eq.s32.totalorder %s18, 1
    %p172 = por %p170, %p171
    %p173 = scmp.ne.s32.totalorder %s164, %s165
    %p174 = scmp.eq.s32.totalorder %s18, 0
    %p175 = por %p173, %p174
    %p176 = scmp.ne.s32.totalorder %s164, %s165
    %p177 = scmp.eq.s32.totalorder %s19, 1
    %p178 = por %p176, %p177
    %p180 = scmp.ne.s32.totalorder %s165, %s179
    %p181 = scmp.eq.s32.totalorder %s19, 0
    %p182 = por %p180, %p181
    %s183 = ssub.s32 %s13, %s20
    %p184 = scmp.eq.s32.totalorder %s183, 0
    %s186 = sadd.s32 %s185, 1
    %s187 = scalar_select %p184, %s185, %s186
    %p190 = pneg %p184
    %p191 = scmp.eq.s32.totalorder %s13, 1
    %p192 = por %p190, %p191
    %p193 = scmp.ne.s32.totalorder %s185, %s188
    %p194 = scmp.eq.s32.totalorder %s13, 0
    %p195 = por %p193, %p194
    %p196 = scmp.ne.s32.totalorder %s185, %s188
    %p197 = scmp.eq.s32.totalorder %s18, 1
    %p198 = por %p196, %p197
    %p199 = scmp.ne.s32.totalorder %s188, %s189
    %p200 = scmp.eq.s32.totalorder %s18, 0
    %p201 = por %p199, %p200
    %p202 = scmp.ne.s32.totalorder %s188, %s189
    %p203 = scmp.eq.s32.totalorder %s19, 1
    %p204 = por %p202, %p203
    %p206 = scmp.ne.s32.totalorder %s189, %s205
    %p207 = scmp.eq.s32.totalorder %s19, 0
    %p208 = por %p206, %p207
    %p209 = scmp.le.s32.totalorder 1, %s13
    %p210 = scmp.lt.s32.totalorder %s13, 3
    %p211 = pnand %p209, %p210
    %p212 = pneg %p211
    // Predicated region
    $region9: #{fwd.8} parent=5 // pred_check
      _
    $region10: #{fwd.8} parent=5 // pred_check_branch
      %214 = sbr.rel (%p211) target = $region12
    $region11: #{fwd.8} parent=5 // pred_region
      %s215 = ssub.s32 %s13, 1
      // Predicated region
      $region13: #{fwd.8} parent=11 // pred_check
        %p216 = pneg %p112
      $region14: #{fwd.8} parent=11 // pred_check_branch
        %218 = sbr.rel (%p216) target = $region16
      $region15: #{fwd.8} parent=11 // pred_region
        _
      $region16: #{fwd.8} parent=11 // pred_fallthru
        _
      // Predicated region
      $region17: #{fwd.8} parent=11 // pred_check
        %p219 = pneg %p133
      $region18: #{fwd.8} parent=11 // pred_check_branch
        %221 = sbr.rel (%p219) target = $region20
      $region19: #{fwd.8} parent=11 // pred_region
        _
      $region20: #{fwd.8} parent=11 // pred_fallthru
        _
      // Predicated region
      $region21: #{fwd.8} parent=11 // pred_check
        %p222 = pneg %p154
      $region22: #{fwd.8} parent=11 // pred_check_branch
        %224 = sbr.rel (%p222) target = $region24
      $region23: #{fwd.8} parent=11 // pred_region
        _
      $region24: #{fwd.8} parent=11 // pred_fallthru
        _
      // Predicated region
      $region25: #{fwd.8} parent=11 // pred_check
        %p225 = pneg %p175
      $region26: #{fwd.8} parent=11 // pred_check_branch
        %227 = sbr.rel (%p225) target = $region28
      $region27: #{fwd.8} parent=11 // pred_region
        _
      $region28: #{fwd.8} parent=11 // pred_fallthru
        _
    $region12: #{fwd.8} parent=5 // pred_fallthru
      _
    %p228 = scmp.lt.s32.totalorder %s13, 2
    // Predicated region
    $region29: #{fwd.8} parent=5 // pred_check
      %p229 = pneg %p228
    $region30: #{fwd.8} parent=5 // pred_check_branch
      %231 = sbr.rel (%p229) target = $region32
    $region31: #{fwd.8} parent=5 // pred_region
      // Predicated region
      $region33: #{fwd.8} parent=31 // pred_check
        %p232 = pneg %p33
      $region34: #{fwd.8} parent=31 // pred_check_branch
        %234 = sbr.rel (%p232) target = $region36
      $region35: #{fwd.8} parent=31 // pred_region
        %p235 = scmp.lt.s32.totalorder %s13, 1
        %s236 = scalar_select %p235, %s13, 1
        %s237 = smul.addr %s236, 2
        %s238 = smul.addr %s237, 8
        %s239 = scalar_lea.vmem %s0, %s238
      $region36: #{fwd.8} parent=31 // pred_fallthru
        _
      // Predicated region
      $region37: #{fwd.8} parent=31 // pred_check
        %p240 = pneg %p59
      $region38: #{fwd.8} parent=31 // pred_check_branch
        %242 = sbr.rel (%p240) target = $region40
      $region39: #{fwd.8} parent=31 // pred_region
        %p243 = scmp.lt.s32.totalorder %s13, 1
        %s244 = scalar_select %p243, %s13, 1
        %s245 = scalar_lea.vmem %s1, %s244
      $region40: #{fwd.8} parent=31 // pred_fallthru
        _
      // Predicated region
      $region41: #{fwd.8} parent=31 // pred_check
        %p246 = pneg %p85
      $region42: #{fwd.8} parent=31 // pred_check_branch
        %248 = sbr.rel (%p246) target = $region44
      $region43: #{fwd.8} parent=31 // pred_region
        %p249 = scmp.lt.s32.totalorder %s13, 1
        %s250 = scalar_select %p249, %s13, 1
        %s251 = smul.addr %s250, 2
        %s252 = smul.addr %s251, 8
        %s253 = scalar_lea.vmem %s2, %s252
      $region44: #{fwd.8} parent=31 // pred_fallthru
        _
    $region32: #{fwd.8} parent=5 // pred_fallthru
      _
    %p254 = scmp.le.s32.totalorder 1, %s13
    %p255 = scmp.lt.s32.totalorder %s13, 3
    %p256 = pnand %p254, %p255
    %p257 = pneg %p256
    // Predicated region
    $region45: #{fwd.8} parent=5 // pred_check
      _
    $region46: #{fwd.8} parent=5 // pred_check_branch
      %259 = sbr.rel (%p256) target = $region48
    $region47: #{fwd.8} parent=5 // pred_region
      %s260 = ssub.s32 %s13, 1
      %p261 = scmp.lt.s32.totalorder %s18, 1
      %s262 = scalar_select %p261, %s18, 1
      %s263 = smul.addr %s262, 2
      %s264 = smul.addr %s263, 8
      %s265 = scalar_lea.vmem %s0, %s264
      %p266 = pneg %p39
      %p267 = pneg %p36
      %p268 = scmp.lt.s32.totalorder %s18, 1
      %s269 = scalar_select %p268, %s18, 1
      %s270 = scalar_lea.vmem %s1, %s269
      %p271 = pneg %p65
      %p272 = pneg %p62
      %p273 = scmp.lt.s32.totalorder %s18, 1
      %s274 = scalar_select %p273, %s18, 1
      %s275 = smul.addr %s274, 2
      %s276 = smul.addr %s275, 8
      %s277 = scalar_lea.vmem %s2, %s276
      %p278 = pneg %p91
      %p279 = pneg %p88
      %p280 = pneg %p112
      %p281 = pneg %p109
      %p282 = pneg %p133
      %p283 = pneg %p130
      %p284 = pneg %p154
      %p285 = pneg %p151
      %p286 = pneg %p175
      %p287 = pneg %p172
      %p288 = pneg %p201
      %p289 = pneg %p198
      %p290 = scmp.lt.s32.totalorder %s18, 1
      %s291 = scalar_select %p290, %s18, 1
      %s292 = smul.addr %s291, 8
      %s293 = scalar_lea.vmem %s7, %s292
      %p294 = scmp.lt.s32.totalorder %s18, 1
      %s295 = scalar_select %p294, %s18, 1
      %s296 = smul.addr %s295, 2
      %s297 = smul.addr %s296, 8
      %s298 = scalar_lea.vmem %s0, %s297
      %p299 = scmp.lt.s32.totalorder %s18, 1
      %s300 = scalar_select %p299, %s18, 1
      %s301 = scalar_lea.vmem %s1, %s300
      %p302 = scmp.lt.s32.totalorder %s18, 1
      %s303 = scalar_select %p302, %s18, 1
      %s304 = smul.addr %s303, 2
      %s305 = smul.addr %s304, 8
      %s306 = scalar_lea.vmem %s2, %s305
      %p307 = scmp.lt.s32.totalorder %s18, 1
      %s308 = scalar_select %p307, %s18, 1
      %s309 = smul.addr %s308, 8
      %s310 = scalar_lea.vmem %s7, %s309
      %v312 = vld [vmem:[%s298] sm:$0xff]
      %v313 = vld [vmem:[%s298 + $0x8] sm:$0xff]
      %v314 = vld [vmem:[%s301] sm:$0x1]
      %v315 = vld [vmem:[%s306] sm:$0xff]
      %v316 = vld [vmem:[%s306 + $0x8] sm:$0xff]
      %v317 = vpack.c.bf16 %v313, %v312
      %v318 = vld [vmem:[%s3] sm:$0xf]
      %v319 = vld [vmem:[%s3 + $0x4] sm:$0xf]
      %v320 = vld [vmem:[%s3 + $0x8] sm:$0xf]
      %v321 = vld [vmem:[%s3 + $0xc] sm:$0xf]
      %v322 = vld [vmem:[%s4] sm:$0x1]
      %v324 = vlaneseq
      %v325 = vshrl.u32 %v324, 7
      %v326 = vsub.s32 0, %v325
      %v327 = vrot.slane %v322, %v326
      %v333 = vunpack.c.l.b16 %v318
      %v334 = vunpack.c.l.b16 %v319
      %v335 = vunpack.c.l.b16 %v320
      %v336 = vunpack.c.l.b16 %v321
      %v337 = vpack.c.b16 %v334, %v333
      %v338 = vpack.c.b16 %v336, %v335
      %vm341 = vcmask 261120
      %v343 = vsel %vm341, %v317, 0
      %345 = vmatprep.subr.bf16.mxu0 0
      %346 = vmatpush1.bf16.msra.mxu0 %v337
      %347 = vmatprep.subr.bf16.mxu0 0
      %348 = vmatpush1.bf16.msra.mxu0 %v338
      %349 = vmatprep.subr.bf16.mxu0 0
      %350 = vmatpush1.bf16.msra.mxu0 0
      %351 = vmatprep.subr.bf16.mxu0 0
      %352 = vmatpush1.bf16.msra.mxu0 0
      %353 = vmatprep.subr.bf16.mxu0 0
      %354 = vmatpush1.bf16.msra.mxu0 0
      %355 = vmatprep.subr.bf16.mxu0 0
      %356 = vmatpush1.bf16.msra.mxu0 0
      %357 = vmatprep.subr.bf16.mxu0 0
      %358 = vmatpush1.bf16.msra.mxu0 0
      %359 = vmatprep.subr.bf16.mxu0 0
      %360 = vmatpush1.bf16.msra.mxu0 0
      %361 = vmatprep.subr.bf16.mxu0 0
      %362 = vmatpush1.bf16.msra.mxu0 0
      %363 = vmatprep.subr.bf16.mxu0 0
      %364 = vmatpush1.bf16.msra.mxu0 0
      %365 = vmatprep.subr.bf16.mxu0 0
      %366 = vmatpush1.bf16.msra.mxu0 0
      %367 = vmatprep.subr.bf16.mxu0 0
      %368 = vmatpush1.bf16.msra.mxu0 0
      %369 = vmatprep.subr.bf16.mxu0 0
      %370 = vmatpush1.bf16.msra.mxu0 0
      %371 = vmatprep.subr.bf16.mxu0 0
      %372 = vmatpush1.bf16.msra.mxu0 0
      %373 = vmatprep.subr.bf16.mxu0 0
      %374 = vmatpush1.bf16.msra.mxu0 0
      %375 = vmatprep.subr.bf16.mxu0 0
      %376 = vmatpush1.bf16.msra.mxu0 0
      %377 = vmatprep.mubr.bf16.mxu0 0
      %378 = vmatmul.mubr.bf16.gmra.mrb[0].mxu0 %v343
      %v379 = vpop.f32.mrb[0].mxu0
      %v380 = vadd.f32 %v327, %v379
      %v381 = vpop.f32.mrb[0].mxu0
      %v382 = vpop.f32.mrb[0].mxu0
      %v383 = vadd.f32 %v327, %v382
      %v384 = vpop.f32.mrb[0].mxu0
      %385 = vdwg.mxu0
      %v386 = vmul.f32 %v380, 0.5
      %v387 = vmul.f32 %v383, 0.5
      %v388 = vmul.f32 %v380, 0.044715
      %v389 = vmul.f32 %v383, 0.044715
      %v390 = vmul.f32 %v388, %v380
      %v391 = vmul.f32 %v389, %v383
      %v392 = vmul.f32 %v390, %v380
      %v393 = vmul.f32 %v391, %v383
      %v394 = vadd.f32 %v380, %v392
      %v395 = vadd.f32 %v383, %v393
      %v396 = vmul.f32 %v394, 0.7978846
      %v397 = vmul.f32 %v395, 0.7978846
      %v398 = vtanh.pop %v396
      %v399 = vtanh.pop %v397
      %v400 = vadd.f32 %v398, 1.0
      %v401 = vadd.f32 %v399, 1.0
      %v402 = vmul.f32 %v386, %v400
      %v403 = vmul.f32 %v387, %v401
      %v404 = vld [vmem:[%s5] sm:$0x1]
      %v405 = vld [vmem:[%s6] sm:$0x1]
      %v406 = vsel %vm341, %v402, 0.0
      %407 = vadd.xlane.f32.xlu0 %v406
      %v408 = vpop.xlane.xlu0 %407
      %v409 = vsel %vm341, %v403, 0.0
      %410 = vadd.xlane.f32.xlu0 %v409
      %v411 = vpop.xlane.xlu0 %410
      %v412 = vrcp.pop 32.0
      %v413 = vmul.f32 %v408, %v412
      %v414 = vmul.f32 %v411, %v412
      %v415 = vsub.f32 %v402, %v413
      %v416 = vsub.f32 %v403, %v414
      %v417 = vmul.f32 %v415, %v415
      %v418 = vmul.f32 %v416, %v416
      %v419 = vsel %vm341, %v417, 0.0
      %420 = vadd.xlane.f32.xlu0 %v419
      %v421 = vpop.xlane.xlu0 %420
      %v422 = vsel %vm341, %v418, 0.0
      %423 = vadd.xlane.f32.xlu0 %v422
      %v424 = vpop.xlane.xlu0 %423
      %v425 = vmul.f32 %v421, %v412
      %v426 = vmul.f32 %v424, %v412
      %v427 = vadd.f32 %v425, 1e-06
      %v428 = vadd.f32 %v426, 1e-06
      %v429 = vrsqrt.pop %v427
      %v430 = vrsqrt.pop %v428
      %v431 = vmul.f32 %v415, %v429
      %v432 = vmul.f32 %v416, %v430
      %v434 = vlaneseq
      %v435 = vshrl.u32 %v434, 7
      %v436 = vsub.s32 0, %v435
      %v437 = vrot.slane %v404, %v436
      %v439 = vmul.f32 %v431, %v437
      %v440 = vmul.f32 %v432, %v437
      %v442 = vlaneseq
      %v443 = vshrl.u32 %v442, 7
      %v444 = vsub.s32 0, %v443
      %v445 = vrot.slane %v405, %v444
      %v447 = vadd.f32 %v439, %v445
      %v448 = vadd.f32 %v440, %v445
      %v449 = vpack.c.bf16 %v448, %v447
      %v451 = vsel %vm341, %v449, 0
      %453 = vmatprep.subr.bf16.mxu0 0
      %454 = vmatpush1.bf16.xpose.msra.mxu0 %v451
      %455 = vmatprep.subr.bf16.mxu0 0
      %456 = vmatpush1.bf16.xpose.msra.mxu0 0
      %457 = vmatprep.subr.bf16.mxu0 0
      %458 = vmatpush1.bf16.xpose.msra.mxu0 0
      %459 = vmatprep.subr.bf16.mxu0 0
      %460 = vmatpush1.bf16.xpose.msra.mxu0 0
      %461 = vmatprep.subr.bf16.mxu0 0
      %462 = vmatpush1.bf16.xpose.msra.mxu0 0
      %463 = vmatprep.subr.bf16.mxu0 0
      %464 = vmatpush1.bf16.xpose.msra.mxu0 0
      %465 = vmatprep.subr.bf16.mxu0 0
      %466 = vmatpush1.bf16.xpose.msra.mxu0 0
      %467 = vmatprep.subr.bf16.mxu0 0
      %468 = vmatpush1.bf16.xpose.msra.mxu0 0
      %469 = vmatprep.subr.bf16.mxu0 0
      %470 = vmatpush1.bf16.xpose.msra.mxu0 0
      %471 = vmatprep.subr.bf16.mxu0 0
      %472 = vmatpush1.bf16.xpose.msra.mxu0 0
      %473 = vmatprep.subr.bf16.mxu0 0
      %474 = vmatpush1.bf16.xpose.msra.mxu0 0
      %475 = vmatprep.subr.bf16.mxu0 0
      %476 = vmatpush1.bf16.xpose.msra.mxu0 0
      %477 = vmatprep.subr.bf16.mxu0 0
      %478 = vmatpush1.bf16.xpose.msra.mxu0 0
      %479 = vmatprep.subr.bf16.mxu0 0
      %480 = vmatpush1.bf16.xpose.msra.mxu0 0
      %481 = vmatprep.subr.bf16.mxu0 0
      %482 = vmatpush1.bf16.xpose.msra.mxu0 0
      %483 = vmatprep.subr.bf16.mxu0 0
      %484 = vmatpush1.bf16.xpose.msra.mxu0 0
      %485 = vmatprep.mubr.bf16.mxu0 0
      %486 = vmatmul.mubr.bf16.gmra.mrb[0].mxu0 %v451
      %v487 = vpop.f32.mrb[0].mxu0
      %v488 = vadd.f32 0.0, %v487
      %v489 = vpop.f32.mrb[0].mxu0
      %v490 = vpop.f32.mrb[0].mxu0
      %v491 = vadd.f32 0.0, %v490
      %v492 = vpop.f32.mrb[0].mxu0
      %493 = vdwg.mxu0
      %v494 = vmul.f32 %v488, 0.17677669
      %v495 = vmul.f32 %v491, 0.17677669
      %v496 = vlaneseq
      %v497 = vshrl.u32 %v496, 7
      %v498 = vadd.s32 %v497, 8
      %v499 = vlaneseq
      %v500 = vand.u32 %v499, 127
      %vm501 = vcmp.eq.s32.totalorder %v314, 0
      %v502 = vsel %vm501, 1, 0
      %v503 = vlaneseq
      %v504 = vshrl.u32 %v503, 7
      %v505 = vsub.s32 0, %v504
      %v506 = vrot.slane %v502, %v505
      %vm507 = vcmp.eq.s32.totalorder %v506, 1
      %v508 = vsel %vm507, -1e+09, %v494
      %v509 = vsel %vm507, -1e+09, %v495
      %vm510 = vcmp.eq.s32.totalorder %v497, %v500
      %vm511 = vcmp.eq.s32.totalorder %v498, %v500
      %v512 = vsel %vm510, -1e+09, %v508
      %v513 = vsel %vm511, -1e+09, %v509
      %vm514 = vcmask 130048
      %v515 = vsel %vm514, %v512, -inf
      %516 = vmax.xlane.f32.xlu0 %v515
      %v517 = vpop.xlane.xlu0 %516
      %v518 = vsel %vm514, %v513, -inf
      %519 = vmax.xlane.f32.xlu0 %v518
      %v520 = vpop.xlane.xlu0 %519
      %v521 = vsub.f32 %v512, %v517
      %v522 = vsub.f32 %v513, %v520
      %v523 = vmul.f32 %v521, 1.442695
      %v524 = vpow.pop %v523
      %v525 = vmul.f32 %v522, 1.442695
      %v526 = vpow.pop %v525
      %v527 = vsel %vm514, %v524, 0.0
      %528 = vadd.xlane.f32.xlu0 %v527
      %v529 = vpop.xlane.xlu0 %528
      %v530 = vsel %vm514, %v526, 0.0
      %531 = vadd.xlane.f32.xlu0 %v530
      %v532 = vpop.xlane.xlu0 %531
      %v533 = vlog2.pop %v529
      %v534 = vmul.f32 %v533, 0.6931472
      %v535 = vlog2.pop %v532
      %v536 = vmul.f32 %v535, 0.6931472
      %v537 = vadd.f32 %v517, %v534
      %v538 = vadd.f32 %v520, %v536
      %v539 = vsub.f32 %v512, %v537
      %v540 = vsub.f32 %v513, %v538
      %vm541 = vcmp.lt.s32.totalorder %v315, 0
      %v542 = vsub.s32 0, %v315
      %v543 = vsel %vm541, %v542, %v315
      %vm544 = vcmp.lt.s32.totalorder %v316, 0
      %v545 = vsub.s32 0, %v316
      %v546 = vsel %vm544, %v545, %v316
      %v547 = vsub.s32 %v543, 1
      %v548 = vsub.s32 %v546, 1
      %549 = vset.pattern.permute.xlu0 0
      %550 = vperm.xlu0 %549, %v547
      %v551 = vpop.permute.xlu0 %550
      %552 = vset.pattern.permute.xlu0 0
      %553 = vperm.xlu0 %552, %v548
      %v554 = vpop.permute.xlu0 %553
      %vm555 = vcmp.eq.s32.totalorder %v500, %v551
      %vm556 = vcmp.eq.s32.totalorder %v500, %v554
      %v557 = vsel %vm555, %v539, 0.0
      %v558 = vsel %vm556, %v540, 0.0
      %v559 = vsel %vm514, %v557, 0.0
      %560 = vadd.xlane.f32.xlu0 %v559
      %v561 = vpop.xlane.xlu0 %560
      %v562 = vsel %vm514, %v558, 0.0
      %563 = vadd.xlane.f32.xlu0 %v562
      %v564 = vpop.xlane.xlu0 %563
      %v565 = vsel %vm514, %v539, -inf
      %566 = vmax.xlane.f32.xlu0 %v565
      %v567 = vpop.xlane.xlu0 %566
      %v568 = vsel %vm514, %v540, -inf
      %569 = vmax.xlane.f32.xlu0 %v568
      %v570 = vpop.xlane.xlu0 %569
      %vm571 = vcmp.ge.f32.partialorder %v561, %v567
      %vm572 = vcmp.ge.f32.partialorder %v564, %v570
      %v573 = vsel %vm571, 1, 0
      %v574 = vsel %vm572, 1, 0
      %v575 = vcvt.s32.f32 %v573
      %v576 = vcvt.s32.f32 %v574
      %vm577 = vcmp.gt.s32.totalorder %v315, 0
      %vm578 = vcmp.gt.s32.totalorder %v316, 0
      %v579 = vsel %vm577, 1, 0
      %v580 = vsel %vm578, 1, 0
      %v581 = vcvt.s32.f32 %v579
      %v582 = vcvt.s32.f32 %v580
      %v583 = vsel %vm541, 1, 0
      %v584 = vsel %vm544, 1, 0
      %v585 = vcvt.s32.f32 %v583
      %v586 = vcvt.s32.f32 %v584
      %v587 = vsub.f32 0.0, %v561
      %v588 = vsub.f32 0.0, %v564
      %v589 = vmul.f32 %v587, %v581
      %v590 = vmul.f32 %v588, %v582
      %vm591 = vcmask 7168
      %v592 = vsel %vm591, %v589, 0.0
      %v593 = vsel %vm591, %v590, 0.0
      %v594 = vadd.f32 %v592, %v593
      %595 = vadd.xlane.f32.xlu0 %v594
      %v596 = vpop.xlane.xlu0 %595
      %v597 = vrot.slane %v596, 4
      %v598 = vadd.f32 %v596, %v597
      %v599 = vrot.slane %v598, 2
      %v600 = vadd.f32 %v598, %v599
      %v601 = vrot.slane %v600, 1
      %v602 = vadd.f32 %v600, %v601
      %s603 = vtos %v602
      %v604 = vmul.f32 %v575, %v581
      %v605 = vmul.f32 %v576, %v582
      %v606 = vsel %vm591, %v604, 0.0
      %v607 = vsel %vm591, %v605, 0.0
      %v608 = vadd.f32 %v606, %v607
      %609 = vadd.xlane.f32.xlu0 %v608
      %v610 = vpop.xlane.xlu0 %609
      %v611 = vrot.slane %v610, 4
      %v612 = vadd.f32 %v610, %v611
      %v613 = vrot.slane %v612, 2
      %v614 = vadd.f32 %v612, %v613
      %v615 = vrot.slane %v614, 1
      %v616 = vadd.f32 %v614, %v615
      %s617 = vtos %v616
      %v618 = vsel %vm591, %v581, 0.0
      %v619 = vsel %vm591, %v582, 0.0
      %v620 = vadd.f32 %v618, %v619
      %621 = vadd.xlane.f32.xlu0 %v620
      %v622 = vpop.xlane.xlu0 %621
      %v623 = vrot.slane %v622, 4
      %v624 = vadd.f32 %v622, %v623
      %v625 = vrot.slane %v624, 2
      %v626 = vadd.f32 %v624, %v625
      %v627 = vrot.slane %v626, 1
      %v628 = vadd.f32 %v626, %v627
      %s629 = vtos %v628
      %v630 = vmul.f32 %v587, %v585
      %v631 = vmul.f32 %v588, %v586
      %v632 = vsel %vm591, %v630, 0.0
      %v633 = vsel %vm591, %v631, 0.0
      %v634 = vadd.f32 %v632, %v633
      %635 = vadd.xlane.f32.xlu0 %v634
      %v636 = vpop.xlane.xlu0 %635
      %v637 = vrot.slane %v636, 4
      %v638 = vadd.f32 %v636, %v637
      %v639 = vrot.slane %v638, 2
      %v640 = vadd.f32 %v638, %v639
      %v641 = vrot.slane %v640, 1
      %v642 = vadd.f32 %v640, %v641
      %s643 = vtos %v642
      %v644 = vmul.f32 %v575, %v585
      %v645 = vmul.f32 %v576, %v586
      %v646 = vsel %vm591, %v644, 0.0
      %v647 = vsel %vm591, %v645, 0.0
      %v648 = vadd.f32 %v646, %v647
      %649 = vadd.xlane.f32.xlu0 %v648
      %v650 = vpop.xlane.xlu0 %649
      %v651 = vrot.slane %v650, 4
      %v652 = vadd.f32 %v650, %v651
      %v653 = vrot.slane %v652, 2
      %v654 = vadd.f32 %v652, %v653
      %v655 = vrot.slane %v654, 1
      %v656 = vadd.f32 %v654, %v655
      %s657 = vtos %v656
      %v658 = vsel %vm591, %v585, 0.0
      %v659 = vsel %vm591, %v586, 0.0
      %v660 = vadd.f32 %v658, %v659
      %661 = vadd.xlane.f32.xlu0 %v660
      %v662 = vpop.xlane.xlu0 %661
      %v663 = vrot.slane %v662, 4
      %v664 = vadd.f32 %v662, %v663
      %v665 = vrot.slane %v664, 2
      %v666 = vadd.f32 %v664, %v665
      %v667 = vrot.slane %v666, 1
      %v668 = vadd.f32 %v666, %v667
      %s669 = vtos %v668
      %vm670 = vcmp.eq.s32.totalorder %v497, 0
      %vm671 = vcmp.eq.s32.totalorder %v500, 0
      %vm672 = vmand %vm670, %vm671
      %v673 = vstv %s603
      %v674 = vsel %vm672, %v673, 0.0
      %v675 = vadd.f32 %v674, 0.0
      %vm676 = vcmp.eq.s32.totalorder %v500, 1
      %vm677 = vmand %vm670, %vm676
      %v678 = vstv %s617
      %v679 = vsel %vm677, %v678, 0.0
      %v680 = vadd.f32 %v675, %v679
      %vm681 = vcmp.eq.s32.totalorder %v500, 2
      %vm682 = vmand %vm670, %vm681
      %v683 = vstv %s629
      %v684 = vsel %vm682, %v683, 0.0
      %v685 = vadd.f32 %v680, %v684
      %vm686 = vcmp.eq.s32.totalorder %v500, 3
      %vm687 = vmand %vm670, %vm686
      %v688 = vstv %s643
      %v689 = vsel %vm687, %v688, 0.0
      %v690 = vadd.f32 %v685, %v689
      %vm691 = vcmp.eq.s32.totalorder %v500, 4
      %vm692 = vmand %vm670, %vm691
      %v693 = vstv %s657
      %v694 = vsel %vm692, %v693, 0.0
      %v695 = vadd.f32 %v690, %v694
      %vm696 = vcmp.eq.s32.totalorder %v500, 5
      %vm697 = vmand %vm670, %vm696
      %v698 = vstv %s669
      %v699 = vsel %vm697, %v698, 0.0
      %v700 = vadd.f32 %v695, %v699
      %701 = vst [vmem:[%s310] sm:$0xff] %v700
      %p702 = scmp.lt.s32.totalorder %s18, 1
      %s703 = scalar_select %p702, %s18, 1
      %s704 = smul.addr %s703, 8
      %s705 = scalar_lea.vmem %s7, %s704
      // Predicated region
      $region49: #{fwd.8} parent=47 // pred_check
        %p706 = pneg %p198
      $region50: #{fwd.8} parent=47 // pred_check_branch
        %708 = sbr.rel (%p706) target = $region52
      $region51: #{fwd.8} parent=47 // pred_region
        _
      $region52: #{fwd.8} parent=47 // pred_fallthru
        _
    $region48: #{fwd.8} parent=5 // pred_fallthru
      _
    %p709 = scmp.le.s32.totalorder 2, %s13
    // Predicated region
    $region53: #{fwd.8} parent=5 // pred_check
      %p710 = pneg %p709
    $region54: #{fwd.8} parent=5 // pred_check_branch
      %712 = sbr.rel (%p710) target = $region56
    $region55: #{fwd.8} parent=5 // pred_region
      %s713 = ssub.s32 %s13, 2
      // Predicated region
      $region57: #{fwd.8} parent=55 // pred_check
        %p714 = pneg %p204
      $region58: #{fwd.8} parent=55 // pred_check_branch
        %716 = sbr.rel (%p714) target = $region60
      $region59: #{fwd.8} parent=55 // pred_region
        %p717 = scmp.lt.s32.totalorder %s19, 1
        %s718 = scalar_select %p717, %s19, 1
        %s719 = smul.addr %s718, 8
        %s720 = scalar_lea.vmem %s7, %s719
      $region60: #{fwd.8} parent=55 // pred_fallthru
        _
    $region56: #{fwd.8} parent=5 // pred_fallthru
      _
  $region6: #{fwd.8} parent=0 // loop_footer
    %s17 = sadd.s32 1, %s13
  $region7: #{fwd.8} parent=0 // loop_footer_branch
    %12 = sbr.rel target = $region3
  $region8: #{fwd.8} parent=0 // loop_exit
    _

// kernel: fwd.7
$region0: #{fwd.7}
  #allocation0 [shape = 'u32[]', space=smem, size = 0x4, offset = 0x4, fixed_abs, tag = 'smem constant byte address 0x4 - core index']
  #allocation1 [shape = 'u32[144,128]{1,0:T(1,128)}', space=vmem, size = 0x12000, scoped, tag = 'internal scratch']
  #allocation2 [shape = 'bf16[32,32]{1,0:T(16,128)(2,1)}', space=vmem, size = 0x2000, scoped, tag = 'scratch operand']
  #allocation3 [shape = 'f32[32,1]{1,0:T(8,128)}', space=vmem, size = 0x4000, scoped, tag = 'scratch operand']
  #allocation4 [shape = 'f32[32,1]{1,0:T(8,128)}', space=vmem, size = 0x4000, scoped, tag = 'scratch operand']
  #allocation5 [shape = 'f32[32,1]{1,0:T(8,128)}', space=vmem, size = 0x4000, scoped, tag = 'scratch operand']
  %s0 = inlined_call_operand.vmem [shape: f32[32,32], index: 0, kind: input, shape index: {}]
  %s1 = inlined_call_operand.vmem [shape: s32[32,1], index: 1, kind: input, shape index: {}]
  %s2 = inlined_call_operand.vmem [shape: bf16[32,32], index: 2, kind: input, shape index: {}]
  %s3 = inlined_call_operand.vmem [shape: f32[1,32], index: 3, kind: input, shape index: {}]
  %s4 = inlined_call_operand.vmem [shape: f32[1,32], index: 4, kind: input, shape index: {}]
  %s5 = inlined_call_operand.vmem [shape: f32[1,32], index: 5, kind: input, shape index: {}]
  %s6 = inlined_call_operand.vmem [shape: bf16[32,64], index: 6, kind: input, shape index: {}]
  %s7 = inlined_call_operand.vmem [shape: f32[1,64], index: 7, kind: input, shape index: {}]
  %s8 = inlined_call_operand.vmem [shape: f32[1,8,128], index: 8, kind: output, shape index: {}]
  %s9 = sld [smem:[#allocation0]]
  $region50: #{fwd.7} parent=0
    _
  %s11 = ssub.s32 1, %s9
  %s12 = scalar_select 0, %s11, %s9
  // Predicated region
  $region2: #{fwd.7} parent=0 // pred_check
    _
  $region3: #{fwd.7} parent=0 // pred_check_branch
    %14 = sbr.rel (0) target = $region5
  $region4: #{fwd.7} parent=0 // pred_region
    _
  $region5: #{fwd.7} parent=0 // pred_fallthru
    _
  // Predicated region
  $region6: #{fwd.7} parent=0 // pred_check
    _
  $region7: #{fwd.7} parent=0 // pred_check_branch
    %16 = sbr.rel (0) target = $region9
  $region8: #{fwd.7} parent=0 // pred_region
    _
  $region9: #{fwd.7} parent=0 // pred_fallthru
    _
  // Predicated region
  $region10: #{fwd.7} parent=0 // pred_check
    _
  $region11: #{fwd.7} parent=0 // pred_check_branch
    %18 = sbr.rel (0) target = $region13
  $region12: #{fwd.7} parent=0 // pred_region
    _
  $region13: #{fwd.7} parent=0 // pred_fallthru
    _
  // Predicated region
  $region14: #{fwd.7} parent=0 // pred_check
    _
  $region15: #{fwd.7} parent=0 // pred_check_branch
    %20 = sbr.rel (0) target = $region17
  $region16: #{fwd.7} parent=0 // pred_region
    _
  $region17: #{fwd.7} parent=0 // pred_fallthru
    _
  // Predicated region
  $region18: #{fwd.7} parent=0 // pred_check
    _
  $region19: #{fwd.7} parent=0 // pred_check_branch
    %22 = sbr.rel (0) target = $region21
  $region20: #{fwd.7} parent=0 // pred_region
    _
  $region21: #{fwd.7} parent=0 // pred_fallthru
    _
  // Predicated region
  $region22: #{fwd.7} parent=0 // pred_check
    _
  $region23: #{fwd.7} parent=0 // pred_check_branch
    %24 = sbr.rel (0) target = $region25
  $region24: #{fwd.7} parent=0 // pred_region
    _
  $region25: #{fwd.7} parent=0 // pred_fallthru
    _
  // Predicated region
  $region26: #{fwd.7} parent=0 // pred_check
    _
  $region27: #{fwd.7} parent=0 // pred_check_branch
    %26 = sbr.rel (0) target = $region29
  $region28: #{fwd.7} parent=0 // pred_region
    _
  $region29: #{fwd.7} parent=0 // pred_fallthru
    _
  // Predicated region
  $region30: #{fwd.7} parent=0 // pred_check
    _
  $region31: #{fwd.7} parent=0 // pred_check_branch
    %28 = sbr.rel (0) target = $region33
  $region32: #{fwd.7} parent=0 // pred_region
    _
  $region33: #{fwd.7} parent=0 // pred_fallthru
    _
  %p30 = scmp.eq.s32.totalorder 0, 0
  // Predicated region
  $region34: #{fwd.7} parent=0 // pred_check
    %p31 = pneg %p30
  $region35: #{fwd.7} parent=0 // pred_check_branch
    %33 = sbr.rel (%p31) target = $region37
  $region36: #{fwd.7} parent=0 // pred_region
    %v34 = vld [vmem:[%s0] sm:$0xff]
    %v35 = vld [vmem:[%s0 + $0x8] sm:$0xff]
    %v36 = vld [vmem:[%s0 + $0x10] sm:$0xff]
    %v37 = vld [vmem:[%s0 + $0x18] sm:$0xff]
    %v38 = vpack.c.bf16 %v35, %v34
    %v39 = vpack.c.bf16 %v37, %v36
    %v40 = vld [vmem:[%s2] sm:$0xf]
    %v41 = vld [vmem:[%s2 + $0x4] sm:$0xf]
    %v42 = vld [vmem:[%s2 + $0x8] sm:$0xf]
    %v43 = vld [vmem:[%s2 + $0xc] sm:$0xf]
    %v44 = vld [vmem:[%s3] sm:$0x1]
    %v46 = vlaneseq
    %v47 = vshrl.u32 %v46, 7
    %v48 = vsub.s32 0, %v47
    %v49 = vrot.slane %v44, %v48
    %v55 = vunpack.c.l.b16 %v40
    %v56 = vunpack.c.l.b16 %v41
    %v57 = vunpack.c.l.b16 %v42
    %v58 = vunpack.c.l.b16 %v43
    %v59 = vpack.c.b16 %v56, %v55
    %v60 = vpack.c.b16 %v58, %v57
    %vm63 = vcmask 261120
    %v65 = vsel %vm63, %v38, 0
    %v68 = vsel %vm63, %v39, 0
    %70 = vmatprep.subr.bf16.mxu0 0
    %71 = vmatpush1.bf16.msra.mxu0 %v59
    %72 = vmatprep.subr.bf16.mxu0 0
    %73 = vmatpush1.bf16.msra.mxu0 %v60
    %74 = vmatprep.subr.bf16.mxu0 0
    %75 = vmatpush1.bf16.msra.mxu0 0
    %76 = vmatprep.subr.bf16.mxu0 0
    %77 = vmatpush1.bf16.msra.mxu0 0
    %78 = vmatprep.subr.bf16.mxu0 0
    %79 = vmatpush1.bf16.msra.mxu0 0
    %80 = vmatprep.subr.bf16.mxu0 0
    %81 = vmatpush1.bf16.msra.mxu0 0
    %82 = vmatprep.subr.bf16.mxu0 0
    %83 = vmatpush1.bf16.msra.mxu0 0
    %84 = vmatprep.subr.bf16.mxu0 0
    %85 = vmatpush1.bf16.msra.mxu0 0
    %86 = vmatprep.subr.bf16.mxu0 0
    %87 = vmatpush1.bf16.msra.mxu0 0
    %88 = vmatprep.subr.bf16.mxu0 0
    %89 = vmatpush1.bf16.msra.mxu0 0
    %90 = vmatprep.subr.bf16.mxu0 0
    %91 = vmatpush1.bf16.msra.mxu0 0
    %92 = vmatprep.subr.bf16.mxu0 0
    %93 = vmatpush1.bf16.msra.mxu0 0
    %94 = vmatprep.subr.bf16.mxu0 0
    %95 = vmatpush1.bf16.msra.mxu0 0
    %96 = vmatprep.subr.bf16.mxu0 0
    %97 = vmatpush1.bf16.msra.mxu0 0
    %98 = vmatprep.subr.bf16.mxu0 0
    %99 = vmatpush1.bf16.msra.mxu0 0
    %100 = vmatprep.subr.bf16.mxu0 0
    %101 = vmatpush1.bf16.msra.mxu0 0
    %102 = vmatprep.mubr.bf16.mxu0 0
    %103 = vmatmul.mubr.bf16.gmra.mrb[0].mxu0 %v65
    %v104 = vpop.f32.mrb[0].mxu0
    %v105 = vadd.f32 %v49, %v104
    %v106 = vpop.f32.mrb[0].mxu0
    %v107 = vpop.f32.mrb[0].mxu0
    %v108 = vadd.f32 %v49, %v107
    %v109 = vpop.f32.mrb[0].mxu0
    %110 = vmatprep.mubr.bf16.mxu0 0
    %111 = vmatmul.mubr.bf16.gmra.mrb[0].mxu0 %v68
    %v112 = vpop.f32.mrb[0].mxu0
    %v113 = vadd.f32 %v49, %v112
    %v114 = vpop.f32.mrb[0].mxu0
    %v115 = vpop.f32.mrb[0].mxu0
    %v116 = vadd.f32 %v49, %v115
    %v117 = vpop.f32.mrb[0].mxu0
    %118 = vdwg.mxu0
    %v119 = vmul.f32 %v105, 0.5
    %v120 = vmul.f32 %v108, 0.5
    %v121 = vmul.f32 %v113, 0.5
    %v122 = vmul.f32 %v116, 0.5
    %v123 = vmul.f32 %v105, 0.044715
    %v124 = vmul.f32 %v108, 0.044715
    %v125 = vmul.f32 %v113, 0.044715
    %v126 = vmul.f32 %v116, 0.044715
    %v127 = vmul.f32 %v123, %v105
    %v128 = vmul.f32 %v124, %v108
    %v129 = vmul.f32 %v125, %v113
    %v130 = vmul.f32 %v126, %v116
    %v131 = vmul.f32 %v127, %v105
    %v132 = vmul.f32 %v128, %v108
    %v133 = vmul.f32 %v129, %v113
    %v134 = vmul.f32 %v130, %v116
    %v135 = vadd.f32 %v105, %v131
    %v136 = vadd.f32 %v108, %v132
    %v137 = vadd.f32 %v113, %v133
    %v138 = vadd.f32 %v116, %v134
    %v139 = vmul.f32 %v135, 0.7978846
    %v140 = vmul.f32 %v136, 0.7978846
    %v141 = vmul.f32 %v137, 0.7978846
    %v142 = vmul.f32 %v138, 0.7978846
    %v143 = vtanh.pop %v139
    %v144 = vtanh.pop %v140
    %v145 = vtanh.pop %v141
    %v146 = vtanh.pop %v142
    %v147 = vadd.f32 %v143, 1.0
    %v148 = vadd.f32 %v144, 1.0
    %v149 = vadd.f32 %v145, 1.0
    %v150 = vadd.f32 %v146, 1.0
    %v151 = vmul.f32 %v119, %v147
    %v152 = vmul.f32 %v120, %v148
    %v153 = vmul.f32 %v121, %v149
    %v154 = vmul.f32 %v122, %v150
    %v155 = vld [vmem:[%s4] sm:$0x1]
    %v156 = vld [vmem:[%s5] sm:$0x1]
    %v157 = vsel %vm63, %v151, 0.0
    %158 = vadd.xlane.f32.xlu0 %v157
    %v159 = vpop.xlane.xlu0 %158
    %v160 = vsel %vm63, %v152, 0.0
    %161 = vadd.xlane.f32.xlu0 %v160
    %v162 = vpop.xlane.xlu0 %161
    %v163 = vsel %vm63, %v153, 0.0
    %164 = vadd.xlane.f32.xlu0 %v163
    %v165 = vpop.xlane.xlu0 %164
    %v166 = vsel %vm63, %v154, 0.0
    %167 = vadd.xlane.f32.xlu0 %v166
    %v168 = vpop.xlane.xlu0 %167
    %v169 = vrcp.pop 32.0
    %v170 = vmul.f32 %v159, %v169
    %v171 = vmul.f32 %v162, %v169
    %v172 = vmul.f32 %v165, %v169
    %v173 = vmul.f32 %v168, %v169
    %v174 = vsub.f32 %v151, %v170
    %v175 = vsub.f32 %v152, %v171
    %v176 = vsub.f32 %v153, %v172
    %v177 = vsub.f32 %v154, %v173
    %v178 = vmul.f32 %v174, %v174
    %v179 = vmul.f32 %v175, %v175
    %v180 = vmul.f32 %v176, %v176
    %v181 = vmul.f32 %v177, %v177
    %v182 = vsel %vm63, %v178, 0.0
    %183 = vadd.xlane.f32.xlu0 %v182
    %v184 = vpop.xlane.xlu0 %183
    %v185 = vsel %vm63, %v179, 0.0
    %186 = vadd.xlane.f32.xlu0 %v185
    %v187 = vpop.xlane.xlu0 %186
    %v188 = vsel %vm63, %v180, 0.0
    %189 = vadd.xlane.f32.xlu0 %v188
    %v190 = vpop.xlane.xlu0 %189
    %v191 = vsel %vm63, %v181, 0.0
    %192 = vadd.xlane.f32.xlu0 %v191
    %v193 = vpop.xlane.xlu0 %192
    %v194 = vmul.f32 %v184, %v169
    %v195 = vmul.f32 %v187, %v169
    %v196 = vmul.f32 %v190, %v169
    %v197 = vmul.f32 %v193, %v169
    %v198 = vadd.f32 %v194, 1e-06
    %v199 = vadd.f32 %v195, 1e-06
    %v200 = vadd.f32 %v196, 1e-06
    %v201 = vadd.f32 %v197, 1e-06
    %v202 = vrsqrt.pop %v198
    %v203 = vrsqrt.pop %v199
    %v204 = vrsqrt.pop %v200
    %v205 = vrsqrt.pop %v201
    %v206 = vmul.f32 %v174, %v202
    %v207 = vmul.f32 %v175, %v203
    %v208 = vmul.f32 %v176, %v204
    %v209 = vmul.f32 %v177, %v205
    %v211 = vlaneseq
    %v212 = vshrl.u32 %v211, 7
    %v213 = vsub.s32 0, %v212
    %v214 = vrot.slane %v155, %v213
    %v216 = vmul.f32 %v206, %v214
    %v217 = vmul.f32 %v207, %v214
    %v218 = vmul.f32 %v208, %v214
    %v219 = vmul.f32 %v209, %v214
    %v221 = vlaneseq
    %v222 = vshrl.u32 %v221, 7
    %v223 = vsub.s32 0, %v222
    %v224 = vrot.slane %v156, %v223
    %v226 = vadd.f32 %v216, %v224
    %v227 = vadd.f32 %v217, %v224
    %v228 = vadd.f32 %v218, %v224
    %v229 = vadd.f32 %v219, %v224
    %v230 = vpack.c.bf16 %v227, %v226
    %v231 = vpack.c.bf16 %v229, %v228
    %232 = vst.msk [vmem:[#allocation2] sm:$0xff] %vm63, %v230
    %233 = vst.msk [vmem:[#allocation2 + $0x8] sm:$0xff] %vm63, %v231
    %vm234 = vcmask 7168
    %235 = vst.msk [vmem:[#allocation3] sm:$0xff] %vm234, -1e+09
    %236 = vst.msk [vmem:[#allocation3 + $0x8] sm:$0xff] %vm234, -1e+09
    %237 = vst.msk [vmem:[#allocation3 + $0x10] sm:$0xff] %vm234, -1e+09
    %238 = vst.msk [vmem:[#allocation3 + $0x18] sm:$0xff] %vm234, -1e+09
    %239 = vst.msk [vmem:[#allocation4] sm:$0xff] %vm234, 0.0
    %240 = vst.msk [vmem:[#allocation4 + $0x8] sm:$0xff] %vm234, 0.0
    %241 = vst.msk [vmem:[#allocation4 + $0x10] sm:$0xff] %vm234, 0.0
    %242 = vst.msk [vmem:[#allocation4 + $0x18] sm:$0xff] %vm234, 0.0
    %243 = vst.msk [vmem:[#allocation5] sm:$0xff] %vm234, 0.0
    %244 = vst.msk [vmem:[#allocation5 + $0x8] sm:$0xff] %vm234, 0.0
    %245 = vst.msk [vmem:[#allocation5 + $0x10] sm:$0xff] %vm234, 0.0
    %246 = vst.msk [vmem:[#allocation5 + $0x18] sm:$0xff] %vm234, 0.0
  $region37: #{fwd.7} parent=0 // pred_fallthru
    _
  %v247 = vld [vmem:[#allocation2] sm:$0xff]
  %v248 = vld [vmem:[#allocation2 + $0x8] sm:$0xff]
  %v249 = vld [vmem:[%s6] sm:$0xf]
  %v250 = vld [vmem:[%s6 + $0x4] sm:$0xf]
  %v251 = vld [vmem:[%s6 + $0x8] sm:$0xf]
  %v252 = vld [vmem:[%s6 + $0xc] sm:$0xf]
  %v253 = vld [vmem:[%s7] sm:$0x1]
  %v255 = vlaneseq
  %v256 = vshrl.u32 %v255, 7
  %v257 = vsub.s32 0, %v256
  %v258 = vrot.slane %v253, %v257
  %v264 = vunpack.c.l.b16 %v249
  %v265 = vunpack.c.l.b16 %v250
  %v266 = vunpack.c.l.b16 %v251
  %v267 = vunpack.c.l.b16 %v252
  %v268 = vpack.c.b16 %v265, %v264
  %v269 = vpack.c.b16 %v267, %v266
  %vm272 = vcmask 261120
  %v274 = vsel %vm272, %v247, 0
  %v277 = vsel %vm272, %v248, 0
  %279 = vmatprep.subr.bf16.mxu0 0
  %280 = vmatpush1.bf16.msra.mxu0 %v268
  %281 = vmatprep.subr.bf16.mxu0 0
  %282 = vmatpush1.bf16.msra.mxu0 %v269
  %283 = vmatprep.subr.bf16.mxu0 0
  %284 = vmatpush1.bf16.msra.mxu0 0
  %285 = vmatprep.subr.bf16.mxu0 0
  %286 = vmatpush1.bf16.msra.mxu0 0
  %287 = vmatprep.subr.bf16.mxu0 0
  %288 = vmatpush1.bf16.msra.mxu0 0
  %289 = vmatprep.subr.bf16.mxu0 0
  %290 = vmatpush1.bf16.msra.mxu0 0
  %291 = vmatprep.subr.bf16.mxu0 0
  %292 = vmatpush1.bf16.msra.mxu0 0
  %293 = vmatprep.subr.bf16.mxu0 0
  %294 = vmatpush1.bf16.msra.mxu0 0
  %295 = vmatprep.subr.bf16.mxu0 0
  %296 = vmatpush1.bf16.msra.mxu0 0
  %297 = vmatprep.subr.bf16.mxu0 0
  %298 = vmatpush1.bf16.msra.mxu0 0
  %299 = vmatprep.subr.bf16.mxu0 0
  %300 = vmatpush1.bf16.msra.mxu0 0
  %301 = vmatprep.subr.bf16.mxu0 0
  %302 = vmatpush1.bf16.msra.mxu0 0
  %303 = vmatprep.subr.bf16.mxu0 0
  %304 = vmatpush1.bf16.msra.mxu0 0
  %305 = vmatprep.subr.bf16.mxu0 0
  %306 = vmatpush1.bf16.msra.mxu0 0
  %307 = vmatprep.subr.bf16.mxu0 0
  %308 = vmatpush1.bf16.msra.mxu0 0
  %309 = vmatprep.subr.bf16.mxu0 0
  %310 = vmatpush1.bf16.msra.mxu0 0
  %311 = vmatprep.mubr.bf16.mxu0 0
  %312 = vmatmul.mubr.bf16.gmra.mrb[0].mxu0 %v274
  %v313 = vpop.f32.mrb[0].mxu0
  %v314 = vadd.f32 %v258, %v313
  %v315 = vpop.f32.mrb[0].mxu0
  %v316 = vpop.f32.mrb[0].mxu0
  %v317 = vadd.f32 %v258, %v316
  %v318 = vpop.f32.mrb[0].mxu0
  %319 = vmatprep.mubr.bf16.mxu0 0
  %320 = vmatmul.mubr.bf16.gmra.mrb[0].mxu0 %v277
  %v321 = vpop.f32.mrb[0].mxu0
  %v322 = vadd.f32 %v258, %v321
  %v323 = vpop.f32.mrb[0].mxu0
  %v324 = vpop.f32.mrb[0].mxu0
  %v325 = vadd.f32 %v258, %v324
  %v326 = vpop.f32.mrb[0].mxu0
  %327 = vdwg.mxu0
  %v328 = vld [vmem:[%s1] sm:$0xff]
  %v329 = vld [vmem:[%s1 + $0x8] sm:$0xff]
  %v330 = vld [vmem:[%s1 + $0x10] sm:$0xff]
  %v331 = vld [vmem:[%s1 + $0x18] sm:$0xff]
  %v332 = vlaneseq
  %v333 = vand.u32 %v332, 127
  %s334 = smul.u32 0, 64
  %v335 = vstv %s334
  %v336 = vadd.s32 %v333, %v335
  %v337 = vld [vmem:[#allocation5] sm:$0xff]
  %v338 = vld [vmem:[#allocation5 + $0x8] sm:$0xff]
  %v339 = vld [vmem:[#allocation5 + $0x10] sm:$0xff]
  %v340 = vld [vmem:[#allocation5 + $0x18] sm:$0xff]
  %341 = vset.pattern.permute.xlu0 0
  %342 = vperm.xlu0 %341, %v328
  %v343 = vpop.permute.xlu0 %342
  %344 = vset.pattern.permute.xlu0 0
  %345 = vperm.xlu0 %344, %v329
  %v346 = vpop.permute.xlu0 %345
  %347 = vset.pattern.permute.xlu0 0
  %348 = vperm.xlu0 %347, %v330
  %v349 = vpop.permute.xlu0 %348
  %350 = vset.pattern.permute.xlu0 0
  %351 = vperm.xlu0 %350, %v331
  %v352 = vpop.permute.xlu0 %351
  %vm353 = vcmp.eq.s32.totalorder %v336, %v343
  %vm354 = vcmp.eq.s32.totalorder %v336, %v346
  %vm355 = vcmp.eq.s32.totalorder %v336, %v349
  %vm356 = vcmp.eq.s32.totalorder %v336, %v352
  %v357 = vsel %vm353, %v314, 0.0
  %v358 = vsel %vm354, %v317, 0.0
  %v359 = vsel %vm355, %v322, 0.0
  %v360 = vsel %vm356, %v325, 0.0
  %vm361 = vcmask 523264
  %v362 = vsel %vm361, %v357, 0.0
  %363 = vadd.xlane.f32.xlu0 %v362
  %v364 = vpop.xlane.xlu0 %363
  %v365 = vsel %vm361, %v358, 0.0
  %366 = vadd.xlane.f32.xlu0 %v365
  %v367 = vpop.xlane.xlu0 %366
  %v368 = vsel %vm361, %v359, 0.0
  %369 = vadd.xlane.f32.xlu0 %v368
  %v370 = vpop.xlane.xlu0 %369
  %v371 = vsel %vm361, %v360, 0.0
  %372 = vadd.xlane.f32.xlu0 %v371
  %v373 = vpop.xlane.xlu0 %372
  %v374 = vadd.f32 %v337, %v364
  %v375 = vadd.f32 %v338, %v367
  %v376 = vadd.f32 %v339, %v370
  %v377 = vadd.f32 %v340, %v373
  %vm378 = vcmask 7168
  %379 = vst.msk [vmem:[#allocation5] sm:$0xff] %vm378, %v374
  %380 = vst.msk [vmem:[#allocation5 + $0x8] sm:$0xff] %vm378, %v375
  %381 = vst.msk [vmem:[#allocation5 + $0x10] sm:$0xff] %vm378, %v376
  %382 = vst.msk [vmem:[#allocation5 + $0x18] sm:$0xff] %vm378, %v377
  %v383 = vsel %vm361, %v314, -inf
  %384 = vmax.xlane.f32.xlu0 %v383
  %v385 = vpop.xlane.xlu0 %384
  %v386 = vsel %vm361, %v317, -inf
  %387 = vmax.xlane.f32.xlu0 %v386
  %v388 = vpop.xlane.xlu0 %387
  %v389 = vsel %vm361, %v322, -inf
  %390 = vmax.xlane.f32.xlu0 %v389
  %v391 = vpop.xlane.xlu0 %390
  %v392 = vsel %vm361, %v325, -inf
  %393 = vmax.xlane.f32.xlu0 %v392
  %v394 = vpop.xlane.xlu0 %393
  %v395 = vld [vmem:[#allocation3] sm:$0xff]
  %v396 = vld [vmem:[#allocation3 + $0x8] sm:$0xff]
  %v397 = vld [vmem:[#allocation3 + $0x10] sm:$0xff]
  %v398 = vld [vmem:[#allocation3 + $0x18] sm:$0xff]
  %v399 = vmax.f32 %v395, %v385
  %v400 = vmax.f32 %v396, %v388
  %v401 = vmax.f32 %v397, %v391
  %v402 = vmax.f32 %v398, %v394
  %v403 = vld [vmem:[#allocation4] sm:$0xff]
  %v404 = vld [vmem:[#allocation4 + $0x8] sm:$0xff]
  %v405 = vld [vmem:[#allocation4 + $0x10] sm:$0xff]
  %v406 = vld [vmem:[#allocation4 + $0x18] sm:$0xff]
  %v407 = vsub.f32 %v395, %v399
  %v408 = vsub.f32 %v396, %v400
  %v409 = vsub.f32 %v397, %v401
  %v410 = vsub.f32 %v398, %v402
  %v411 = vmul.f32 %v407, 1.442695
  %v412 = vpow.pop %v411
  %v413 = vmul.f32 %v408, 1.442695
  %v414 = vpow.pop %v413
  %v415 = vmul.f32 %v409, 1.442695
  %v416 = vpow.pop %v415
  %v417 = vmul.f32 %v410, 1.442695
  %v418 = vpow.pop %v417
  %v419 = vmul.f32 %v403, %v412
  %v420 = vmul.f32 %v404, %v414
  %v421 = vmul.f32 %v405, %v416
  %v422 = vmul.f32 %v406, %v418
  %424 = vset.pattern.permute.xlu0 0
  %425 = vperm.xlu0 %424, %v399
  %v426 = vpop.permute.xlu0 %425
  %429 = vset.pattern.permute.xlu0 0
  %430 = vperm.xlu0 %429, %v400
  %v431 = vpop.permute.xlu0 %430
  %434 = vset.pattern.permute.xlu0 0
  %435 = vperm.xlu0 %434, %v401
  %v436 = vpop.permute.xlu0 %435
  %439 = vset.pattern.permute.xlu0 0
  %440 = vperm.xlu0 %439, %v402
  %v441 = vpop.permute.xlu0 %440
  %v443 = vsub.f32 %v314, %v426
  %v444 = vsub.f32 %v317, %v431
  %v445 = vsub.f32 %v322, %v436
  %v446 = vsub.f32 %v325, %v441
  %v447 = vmul.f32 %v443, 1.442695
  %v448 = vpow.pop %v447
  %v449 = vmul.f32 %v444, 1.442695
  %v450 = vpow.pop %v449
  %v451 = vmul.f32 %v445, 1.442695
  %v452 = vpow.pop %v451
  %v453 = vmul.f32 %v446, 1.442695
  %v454 = vpow.pop %v453
  %v455 = vsel %vm361, %v448, 0.0
  %456 = vadd.xlane.f32.xlu0 %v455
  %v457 = vpop.xlane.xlu0 %456
  %v458 = vsel %vm361, %v450, 0.0
  %459 = vadd.xlane.f32.xlu0 %v458
  %v460 = vpop.xlane.xlu0 %459
  %v461 = vsel %vm361, %v452, 0.0
  %462 = vadd.xlane.f32.xlu0 %v461
  %v463 = vpop.xlane.xlu0 %462
  %v464 = vsel %vm361, %v454, 0.0
  %465 = vadd.xlane.f32.xlu0 %v464
  %v466 = vpop.xlane.xlu0 %465
  %v467 = vadd.f32 %v419, %v457
  %v468 = vadd.f32 %v420, %v460
  %v469 = vadd.f32 %v421, %v463
  %v470 = vadd.f32 %v422, %v466
  %471 = vst.msk [vmem:[#allocation4] sm:$0xff] %vm378, %v467
  %472 = vst.msk [vmem:[#allocation4 + $0x8] sm:$0xff] %vm378, %v468
  %473 = vst.msk [vmem:[#allocation4 + $0x10] sm:$0xff] %vm378, %v469
  %474 = vst.msk [vmem:[#allocation4 + $0x18] sm:$0xff] %vm378, %v470
  %475 = vst.msk [vmem:[#allocation3] sm:$0xff] %vm378, %v399
  %476 = vst.msk [vmem:[#allocation3 + $0x8] sm:$0xff] %vm378, %v400
  %477 = vst.msk [vmem:[#allocation3 + $0x10] sm:$0xff] %vm378, %v401
  %478 = vst.msk [vmem:[#allocation3 + $0x18] sm:$0xff] %vm378, %v402
  // Predicated region
  $region38: #{fwd.7} parent=0 // pred_check
    %p479 = pneg %p30
  $region39: #{fwd.7} parent=0 // pred_check_branch
    %481 = sbr.rel (%p479) target = $region41
  $region40: #{fwd.7} parent=0 // pred_region
    %v482 = vld [vmem:[#allocation3] sm:$0xff]
    %v483 = vld [vmem:[#allocation3 + $0x8] sm:$0xff]
    %v484 = vld [vmem:[#allocation3 + $0x10] sm:$0xff]
    %v485 = vld [vmem:[#allocation3 + $0x18] sm:$0xff]
    %v486 = vld [vmem:[#allocation4] sm:$0xff]
    %v487 = vld [vmem:[#allocation4 + $0x8] sm:$0xff]
    %v488 = vld [vmem:[#allocation4 + $0x10] sm:$0xff]
    %v489 = vld [vmem:[#allocation4 + $0x18] sm:$0xff]
    %v490 = vlog2.pop %v486
    %v491 = vmul.f32 %v490, 0.6931472
    %v492 = vlog2.pop %v487
    %v493 = vmul.f32 %v492, 0.6931472
    %v494 = vlog2.pop %v488
    %v495 = vmul.f32 %v494, 0.6931472
    %v496 = vlog2.pop %v489
    %v497 = vmul.f32 %v496, 0.6931472
    %v498 = vadd.f32 %v482, %v491
    %v499 = vadd.f32 %v483, %v493
    %v500 = vadd.f32 %v484, %v495
    %v501 = vadd.f32 %v485, %v497
    %v502 = vld [vmem:[#allocation5] sm:$0xff]
    %v503 = vld [vmem:[#allocation5 + $0x8] sm:$0xff]
    %v504 = vld [vmem:[#allocation5 + $0x10] sm:$0xff]
    %v505 = vld [vmem:[#allocation5 + $0x18] sm:$0xff]
    %v506 = vsub.f32 %v498, %v502
    %v507 = vsub.f32 %v499, %v503
    %v508 = vsub.f32 %v500, %v504
    %v509 = vsub.f32 %v501, %v505
    %vm510 = vcmp.gt.s32.totalorder %v328, 4294967295
    %vm511 = vcmp.gt.s32.totalorder %v329, 4294967295
    %vm512 = vcmp.gt.s32.totalorder %v330, 4294967295
    %vm513 = vcmp.gt.s32.totalorder %v331, 4294967295
    %v514 = vsel %vm510, 1, 0
    %v515 = vsel %vm511, 1, 0
    %v516 = vsel %vm512, 1, 0
    %v517 = vsel %vm513, 1, 0
    %v518 = vcvt.s32.f32 %v514
    %v519 = vcvt.s32.f32 %v515
    %v520 = vcvt.s32.f32 %v516
    %v521 = vcvt.s32.f32 %v517
    %vm522 = vcmp.ge.f32.partialorder %v502, %v482
    %vm523 = vcmp.ge.f32.partialorder %v503, %v483
    %vm524 = vcmp.ge.f32.partialorder %v504, %v484
    %vm525 = vcmp.ge.f32.partialorder %v505, %v485
    %vm526 = vmand %vm510, %vm522
    %vm527 = vmand %vm511, %vm523
    %vm528 = vmand %vm512, %vm524
    %vm529 = vmand %vm513, %vm525
    %v530 = vsel %vm526, 1.0, 0.0
    %v531 = vsel %vm527, 1.0, 0.0
    %v532 = vsel %vm528, 1.0, 0.0
    %v533 = vsel %vm529, 1.0, 0.0
    %v534 = vmul.f32 %v506, %v518
    %v535 = vmul.f32 %v507, %v519
    %v536 = vmul.f32 %v508, %v520
    %v537 = vmul.f32 %v509, %v521
    %v538 = vsel %vm378, %v534, 0.0
    %v539 = vsel %vm378, %v535, 0.0
    %v540 = vadd.f32 %v538, %v539
    %v541 = vsel %vm378, %v536, 0.0
    %v542 = vadd.f32 %v540, %v541
    %v543 = vsel %vm378, %v537, 0.0
    %v544 = vadd.f32 %v542, %v543
    %545 = vadd.xlane.f32.xlu0 %v544
    %v546 = vpop.xlane.xlu0 %545
    %v547 = vrot.slane %v546, 4
    %v548 = vadd.f32 %v546, %v547
    %v549 = vrot.slane %v548, 2
    %v550 = vadd.f32 %v548, %v549
    %v551 = vrot.slane %v550, 1
    %v552 = vadd.f32 %v550, %v551
    %s553 = vtos %v552
    %v554 = vsel %vm378, %v530, 0.0
    %v555 = vsel %vm378, %v531, 0.0
    %v556 = vadd.f32 %v554, %v555
    %v557 = vsel %vm378, %v532, 0.0
    %v558 = vadd.f32 %v556, %v557
    %v559 = vsel %vm378, %v533, 0.0
    %v560 = vadd.f32 %v558, %v559
    %561 = vadd.xlane.f32.xlu0 %v560
    %v562 = vpop.xlane.xlu0 %561
    %v563 = vrot.slane %v562, 4
    %v564 = vadd.f32 %v562, %v563
    %v565 = vrot.slane %v564, 2
    %v566 = vadd.f32 %v564, %v565
    %v567 = vrot.slane %v566, 1
    %v568 = vadd.f32 %v566, %v567
    %s569 = vtos %v568
    %v570 = vsel %vm378, %v518, 0.0
    %v571 = vsel %vm378, %v519, 0.0
    %v572 = vadd.f32 %v570, %v571
    %v573 = vsel %vm378, %v520, 0.0
    %v574 = vadd.f32 %v572, %v573
    %v575 = vsel %vm378, %v521, 0.0
    %v576 = vadd.f32 %v574, %v575
    %577 = vadd.xlane.f32.xlu0 %v576
    %v578 = vpop.xlane.xlu0 %577
    %v579 = vrot.slane %v578, 4
    %v580 = vadd.f32 %v578, %v579
    %v581 = vrot.slane %v580, 2
    %v582 = vadd.f32 %v580, %v581
    %v583 = vrot.slane %v582, 1
    %v584 = vadd.f32 %v582, %v583
    %s585 = vtos %v584
    %v586 = vlaneseq
    %v587 = vshrl.u32 %v586, 7
    %vm588 = vcmp.eq.s32.totalorder %v587, 0
    %vm589 = vcmp.eq.s32.totalorder %v333, 0
    %vm590 = vmand %vm588, %vm589
    %v591 = vstv %s553
    %v592 = vsel %vm590, %v591, 0.0
    %vm593 = vcmp.eq.s32.totalorder %v333, 1
    %vm594 = vmand %vm588, %vm593
    %v595 = vstv %s569
    %v596 = vsel %vm594, %v595, 0.0
    %v597 = vadd.f32 %v592, %v596
    %vm598 = vcmp.eq.s32.totalorder %v333, 2
    %vm599 = vmand %vm588, %vm598
    %v600 = vstv %s585
    %v601 = vsel %vm599, %v600, 0.0
    %v602 = vadd.f32 %v597, %v601
    %603 = vst [vmem:[%s8] sm:$0xff] %v602
  $region41: #{fwd.7} parent=0 // pred_fallthru
    _
  // Predicated region
  $region42: #{fwd.7} parent=0 // pred_check
    _
  $region43: #{fwd.7} parent=0 // pred_check_branch
    %605 = sbr.rel (0) target = $region45
  $region44: #{fwd.7} parent=0 // pred_region
    _
  $region45: #{fwd.7} parent=0 // pred_fallthru
    _
  // Predicated region
  $region46: #{fwd.7} parent=0 // pred_check
    _
  $region47: #{fwd.7} parent=0 // pred_check_branch
    %607 = sbr.rel (0) target = $region49
  $region48: #{fwd.7} parent=0 // pred_region
    _
  $region49: #{fwd.7} parent=0 // pred_fallthru
    _

// kernel: fwd.9
$region0: #{fwd.9}
  #allocation0 [shape = 'u32[]', space=smem, size = 0x4, offset = 0x4, fixed_abs, tag = 'smem constant byte address 0x4 - core index']
  #allocation1 [shape = 'u32[144,128]{1,0:T(1,128)}', space=vmem, size = 0x12000, scoped, tag = 'internal scratch']
  #allocation2 [shape = 'bf16[32,32]{1,0:T(16,128)(2,1)}', space=vmem, size = 0x2000, scoped, tag = 'scratch operand']
  #allocation3 [shape = 'f32[32,1]{1,0:T(8,128)}', space=vmem, size = 0x4000, scoped, tag = 'scratch operand']
  #allocation4 [shape = 'f32[32,1]{1,0:T(8,128)}', space=vmem, size = 0x4000, scoped, tag = 'scratch operand']
  #allocation5 [shape = 'f32[32,1]{1,0:T(8,128)}', space=vmem, size = 0x4000, scoped, tag = 'scratch operand']
  %s0 = inlined_call_operand.vmem [shape: f32[32,32], index: 0, kind: input, shape index: {}]
  %s1 = inlined_call_operand.vmem [shape: s32[32,1], index: 1, kind: input, shape index: {}]
  %s2 = inlined_call_operand.vmem [shape: bf16[32,32], index: 2, kind: input, shape index: {}]
  %s3 = inlined_call_operand.vmem [shape: f32[1,32], index: 3, kind: input, shape index: {}]
  %s4 = inlined_call_operand.vmem [shape: f32[1,32], index: 4, kind: input, shape index: {}]
  %s5 = inlined_call_operand.vmem [shape: f32[1,32], index: 5, kind: input, shape index: {}]
  %s6 = inlined_call_operand.vmem [shape: bf16[32,128], index: 6, kind: input, shape index: {}]
  %s7 = inlined_call_operand.vmem [shape: f32[1,128], index: 7, kind: input, shape index: {}]
  %s8 = inlined_call_operand.vmem [shape: f32[1,8,128], index: 8, kind: output, shape index: {}]
  %s9 = sld [smem:[#allocation0]]
  $region50: #{fwd.9} parent=0
    _
  %s11 = ssub.s32 1, %s9
  %s12 = scalar_select 0, %s11, %s9
  // Predicated region
  $region2: #{fwd.9} parent=0 // pred_check
    _
  $region3: #{fwd.9} parent=0 // pred_check_branch
    %14 = sbr.rel (0) target = $region5
  $region4: #{fwd.9} parent=0 // pred_region
    _
  $region5: #{fwd.9} parent=0 // pred_fallthru
    _
  // Predicated region
  $region6: #{fwd.9} parent=0 // pred_check
    _
  $region7: #{fwd.9} parent=0 // pred_check_branch
    %16 = sbr.rel (0) target = $region9
  $region8: #{fwd.9} parent=0 // pred_region
    _
  $region9: #{fwd.9} parent=0 // pred_fallthru
    _
  // Predicated region
  $region10: #{fwd.9} parent=0 // pred_check
    _
  $region11: #{fwd.9} parent=0 // pred_check_branch
    %18 = sbr.rel (0) target = $region13
  $region12: #{fwd.9} parent=0 // pred_region
    _
  $region13: #{fwd.9} parent=0 // pred_fallthru
    _
  // Predicated region
  $region14: #{fwd.9} parent=0 // pred_check
    _
  $region15: #{fwd.9} parent=0 // pred_check_branch
    %20 = sbr.rel (0) target = $region17
  $region16: #{fwd.9} parent=0 // pred_region
    _
  $region17: #{fwd.9} parent=0 // pred_fallthru
    _
  // Predicated region
  $region18: #{fwd.9} parent=0 // pred_check
    _
  $region19: #{fwd.9} parent=0 // pred_check_branch
    %22 = sbr.rel (0) target = $region21
  $region20: #{fwd.9} parent=0 // pred_region
    _
  $region21: #{fwd.9} parent=0 // pred_fallthru
    _
  // Predicated region
  $region22: #{fwd.9} parent=0 // pred_check
    _
  $region23: #{fwd.9} parent=0 // pred_check_branch
    %24 = sbr.rel (0) target = $region25
  $region24: #{fwd.9} parent=0 // pred_region
    _
  $region25: #{fwd.9} parent=0 // pred_fallthru
    _
  // Predicated region
  $region26: #{fwd.9} parent=0 // pred_check
    _
  $region27: #{fwd.9} parent=0 // pred_check_branch
    %26 = sbr.rel (0) target = $region29
  $region28: #{fwd.9} parent=0 // pred_region
    _
  $region29: #{fwd.9} parent=0 // pred_fallthru
    _
  // Predicated region
  $region30: #{fwd.9} parent=0 // pred_check
    _
  $region31: #{fwd.9} parent=0 // pred_check_branch
    %28 = sbr.rel (0) target = $region33
  $region32: #{fwd.9} parent=0 // pred_region
    _
  $region33: #{fwd.9} parent=0 // pred_fallthru
    _
  %p30 = scmp.eq.s32.totalorder 0, 0
  // Predicated region
  $region34: #{fwd.9} parent=0 // pred_check
    %p31 = pneg %p30
  $region35: #{fwd.9} parent=0 // pred_check_branch
    %33 = sbr.rel (%p31) target = $region37
  $region36: #{fwd.9} parent=0 // pred_region
    %v34 = vld [vmem:[%s0] sm:$0xff]
    %v35 = vld [vmem:[%s0 + $0x8] sm:$0xff]
    %v36 = vld [vmem:[%s0 + $0x10] sm:$0xff]
    %v37 = vld [vmem:[%s0 + $0x18] sm:$0xff]
    %v38 = vpack.c.bf16 %v35, %v34
    %v39 = vpack.c.bf16 %v37, %v36
    %v40 = vld [vmem:[%s2] sm:$0xf]
    %v41 = vld [vmem:[%s2 + $0x4] sm:$0xf]
    %v42 = vld [vmem:[%s2 + $0x8] sm:$0xf]
    %v43 = vld [vmem:[%s2 + $0xc] sm:$0xf]
    %v44 = vld [vmem:[%s3] sm:$0x1]
    %v46 = vlaneseq
    %v47 = vshrl.u32 %v46, 7
    %v48 = vsub.s32 0, %v47
    %v49 = vrot.slane %v44, %v48
    %v55 = vunpack.c.l.b16 %v40
    %v56 = vunpack.c.l.b16 %v41
    %v57 = vunpack.c.l.b16 %v42
    %v58 = vunpack.c.l.b16 %v43
    %v59 = vpack.c.b16 %v56, %v55
    %v60 = vpack.c.b16 %v58, %v57
    %vm63 = vcmask 261120
    %v65 = vsel %vm63, %v38, 0
    %v68 = vsel %vm63, %v39, 0
    %70 = vmatprep.subr.bf16.mxu0 0
    %71 = vmatpush1.bf16.msra.mxu0 %v59
    %72 = vmatprep.subr.bf16.mxu0 0
    %73 = vmatpush1.bf16.msra.mxu0 %v60
    %74 = vmatprep.subr.bf16.mxu0 0
    %75 = vmatpush1.bf16.msra.mxu0 0
    %76 = vmatprep.subr.bf16.mxu0 0
    %77 = vmatpush1.bf16.msra.mxu0 0
    %78 = vmatprep.subr.bf16.mxu0 0
    %79 = vmatpush1.bf16.msra.mxu0 0
    %80 = vmatprep.subr.bf16.mxu0 0
    %81 = vmatpush1.bf16.msra.mxu0 0
    %82 = vmatprep.subr.bf16.mxu0 0
    %83 = vmatpush1.bf16.msra.mxu0 0
    %84 = vmatprep.subr.bf16.mxu0 0
    %85 = vmatpush1.bf16.msra.mxu0 0
    %86 = vmatprep.subr.bf16.mxu0 0
    %87 = vmatpush1.bf16.msra.mxu0 0
    %88 = vmatprep.subr.bf16.mxu0 0
    %89 = vmatpush1.bf16.msra.mxu0 0
    %90 = vmatprep.subr.bf16.mxu0 0
    %91 = vmatpush1.bf16.msra.mxu0 0
    %92 = vmatprep.subr.bf16.mxu0 0
    %93 = vmatpush1.bf16.msra.mxu0 0
    %94 = vmatprep.subr.bf16.mxu0 0
    %95 = vmatpush1.bf16.msra.mxu0 0
    %96 = vmatprep.subr.bf16.mxu0 0
    %97 = vmatpush1.bf16.msra.mxu0 0
    %98 = vmatprep.subr.bf16.mxu0 0
    %99 = vmatpush1.bf16.msra.mxu0 0
    %100 = vmatprep.subr.bf16.mxu0 0
    %101 = vmatpush1.bf16.msra.mxu0 0
    %102 = vmatprep.mubr.bf16.mxu0 0
    %103 = vmatmul.mubr.bf16.gmra.mrb[0].mxu0 %v65
    %v104 = vpop.f32.mrb[0].mxu0
    %v105 = vadd.f32 %v49, %v104
    %v106 = vpop.f32.mrb[0].mxu0
    %v107 = vpop.f32.mrb[0].mxu0
    %v108 = vadd.f32 %v49, %v107
    %v109 = vpop.f32.mrb[0].mxu0
    %110 = vmatprep.mubr.bf16.mxu0 0
    %111 = vmatmul.mubr.bf16.gmra.mrb[0].mxu0 %v68
    %v112 = vpop.f32.mrb[0].mxu0
    %v113 = vadd.f32 %v49, %v112
    %v114 = vpop.f32.mrb[0].mxu0
    %v115 = vpop.f32.mrb[0].mxu0
    %v116 = vadd.f32 %v49, %v115
    %v117 = vpop.f32.mrb[0].mxu0
    %118 = vdwg.mxu0
    %v119 = vmul.f32 %v105, 0.5
    %v120 = vmul.f32 %v108, 0.5
    %v121 = vmul.f32 %v113, 0.5
    %v122 = vmul.f32 %v116, 0.5
    %v123 = vmul.f32 %v105, 0.044715
    %v124 = vmul.f32 %v108, 0.044715
    %v125 = vmul.f32 %v113, 0.044715
    %v126 = vmul.f32 %v116, 0.044715
    %v127 = vmul.f32 %v123, %v105
    %v128 = vmul.f32 %v124, %v108
    %v129 = vmul.f32 %v125, %v113
    %v130 = vmul.f32 %v126, %v116
    %v131 = vmul.f32 %v127, %v105
    %v132 = vmul.f32 %v128, %v108
    %v133 = vmul.f32 %v129, %v113
    %v134 = vmul.f32 %v130, %v116
    %v135 = vadd.f32 %v105, %v131
    %v136 = vadd.f32 %v108, %v132
    %v137 = vadd.f32 %v113, %v133
    %v138 = vadd.f32 %v116, %v134
    %v139 = vmul.f32 %v135, 0.7978846
    %v140 = vmul.f32 %v136, 0.7978846
    %v141 = vmul.f32 %v137, 0.7978846
    %v142 = vmul.f32 %v138, 0.7978846
    %v143 = vtanh.pop %v139
    %v144 = vtanh.pop %v140
    %v145 = vtanh.pop %v141
    %v146 = vtanh.pop %v142
    %v147 = vadd.f32 %v143, 1.0
    %v148 = vadd.f32 %v144, 1.0
    %v149 = vadd.f32 %v145, 1.0
    %v150 = vadd.f32 %v146, 1.0
    %v151 = vmul.f32 %v119, %v147
    %v152 = vmul.f32 %v120, %v148
    %v153 = vmul.f32 %v121, %v149
    %v154 = vmul.f32 %v122, %v150
    %v155 = vld [vmem:[%s4] sm:$0x1]
    %v156 = vld [vmem:[%s5] sm:$0x1]
    %v157 = vsel %vm63, %v151, 0.0
    %158 = vadd.xlane.f32.xlu0 %v157
    %v159 = vpop.xlane.xlu0 %158
    %v160 = vsel %vm63, %v152, 0.0
    %161 = vadd.xlane.f32.xlu0 %v160
    %v162 = vpop.xlane.xlu0 %161
    %v163 = vsel %vm63, %v153, 0.0
    %164 = vadd.xlane.f32.xlu0 %v163
    %v165 = vpop.xlane.xlu0 %164
    %v166 = vsel %vm63, %v154, 0.0
    %167 = vadd.xlane.f32.xlu0 %v166
    %v168 = vpop.xlane.xlu0 %167
    %v169 = vrcp.pop 32.0
    %v170 = vmul.f32 %v159, %v169
    %v171 = vmul.f32 %v162, %v169
    %v172 = vmul.f32 %v165, %v169
    %v173 = vmul.f32 %v168, %v169
    %v174 = vsub.f32 %v151, %v170
    %v175 = vsub.f32 %v152, %v171
    %v176 = vsub.f32 %v153, %v172
    %v177 = vsub.f32 %v154, %v173
    %v178 = vmul.f32 %v174, %v174
    %v179 = vmul.f32 %v175, %v175
    %v180 = vmul.f32 %v176, %v176
    %v181 = vmul.f32 %v177, %v177
    %v182 = vsel %vm63, %v178, 0.0
    %183 = vadd.xlane.f32.xlu0 %v182
    %v184 = vpop.xlane.xlu0 %183
    %v185 = vsel %vm63, %v179, 0.0
    %186 = vadd.xlane.f32.xlu0 %v185
    %v187 = vpop.xlane.xlu0 %186
    %v188 = vsel %vm63, %v180, 0.0
    %189 = vadd.xlane.f32.xlu0 %v188
    %v190 = vpop.xlane.xlu0 %189
    %v191 = vsel %vm63, %v181, 0.0
    %192 = vadd.xlane.f32.xlu0 %v191
    %v193 = vpop.xlane.xlu0 %192
    %v194 = vmul.f32 %v184, %v169
    %v195 = vmul.f32 %v187, %v169
    %v196 = vmul.f32 %v190, %v169
    %v197 = vmul.f32 %v193, %v169
    %v198 = vadd.f32 %v194, 1e-06
    %v199 = vadd.f32 %v195, 1e-06
    %v200 = vadd.f32 %v196, 1e-06
    %v201 = vadd.f32 %v197, 1e-06
    %v202 = vrsqrt.pop %v198
    %v203 = vrsqrt.pop %v199
    %v204 = vrsqrt.pop %v200
    %v205 = vrsqrt.pop %v201
    %v206 = vmul.f32 %v174, %v202
    %v207 = vmul.f32 %v175, %v203
    %v208 = vmul.f32 %v176, %v204
    %v209 = vmul.f32 %v177, %v205
    %v211 = vlaneseq
    %v212 = vshrl.u32 %v211, 7
    %v213 = vsub.s32 0, %v212
    %v214 = vrot.slane %v155, %v213
    %v216 = vmul.f32 %v206, %v214
    %v217 = vmul.f32 %v207, %v214
    %v218 = vmul.f32 %v208, %v214
    %v219 = vmul.f32 %v209, %v214
    %v221 = vlaneseq
    %v222 = vshrl.u32 %v221, 7
    %v223 = vsub.s32 0, %v222
    %v224 = vrot.slane %v156, %v223
    %v226 = vadd.f32 %v216, %v224
    %v227 = vadd.f32 %v217, %v224
    %v228 = vadd.f32 %v218, %v224
    %v229 = vadd.f32 %v219, %v224
    %v230 = vpack.c.bf16 %v227, %v226
    %v231 = vpack.c.bf16 %v229, %v228
    %232 = vst.msk [vmem:[#allocation2] sm:$0xff] %vm63, %v230
    %233 = vst.msk [vmem:[#allocation2 + $0x8] sm:$0xff] %vm63, %v231
    %vm234 = vcmask 7168
    %235 = vst.msk [vmem:[#allocation3] sm:$0xff] %vm234, -1e+09
    %236 = vst.msk [vmem:[#allocation3 + $0x8] sm:$0xff] %vm234, -1e+09
    %237 = vst.msk [vmem:[#allocation3 + $0x10] sm:$0xff] %vm234, -1e+09
    %238 = vst.msk [vmem:[#allocation3 + $0x18] sm:$0xff] %vm234, -1e+09
    %239 = vst.msk [vmem:[#allocation4] sm:$0xff] %vm234, 0.0
    %240 = vst.msk [vmem:[#allocation4 + $0x8] sm:$0xff] %vm234, 0.0
    %241 = vst.msk [vmem:[#allocation4 + $0x10] sm:$0xff] %vm234, 0.0
    %242 = vst.msk [vmem:[#allocation4 + $0x18] sm:$0xff] %vm234, 0.0
    %243 = vst.msk [vmem:[#allocation5] sm:$0xff] %vm234, 0.0
    %244 = vst.msk [vmem:[#allocation5 + $0x8] sm:$0xff] %vm234, 0.0
    %245 = vst.msk [vmem:[#allocation5 + $0x10] sm:$0xff] %vm234, 0.0
    %246 = vst.msk [vmem:[#allocation5 + $0x18] sm:$0xff] %vm234, 0.0
  $region37: #{fwd.9} parent=0 // pred_fallthru
    _
  %v247 = vld [vmem:[#allocation2] sm:$0xff]
  %v248 = vld [vmem:[#allocation2 + $0x8] sm:$0xff]
  %v249 = vld [vmem:[%s6] sm:$0xf]
  %v250 = vld [vmem:[%s6 + $0x4] sm:$0xf]
  %v251 = vld [vmem:[%s6 + $0x8] sm:$0xf]
  %v252 = vld [vmem:[%s6 + $0xc] sm:$0xf]
  %v253 = vld [vmem:[%s7] sm:$0x1]
  %v255 = vlaneseq
  %v256 = vshrl.u32 %v255, 7
  %v257 = vsub.s32 0, %v256
  %v258 = vrot.slane %v253, %v257
  %v264 = vunpack.c.l.b16 %v249
  %v265 = vunpack.c.l.b16 %v250
  %v266 = vunpack.c.l.b16 %v251
  %v267 = vunpack.c.l.b16 %v252
  %v268 = vpack.c.b16 %v265, %v264
  %v269 = vpack.c.b16 %v267, %v266
  %vm272 = vcmask 261120
  %v274 = vsel %vm272, %v247, 0
  %v277 = vsel %vm272, %v248, 0
  %279 = vmatprep.subr.bf16.mxu0 0
  %280 = vmatpush1.bf16.msra.mxu0 %v268
  %281 = vmatprep.subr.bf16.mxu0 0
  %282 = vmatpush1.bf16.msra.mxu0 %v269
  %283 = vmatprep.subr.bf16.mxu0 0
  %284 = vmatpush1.bf16.msra.mxu0 0
  %285 = vmatprep.subr.bf16.mxu0 0
  %286 = vmatpush1.bf16.msra.mxu0 0
  %287 = vmatprep.subr.bf16.mxu0 0
  %288 = vmatpush1.bf16.msra.mxu0 0
  %289 = vmatprep.subr.bf16.mxu0 0
  %290 = vmatpush1.bf16.msra.mxu0 0
  %291 = vmatprep.subr.bf16.mxu0 0
  %292 = vmatpush1.bf16.msra.mxu0 0
  %293 = vmatprep.subr.bf16.mxu0 0
  %294 = vmatpush1.bf16.msra.mxu0 0
  %295 = vmatprep.subr.bf16.mxu0 0
  %296 = vmatpush1.bf16.msra.mxu0 0
  %297 = vmatprep.subr.bf16.mxu0 0
  %298 = vmatpush1.bf16.msra.mxu0 0
  %299 = vmatprep.subr.bf16.mxu0 0
  %300 = vmatpush1.bf16.msra.mxu0 0
  %301 = vmatprep.subr.bf16.mxu0 0
  %302 = vmatpush1.bf16.msra.mxu0 0
  %303 = vmatprep.subr.bf16.mxu0 0
  %304 = vmatpush1.bf16.msra.mxu0 0
  %305 = vmatprep.subr.bf16.mxu0 0
  %306 = vmatpush1.bf16.msra.mxu0 0
  %307 = vmatprep.subr.bf16.mxu0 0
  %308 = vmatpush1.bf16.msra.mxu0 0
  %309 = vmatprep.subr.bf16.mxu0 0
  %310 = vmatpush1.bf16.msra.mxu0 0
  %311 = vmatprep.mubr.bf16.mxu0 0
  %312 = vmatmul.mubr.bf16.gmra.mrb[0].mxu0 %v274
  %v313 = vpop.f32.mrb[0].mxu0
  %v314 = vadd.f32 %v258, %v313
  %v315 = vpop.f32.mrb[0].mxu0
  %v316 = vpop.f32.mrb[0].mxu0
  %v317 = vadd.f32 %v258, %v316
  %v318 = vpop.f32.mrb[0].mxu0
  %319 = vmatprep.mubr.bf16.mxu0 0
  %320 = vmatmul.mubr.bf16.gmra.mrb[0].mxu0 %v277
  %v321 = vpop.f32.mrb[0].mxu0
  %v322 = vadd.f32 %v258, %v321
  %v323 = vpop.f32.mrb[0].mxu0
  %v324 = vpop.f32.mrb[0].mxu0
  %v325 = vadd.f32 %v258, %v324
  %v326 = vpop.f32.mrb[0].mxu0
  %327 = vdwg.mxu0
  %v328 = vld [vmem:[%s1] sm:$0xff]
  %v329 = vld [vmem:[%s1 + $0x8] sm:$0xff]
  %v330 = vld [vmem:[%s1 + $0x10] sm:$0xff]
  %v331 = vld [vmem:[%s1 + $0x18] sm:$0xff]
  %v332 = vlaneseq
  %v333 = vand.u32 %v332, 127
  %s334 = smul.u32 0, 128
  %v335 = vstv %s334
  %v336 = vadd.s32 %v333, %v335
  %v337 = vld [vmem:[#allocation5] sm:$0xff]
  %v338 = vld [vmem:[#allocation5 + $0x8] sm:$0xff]
  %v339 = vld [vmem:[#allocation5 + $0x10] sm:$0xff]
  %v340 = vld [vmem:[#allocation5 + $0x18] sm:$0xff]
  %341 = vset.pattern.permute.xlu0 0
  %342 = vperm.xlu0 %341, %v328
  %v343 = vpop.permute.xlu0 %342
  %344 = vset.pattern.permute.xlu0 0
  %345 = vperm.xlu0 %344, %v329
  %v346 = vpop.permute.xlu0 %345
  %347 = vset.pattern.permute.xlu0 0
  %348 = vperm.xlu0 %347, %v330
  %v349 = vpop.permute.xlu0 %348
  %350 = vset.pattern.permute.xlu0 0
  %351 = vperm.xlu0 %350, %v331
  %v352 = vpop.permute.xlu0 %351
  %vm353 = vcmp.eq.s32.totalorder %v336, %v343
  %vm354 = vcmp.eq.s32.totalorder %v336, %v346
  %vm355 = vcmp.eq.s32.totalorder %v336, %v349
  %vm356 = vcmp.eq.s32.totalorder %v336, %v352
  %v357 = vsel %vm353, %v314, 0.0
  %v358 = vsel %vm354, %v317, 0.0
  %v359 = vsel %vm355, %v322, 0.0
  %v360 = vsel %vm356, %v325, 0.0
  %361 = vadd.xlane.f32.xlu0 %v357
  %v362 = vpop.xlane.xlu0 %361
  %363 = vadd.xlane.f32.xlu0 %v358
  %v364 = vpop.xlane.xlu0 %363
  %365 = vadd.xlane.f32.xlu0 %v359
  %v366 = vpop.xlane.xlu0 %365
  %367 = vadd.xlane.f32.xlu0 %v360
  %v368 = vpop.xlane.xlu0 %367
  %v369 = vadd.f32 %v337, %v362
  %v370 = vadd.f32 %v338, %v364
  %v371 = vadd.f32 %v339, %v366
  %v372 = vadd.f32 %v340, %v368
  %vm373 = vcmask 7168
  %374 = vst.msk [vmem:[#allocation5] sm:$0xff] %vm373, %v369
  %375 = vst.msk [vmem:[#allocation5 + $0x8] sm:$0xff] %vm373, %v370
  %376 = vst.msk [vmem:[#allocation5 + $0x10] sm:$0xff] %vm373, %v371
  %377 = vst.msk [vmem:[#allocation5 + $0x18] sm:$0xff] %vm373, %v372
  %378 = vmax.xlane.f32.xlu0 %v314
  %v379 = vpop.xlane.xlu0 %378
  %380 = vmax.xlane.f32.xlu0 %v317
  %v381 = vpop.xlane.xlu0 %380
  %382 = vmax.xlane.f32.xlu0 %v322
  %v383 = vpop.xlane.xlu0 %382
  %384 = vmax.xlane.f32.xlu0 %v325
  %v385 = vpop.xlane.xlu0 %384
  %v386 = vld [vmem:[#allocation3] sm:$0xff]
  %v387 = vld [vmem:[#allocation3 + $0x8] sm:$0xff]
  %v388 = vld [vmem:[#allocation3 + $0x10] sm:$0xff]
  %v389 = vld [vmem:[#allocation3 + $0x18] sm:$0xff]
  %v390 = vmax.f32 %v386, %v379
  %v391 = vmax.f32 %v387, %v381
  %v392 = vmax.f32 %v388, %v383
  %v393 = vmax.f32 %v389, %v385
  %v394 = vld [vmem:[#allocation4] sm:$0xff]
  %v395 = vld [vmem:[#allocation4 + $0x8] sm:$0xff]
  %v396 = vld [vmem:[#allocation4 + $0x10] sm:$0xff]
  %v397 = vld [vmem:[#allocation4 + $0x18] sm:$0xff]
  %v398 = vsub.f32 %v386, %v390
  %v399 = vsub.f32 %v387, %v391
  %v400 = vsub.f32 %v388, %v392
  %v401 = vsub.f32 %v389, %v393
  %v402 = vmul.f32 %v398, 1.442695
  %v403 = vpow.pop %v402
  %v404 = vmul.f32 %v399, 1.442695
  %v405 = vpow.pop %v404
  %v406 = vmul.f32 %v400, 1.442695
  %v407 = vpow.pop %v406
  %v408 = vmul.f32 %v401, 1.442695
  %v409 = vpow.pop %v408
  %v410 = vmul.f32 %v394, %v403
  %v411 = vmul.f32 %v395, %v405
  %v412 = vmul.f32 %v396, %v407
  %v413 = vmul.f32 %v397, %v409
  %415 = vset.pattern.permute.xlu0 0
  %416 = vperm.xlu0 %415, %v390
  %v417 = vpop.permute.xlu0 %416
  %420 = vset.pattern.permute.xlu0 0
  %421 = vperm.xlu0 %420, %v391
  %v422 = vpop.permute.xlu0 %421
  %425 = vset.pattern.permute.xlu0 0
  %426 = vperm.xlu0 %425, %v392
  %v427 = vpop.permute.xlu0 %426
  %430 = vset.pattern.permute.xlu0 0
  %431 = vperm.xlu0 %430, %v393
  %v432 = vpop.permute.xlu0 %431
  %v434 = vsub.f32 %v314, %v417
  %v435 = vsub.f32 %v317, %v422
  %v436 = vsub.f32 %v322, %v427
  %v437 = vsub.f32 %v325, %v432
  %v438 = vmul.f32 %v434, 1.442695
  %v439 = vpow.pop %v438
  %v440 = vmul.f32 %v435, 1.442695
  %v441 = vpow.pop %v440
  %v442 = vmul.f32 %v436, 1.442695
  %v443 = vpow.pop %v442
  %v444 = vmul.f32 %v437, 1.442695
  %v445 = vpow.pop %v444
  %446 = vadd.xlane.f32.xlu0 %v439
  %v447 = vpop.xlane.xlu0 %446
  %448 = vadd.xlane.f32.xlu0 %v441
  %v449 = vpop.xlane.xlu0 %448
  %450 = vadd.xlane.f32.xlu0 %v443
  %v451 = vpop.xlane.xlu0 %450
  %452 = vadd.xlane.f32.xlu0 %v445
  %v453 = vpop.xlane.xlu0 %452
  %v454 = vadd.f32 %v410, %v447
  %v455 = vadd.f32 %v411, %v449
  %v456 = vadd.f32 %v412, %v451
  %v457 = vadd.f32 %v413, %v453
  %458 = vst.msk [vmem:[#allocation4] sm:$0xff] %vm373, %v454
  %459 = vst.msk [vmem:[#allocation4 + $0x8] sm:$0xff] %vm373, %v455
  %460 = vst.msk [vmem:[#allocation4 + $0x10] sm:$0xff] %vm373, %v456
  %461 = vst.msk [vmem:[#allocation4 + $0x18] sm:$0xff] %vm373, %v457
  %462 = vst.msk [vmem:[#allocation3] sm:$0xff] %vm373, %v390
  %463 = vst.msk [vmem:[#allocation3 + $0x8] sm:$0xff] %vm373, %v391
  %464 = vst.msk [vmem:[#allocation3 + $0x10] sm:$0xff] %vm373, %v392
  %465 = vst.msk [vmem:[#allocation3 + $0x18] sm:$0xff] %vm373, %v393
  // Predicated region
  $region38: #{fwd.9} parent=0 // pred_check
    %p466 = pneg %p30
  $region39: #{fwd.9} parent=0 // pred_check_branch
    %468 = sbr.rel (%p466) target = $region41
  $region40: #{fwd.9} parent=0 // pred_region
    %v469 = vld [vmem:[#allocation3] sm:$0xff]
    %v470 = vld [vmem:[#allocation3 + $0x8] sm:$0xff]
    %v471 = vld [vmem:[#allocation3 + $0x10] sm:$0xff]
    %v472 = vld [vmem:[#allocation3 + $0x18] sm:$0xff]
    %v473 = vld [vmem:[#allocation4] sm:$0xff]
    %v474 = vld [vmem:[#allocation4 + $0x8] sm:$0xff]
    %v475 = vld [vmem:[#allocation4 + $0x10] sm:$0xff]
    %v476 = vld [vmem:[#allocation4 + $0x18] sm:$0xff]
    %v477 = vlog2.pop %v473
    %v478 = vmul.f32 %v477, 0.6931472
    %v479 = vlog2.pop %v474
    %v480 = vmul.f32 %v479, 0.6931472
    %v481 = vlog2.pop %v475
    %v482 = vmul.f32 %v481, 0.6931472
    %v483 = vlog2.pop %v476
    %v484 = vmul.f32 %v483, 0.6931472
    %v485 = vadd.f32 %v469, %v478
    %v486 = vadd.f32 %v470, %v480
    %v487 = vadd.f32 %v471, %v482
    %v488 = vadd.f32 %v472, %v484
    %v489 = vld [vmem:[#allocation5] sm:$0xff]
    %v490 = vld [vmem:[#allocation5 + $0x8] sm:$0xff]
    %v491 = vld [vmem:[#allocation5 + $0x10] sm:$0xff]
    %v492 = vld [vmem:[#allocation5 + $0x18] sm:$0xff]
    %v493 = vsub.f32 %v485, %v489
    %v494 = vsub.f32 %v486, %v490
    %v495 = vsub.f32 %v487, %v491
    %v496 = vsub.f32 %v488, %v492
    %vm497 = vcmp.gt.s32.totalorder %v328, 4294967295
    %vm498 = vcmp.gt.s32.totalorder %v329, 4294967295
    %vm499 = vcmp.gt.s32.totalorder %v330, 4294967295
    %vm500 = vcmp.gt.s32.totalorder %v331, 4294967295
    %v501 = vsel %vm497, 1, 0
    %v502 = vsel %vm498, 1, 0
    %v503 = vsel %vm499, 1, 0
    %v504 = vsel %vm500, 1, 0
    %v505 = vcvt.s32.f32 %v501
    %v506 = vcvt.s32.f32 %v502
    %v507 = vcvt.s32.f32 %v503
    %v508 = vcvt.s32.f32 %v504
    %vm509 = vcmp.ge.f32.partialorder %v489, %v469
    %vm510 = vcmp.ge.f32.partialorder %v490, %v470
    %vm511 = vcmp.ge.f32.partialorder %v491, %v471
    %vm512 = vcmp.ge.f32.partialorder %v492, %v472
    %vm513 = vmand %vm497, %vm509
    %vm514 = vmand %vm498, %vm510
    %vm515 = vmand %vm499, %vm511
    %vm516 = vmand %vm500, %vm512
    %v517 = vsel %vm513, 1.0, 0.0
    %v518 = vsel %vm514, 1.0, 0.0
    %v519 = vsel %vm515, 1.0, 0.0
    %v520 = vsel %vm516, 1.0, 0.0
    %v521 = vmul.f32 %v493, %v505
    %v522 = vmul.f32 %v494, %v506
    %v523 = vmul.f32 %v495, %v507
    %v524 = vmul.f32 %v496, %v508
    %v525 = vsel %vm373, %v521, 0.0
    %v526 = vsel %vm373, %v522, 0.0
    %v527 = vadd.f32 %v525, %v526
    %v528 = vsel %vm373, %v523, 0.0
    %v529 = vadd.f32 %v527, %v528
    %v530 = vsel %vm373, %v524, 0.0
    %v531 = vadd.f32 %v529, %v530
    %532 = vadd.xlane.f32.xlu0 %v531
    %v533 = vpop.xlane.xlu0 %532
    %v534 = vrot.slane %v533, 4
    %v535 = vadd.f32 %v533, %v534
    %v536 = vrot.slane %v535, 2
    %v537 = vadd.f32 %v535, %v536
    %v538 = vrot.slane %v537, 1
    %v539 = vadd.f32 %v537, %v538
    %s540 = vtos %v539
    %v541 = vsel %vm373, %v517, 0.0
    %v542 = vsel %vm373, %v518, 0.0
    %v543 = vadd.f32 %v541, %v542
    %v544 = vsel %vm373, %v519, 0.0
    %v545 = vadd.f32 %v543, %v544
    %v546 = vsel %vm373, %v520, 0.0
    %v547 = vadd.f32 %v545, %v546
    %548 = vadd.xlane.f32.xlu0 %v547
    %v549 = vpop.xlane.xlu0 %548
    %v550 = vrot.slane %v549, 4
    %v551 = vadd.f32 %v549, %v550
    %v552 = vrot.slane %v551, 2
    %v553 = vadd.f32 %v551, %v552
    %v554 = vrot.slane %v553, 1
    %v555 = vadd.f32 %v553, %v554
    %s556 = vtos %v555
    %v557 = vsel %vm373, %v505, 0.0
    %v558 = vsel %vm373, %v506, 0.0
    %v559 = vadd.f32 %v557, %v558
    %v560 = vsel %vm373, %v507, 0.0
    %v561 = vadd.f32 %v559, %v560
    %v562 = vsel %vm373, %v508, 0.0
    %v563 = vadd.f32 %v561, %v562
    %564 = vadd.xlane.f32.xlu0 %v563
    %v565 = vpop.xlane.xlu0 %564
    %v566 = vrot.slane %v565, 4
    %v567 = vadd.f32 %v565, %v566
    %v568 = vrot.slane %v567, 2
    %v569 = vadd.f32 %v567, %v568
    %v570 = vrot.slane %v569, 1
    %v571 = vadd.f32 %v569, %v570
    %s572 = vtos %v571
    %v573 = vlaneseq
    %v574 = vshrl.u32 %v573, 7
    %vm575 = vcmp.eq.s32.totalorder %v574, 0
    %vm576 = vcmp.eq.s32.totalorder %v333, 0
    %vm577 = vmand %vm575, %vm576
    %v578 = vstv %s540
    %v579 = vsel %vm577, %v578, 0.0
    %vm580 = vcmp.eq.s32.totalorder %v333, 1
    %vm581 = vmand %vm575, %vm580
    %v582 = vstv %s556
    %v583 = vsel %vm581, %v582, 0.0
    %v584 = vadd.f32 %v579, %v583
    %vm585 = vcmp.eq.s32.totalorder %v333, 2
    %vm586 = vmand %vm575, %vm585
    %v587 = vstv %s572
    %v588 = vsel %vm586, %v587, 0.0
    %v589 = vadd.f32 %v584, %v588
    %590 = vst [vmem:[%s8] sm:$0xff] %v589
  $region41: #{fwd.9} parent=0 // pred_fallthru
    _
  // Predicated region
  $region42: #{fwd.9} parent=0 // pred_check
    _
  $region43: #{fwd.9} parent=0 // pred_check_branch
    %592 = sbr.rel (0) target = $region45
  $region44: #{fwd.9} parent=0 // pred_region
    _
  $region45: #{fwd.9} parent=0 // pred_fallthru
    _
  // Predicated region
  $region46: #{fwd.9} parent=0 // pred_check
    _
  $region47: #{fwd.9} parent=0 // pred_check_branch
    %594 = sbr.rel (0) target = $region49
  $region48: #{fwd.9} parent=0 // pred_region
    _
  $region49: #{fwd.9} parent=0 // pred_fallthru
    _

// kernel: fwd.5
$region0: #{fwd.5}
  #allocation0 [shape = 'u32[]', space=smem, size = 0x4, offset = 0x4, fixed_abs, tag = 'smem constant byte address 0x4 - core index']
  #allocation1 [shape = 'u32[144,128]{1,0:T(1,128)}', space=vmem, size = 0x12000, scoped, tag = 'internal scratch']
  #allocation2 [shape = 'bf16[16,96]{1,0:T(16,128)(2,1)}', space=vmem, size = 0x1000, scoped, tag = 'scratch operand']
  #allocation3 [shape = 'bf16[16,32]{1,0:T(16,128)(2,1)}', space=vmem, size = 0x1000, scoped, tag = 'scratch operand']
  %s0 = inlined_call_operand.vmem [shape: f32[2,16,32], index: 0, kind: input, shape index: {}, may-alias: {0,1}]
  %s1 = inlined_call_operand.vmem [shape: f32[2,16,32], index: 1, kind: input, shape index: {}, may-alias: {0,1}]
  %s2 = inlined_call_operand.vmem [shape: f32[2,1,16], index: 2, kind: input, shape index: {}]
  %s3 = inlined_call_operand.vmem [shape: bf16[32,96], index: 3, kind: input, shape index: {}]
  %s4 = inlined_call_operand.vmem [shape: f32[1,96], index: 4, kind: input, shape index: {}]
  %s5 = inlined_call_operand.vmem [shape: bf16[32,32], index: 5, kind: input, shape index: {}]
  %s6 = inlined_call_operand.vmem [shape: f32[1,32], index: 6, kind: input, shape index: {}]
  %s7 = inlined_call_operand.vmem [shape: f32[1,32], index: 7, kind: input, shape index: {}]
  %s8 = inlined_call_operand.vmem [shape: f32[1,32], index: 8, kind: input, shape index: {}]
  %s9 = inlined_call_operand.vmem [shape: bf16[32,64], index: 9, kind: input, shape index: {}]
  %s10 = inlined_call_operand.vmem [shape: f32[1,64], index: 10, kind: input, shape index: {}]
  %s11 = inlined_call_operand.vmem [shape: bf16[64,32], index: 11, kind: input, shape index: {}]
  %s12 = inlined_call_operand.vmem [shape: f32[1,32], index: 12, kind: input, shape index: {}]
  %s13 = inlined_call_operand.vmem [shape: f32[1,32], index: 13, kind: input, shape index: {}]
  %s14 = inlined_call_operand.vmem [shape: f32[1,32], index: 14, kind: input, shape index: {}]
  %s15 = inlined_call_operand.vmem [shape: f32[2,16,32], index: 15, kind: output, shape index: {}]
  %s16 = sld [smem:[#allocation0]]
  $region97: #{fwd.5} parent=0
    _
  %s18 = ssub.s32 1, %s16
  %s19 = scalar_select 0, %s18, %s16
  loop: start=0, step=1, limit=4
  $region2: #{fwd.5} parent=0 // loop_pre_header
    _
  $region3: #{fwd.5} parent=0 // loop_header
    %s21 = sphi 0, %s25
    %p22 = scmp.ge.s32.totalorder %s21, 4
    %s28 = sphi 0, %s40
    %s29 = sphi 0, %s36
    %s30 = sphi 0, %s28
    %s31 = sphi 0, %s29
    %s32 = sphi 0, %s30
    %s33 = sphi 0, %s31
    %s43 = sphi 0, %s45
    %s46 = sphi 0, %s43
    %s47 = sphi 0, %s46
    %s63 = sphi 0, %s47
    %s71 = sphi 0, %s73
    %s74 = sphi 0, %s71
    %s75 = sphi 0, %s74
    %s91 = sphi 0, %s75
    %s97 = sphi 0, %s99
    %s100 = sphi 0, %s97
    %s101 = sphi 0, %s100
    %s117 = sphi 0, %s101
    %s121 = sphi 0, %s121
    %s123 = sphi 0, %s121
    %s124 = sphi 0, %s123
    %s138 = sphi 0, %s124
    %s142 = sphi 0, %s142
    %s144 = sphi 0, %s142
    %s145 = sphi 0, %s144
    %s159 = sphi 0, %s145
    %s163 = sphi 0, %s163
    %s165 = sphi 0, %s163
    %s166 = sphi 0, %s165
    %s180 = sphi 0, %s166
    %s184 = sphi 0, %s184
    %s186 = sphi 0, %s184
    %s187 = sphi 0, %s186
    %s201 = sphi 0, %s187
    %s205 = sphi 0, %s205
    %s207 = sphi 0, %s205
    %s208 = sphi 0, %s207
    %s222 = sphi 0, %s208
    %s226 = sphi 0, %s226
    %s228 = sphi 0, %s226
    %s229 = sphi 0, %s228
    %s243 = sphi 0, %s229
    %s247 = sphi 0, %s247
    %s249 = sphi 0, %s247
    %s250 = sphi 0, %s249
    %s264 = sphi 0, %s250
    %s268 = sphi 0, %s268
    %s270 = sphi 0, %s268
    %s271 = sphi 0, %s270
    %s285 = sphi 0, %s271
    %s289 = sphi 0, %s289
    %s291 = sphi 0, %s289
    %s292 = sphi 0, %s291
    %s306 = sphi 0, %s292
    %s310 = sphi 0, %s310
    %s312 = sphi 0, %s310
    %s313 = sphi 0, %s312
    %s327 = sphi 0, %s313
    %s331 = sphi 0, %s331
    %s333 = sphi 0, %s331
    %s334 = sphi 0, %s333
    %s348 = sphi 0, %s334
    %s352 = sphi 0, %s352
    %s354 = sphi 0, %s352
    %s355 = sphi 0, %s354
    %s369 = sphi 0, %s355
    %s377 = sphi 0, %s379
    %s380 = sphi 0, %s377
    %s381 = sphi 0, %s380
    %s397 = sphi 0, %s381
  $region4: #{fwd.5} parent=0 // loop_header_branch
    %24 = sbr.rel (%p22) target = $region8
  $region5: #{fwd.5} parent=0 // loop_body
    %s26 = ssub.s32 %s21, 1
    %s27 = ssub.s32 %s21, 2
    %s34 = sadd.s32 1, %s29
    %p35 = scmp.ge.s32.totalorder %s34, 1
    %s36 = scalar_select %p35, 0, %s34
    %s37 = sadd.s32 1, %s28
    %s38 = scalar_select %p35, %s37, %s28
    %p39 = scmp.ge.s32.totalorder %s38, 2
    %s40 = scalar_select %p39, 0, %s38
    %s41 = ssub.s32 %s28, %s40
    %p42 = scmp.eq.s32.totalorder %s41, 0
    %s44 = sadd.s32 %s43, 1
    %s45 = scalar_select %p42, %s43, %s44
    %p48 = pneg %p42
    %p49 = scmp.eq.s32.totalorder %s21, 1
    %p50 = por %p48, %p49
    %p51 = scmp.ne.s32.totalorder %s43, %s46
    %p52 = scmp.eq.s32.totalorder %s21, 0
    %p53 = por %p51, %p52
    %p54 = scmp.ne.s32.totalorder %s43, %s46
    %p55 = scmp.eq.s32.totalorder %s26, 1
    %p56 = por %p54, %p55
    %p57 = scmp.ne.s32.totalorder %s46, %s47
    %p58 = scmp.eq.s32.totalorder %s26, 0
    %p59 = por %p57, %p58
    %p60 = scmp.ne.s32.totalorder %s46, %s47
    %p61 = scmp.eq.s32.totalorder %s27, 1
    %p62 = por %p60, %p61
    %p64 = scmp.ne.s32.totalorder %s47, %s63
    %p65 = scmp.eq.s32.totalorder %s27, 0
    %p66 = por %p64, %p65
    %s67 = ssub.s32 %s28, %s40
    %s68 = ssub.s32 %s29, %s36
    %s69 = sor.u32 %s67, %s68
    %p70 = scmp.eq.s32.totalorder %s69, 0
    %s72 = sadd.s32 %s71, 1
    %s73 = scalar_select %p70, %s71, %s72
    %p76 = pneg %p70
    %p77 = scmp.eq.s32.totalorder %s21, 1
    %p78 = por %p76, %p77
    %p79 = scmp.ne.s32.totalorder %s71, %s74
    %p80 = scmp.eq.s32.totalorder %s21, 0
    %p81 = por %p79, %p80
    %p82 = scmp.ne.s32.totalorder %s71, %s74
    %p83 = scmp.eq.s32.totalorder %s26, 1
    %p84 = por %p82, %p83
    %p85 = scmp.ne.s32.totalorder %s74, %s75
    %p86 = scmp.eq.s32.totalorder %s26, 0
    %p87 = por %p85, %p86
    %p88 = scmp.ne.s32.totalorder %s74, %s75
    %p89 = scmp.eq.s32.totalorder %s27, 1
    %p90 = por %p88, %p89
    %p92 = scmp.ne.s32.totalorder %s75, %s91
    %p93 = scmp.eq.s32.totalorder %s27, 0
    %p94 = por %p92, %p93
    %s95 = ssub.s32 %s28, %s40
    %p96 = scmp.eq.s32.totalorder %s95, 0
    %s98 = sadd.s32 %s97, 1
    %s99 = scalar_select %p96, %s97, %s98
    %p102 = pneg %p96
    %p103 = scmp.eq.s32.totalorder %s21, 1
    %p104 = por %p102, %p103
    %p105 = scmp.ne.s32.totalorder %s97, %s100
    %p106 = scmp.eq.s32.totalorder %s21, 0
    %p107 = por %p105, %p106
    %p108 = scmp.ne.s32.totalorder %s97, %s100
    %p109 = scmp.eq.s32.totalorder %s26, 1
    %p110 = por %p108, %p109
    %p111 = scmp.ne.s32.totalorder %s100, %s101
    %p112 = scmp.eq.s32.totalorder %s26, 0
    %p113 = por %p111, %p112
    %p114 = scmp.ne.s32.totalorder %s100, %s101
    %p115 = scmp.eq.s32.totalorder %s27, 1
    %p116 = por %p114, %p115
    %p118 = scmp.ne.s32.totalorder %s101, %s117
    %p119 = scmp.eq.s32.totalorder %s27, 0
    %p120 = por %p118, %p119
    %s122 = sadd.s32 %s121, 1
    %p125 = scmp.eq.s32.totalorder %s21, 1
    %p126 = scmp.ne.s32.totalorder %s121, %s123
    %p127 = scmp.eq.s32.totalorder %s21, 0
    %p128 = por %p126, %p127
    %p129 = scmp.ne.s32.totalorder %s121, %s123
    %p130 = scmp.eq.s32.totalorder %s26, 1
    %p131 = por %p129, %p130
    %p132 = scmp.ne.s32.totalorder %s123, %s124
    %p133 = scmp.eq.s32.totalorder %s26, 0
    %p134 = por %p132, %p133
    %p135 = scmp.ne.s32.totalorder %s123, %s124
    %p136 = scmp.eq.s32.totalorder %s27, 1
    %p137 = por %p135, %p136
    %p139 = scmp.ne.s32.totalorder %s124, %s138
    %p140 = scmp.eq.s32.totalorder %s27, 0
    %p141 = por %p139, %p140
    %s143 = sadd.s32 %s142, 1
    %p146 = scmp.eq.s32.totalorder %s21, 1
    %p147 = scmp.ne.s32.totalorder %s142, %s144
    %p148 = scmp.eq.s32.totalorder %s21, 0
    %p149 = por %p147, %p148
    %p150 = scmp.ne.s32.totalorder %s142, %s144
    %p151 = scmp.eq.s32.totalorder %s26, 1
    %p152 = por %p150, %p151
    %p153 = scmp.ne.s32.totalorder %s144, %s145
    %p154 = scmp.eq.s32.totalorder %s26, 0
    %p155 = por %p153, %p154
    %p156 = scmp.ne.s32.totalorder %s144, %s145
    %p157 = scmp.eq.s32.totalorder %s27, 1
    %p158 = por %p156, %p157
    %p160 = scmp.ne.s32.totalorder %s145, %s159
    %p161 = scmp.eq.s32.totalorder %s27, 0
    %p162 = por %p160, %p161
    %s164 = sadd.s32 %s163, 1
    %p167 = scmp.eq.s32.totalorder %s21, 1
    %p168 = scmp.ne.s32.totalorder %s163, %s165
    %p169 = scmp.eq.s32.totalorder %s21, 0
    %p170 = por %p168, %p169
    %p171 = scmp.ne.s32.totalorder %s163, %s165
    %p172 = scmp.eq.s32.totalorder %s26, 1
    %p173 = por %p171, %p172
    %p174 = scmp.ne.s32.totalorder %s165, %s166
    %p175 = scmp.eq.s32.totalorder %s26, 0
    %p176 = por %p174, %p175
    %p177 = scmp.ne.s32.totalorder %s165, %s166
    %p178 = scmp.eq.s32.totalorder %s27, 1
    %p179 = por %p177, %p178
    %p181 = scmp.ne.s32.totalorder %s166, %s180
    %p182 = scmp.eq.s32.totalorder %s27, 0
    %p183 = por %p181, %p182
    %s185 = sadd.s32 %s184, 1
    %p188 = scmp.eq.s32.totalorder %s21, 1
    %p189 = scmp.ne.s32.totalorder %s184, %s186
    %p190 = scmp.eq.s32.totalorder %s21, 0
    %p191 = por %p189, %p190
    %p192 = scmp.ne.s32.totalorder %s184, %s186
    %p193 = scmp.eq.s32.totalorder %s26, 1
    %p194 = por %p192, %p193
    %p195 = scmp.ne.s32.totalorder %s186, %s187
    %p196 = scmp.eq.s32.totalorder %s26, 0
    %p197 = por %p195, %p196
    %p198 = scmp.ne.s32.totalorder %s186, %s187
    %p199 = scmp.eq.s32.totalorder %s27, 1
    %p200 = por %p198, %p199
    %p202 = scmp.ne.s32.totalorder %s187, %s201
    %p203 = scmp.eq.s32.totalorder %s27, 0
    %p204 = por %p202, %p203
    %s206 = sadd.s32 %s205, 1
    %p209 = scmp.eq.s32.totalorder %s21, 1
    %p210 = scmp.ne.s32.totalorder %s205, %s207
    %p211 = scmp.eq.s32.totalorder %s21, 0
    %p212 = por %p210, %p211
    %p213 = scmp.ne.s32.totalorder %s205, %s207
    %p214 = scmp.eq.s32.totalorder %s26, 1
    %p215 = por %p213, %p214
    %p216 = scmp.ne.s32.totalorder %s207, %s208
    %p217 = scmp.eq.s32.totalorder %s26, 0
    %p218 = por %p216, %p217
    %p219 = scmp.ne.s32.totalorder %s207, %s208
    %p220 = scmp.eq.s32.totalorder %s27, 1
    %p221 = por %p219, %p220
    %p223 = scmp.ne.s32.totalorder %s208, %s222
    %p224 = scmp.eq.s32.totalorder %s27, 0
    %p225 = por %p223, %p224
    %s227 = sadd.s32 %s226, 1
    %p230 = scmp.eq.s32.totalorder %s21, 1
    %p231 = scmp.ne.s32.totalorder %s226, %s228
    %p232 = scmp.eq.s32.totalorder %s21, 0
    %p233 = por %p231, %p232
    %p234 = scmp.ne.s32.totalorder %s226, %s228
    %p235 = scmp.eq.s32.totalorder %s26, 1
    %p236 = por %p234, %p235
    %p237 = scmp.ne.s32.totalorder %s228, %s229
    %p238 = scmp.eq.s32.totalorder %s26, 0
    %p239 = por %p237, %p238
    %p240 = scmp.ne.s32.totalorder %s228, %s229
    %p241 = scmp.eq.s32.totalorder %s27, 1
    %p242 = por %p240, %p241
    %p244 = scmp.ne.s32.totalorder %s229, %s243
    %p245 = scmp.eq.s32.totalorder %s27, 0
    %p246 = por %p244, %p245
    %s248 = sadd.s32 %s247, 1
    %p251 = scmp.eq.s32.totalorder %s21, 1
    %p252 = scmp.ne.s32.totalorder %s247, %s249
    %p253 = scmp.eq.s32.totalorder %s21, 0
    %p254 = por %p252, %p253
    %p255 = scmp.ne.s32.totalorder %s247, %s249
    %p256 = scmp.eq.s32.totalorder %s26, 1
    %p257 = por %p255, %p256
    %p258 = scmp.ne.s32.totalorder %s249, %s250
    %p259 = scmp.eq.s32.totalorder %s26, 0
    %p260 = por %p258, %p259
    %p261 = scmp.ne.s32.totalorder %s249, %s250
    %p262 = scmp.eq.s32.totalorder %s27, 1
    %p263 = por %p261, %p262
    %p265 = scmp.ne.s32.totalorder %s250, %s264
    %p266 = scmp.eq.s32.totalorder %s27, 0
    %p267 = por %p265, %p266
    %s269 = sadd.s32 %s268, 1
    %p272 = scmp.eq.s32.totalorder %s21, 1
    %p273 = scmp.ne.s32.totalorder %s268, %s270
    %p274 = scmp.eq.s32.totalorder %s21, 0
    %p275 = por %p273, %p274
    %p276 = scmp.ne.s32.totalorder %s268, %s270
    %p277 = scmp.eq.s32.totalorder %s26, 1
    %p278 = por %p276, %p277
    %p279 = scmp.ne.s32.totalorder %s270, %s271
    %p280 = scmp.eq.s32.totalorder %s26, 0
    %p281 = por %p279, %p280
    %p282 = scmp.ne.s32.totalorder %s270, %s271
    %p283 = scmp.eq.s32.totalorder %s27, 1
    %p284 = por %p282, %p283
    %p286 = scmp.ne.s32.totalorder %s271, %s285
    %p287 = scmp.eq.s32.totalorder %s27, 0
    %p288 = por %p286, %p287
    %s290 = sadd.s32 %s289, 1
    %p293 = scmp.eq.s32.totalorder %s21, 1
    %p294 = scmp.ne.s32.totalorder %s289, %s291
    %p295 = scmp.eq.s32.totalorder %s21, 0
    %p296 = por %p294, %p295
    %p297 = scmp.ne.s32.totalorder %s289, %s291
    %p298 = scmp.eq.s32.totalorder %s26, 1
    %p299 = por %p297, %p298
    %p300 = scmp.ne.s32.totalorder %s291, %s292
    %p301 = scmp.eq.s32.totalorder %s26, 0
    %p302 = por %p300, %p301
    %p303 = scmp.ne.s32.totalorder %s291, %s292
    %p304 = scmp.eq.s32.totalorder %s27, 1
    %p305 = por %p303, %p304
    %p307 = scmp.ne.s32.totalorder %s292, %s306
    %p308 = scmp.eq.s32.totalorder %s27, 0
    %p309 = por %p307, %p308
    %s311 = sadd.s32 %s310, 1
    %p314 = scmp.eq.s32.totalorder %s21, 1
    %p315 = scmp.ne.s32.totalorder %s310, %s312
    %p316 = scmp.eq.s32.totalorder %s21, 0
    %p317 = por %p315, %p316
    %p318 = scmp.ne.s32.totalorder %s310, %s312
    %p319 = scmp.eq.s32.totalorder %s26, 1
    %p320 = por %p318, %p319
    %p321 = scmp.ne.s32.totalorder %s312, %s313
    %p322 = scmp.eq.s32.totalorder %s26, 0
    %p323 = por %p321, %p322
    %p324 = scmp.ne.s32.totalorder %s312, %s313
    %p325 = scmp.eq.s32.totalorder %s27, 1
    %p326 = por %p324, %p325
    %p328 = scmp.ne.s32.totalorder %s313, %s327
    %p329 = scmp.eq.s32.totalorder %s27, 0
    %p330 = por %p328, %p329
    %s332 = sadd.s32 %s331, 1
    %p335 = scmp.eq.s32.totalorder %s21, 1
    %p336 = scmp.ne.s32.totalorder %s331, %s333
    %p337 = scmp.eq.s32.totalorder %s21, 0
    %p338 = por %p336, %p337
    %p339 = scmp.ne.s32.totalorder %s331, %s333
    %p340 = scmp.eq.s32.totalorder %s26, 1
    %p341 = por %p339, %p340
    %p342 = scmp.ne.s32.totalorder %s333, %s334
    %p343 = scmp.eq.s32.totalorder %s26, 0
    %p344 = por %p342, %p343
    %p345 = scmp.ne.s32.totalorder %s333, %s334
    %p346 = scmp.eq.s32.totalorder %s27, 1
    %p347 = por %p345, %p346
    %p349 = scmp.ne.s32.totalorder %s334, %s348
    %p350 = scmp.eq.s32.totalorder %s27, 0
    %p351 = por %p349, %p350
    %s353 = sadd.s32 %s352, 1
    %p356 = scmp.eq.s32.totalorder %s21, 1
    %p357 = scmp.ne.s32.totalorder %s352, %s354
    %p358 = scmp.eq.s32.totalorder %s21, 0
    %p359 = por %p357, %p358
    %p360 = scmp.ne.s32.totalorder %s352, %s354
    %p361 = scmp.eq.s32.totalorder %s26, 1
    %p362 = por %p360, %p361
    %p363 = scmp.ne.s32.totalorder %s354, %s355
    %p364 = scmp.eq.s32.totalorder %s26, 0
    %p365 = por %p363, %p364
    %p366 = scmp.ne.s32.totalorder %s354, %s355
    %p367 = scmp.eq.s32.totalorder %s27, 1
    %p368 = por %p366, %p367
    %p370 = scmp.ne.s32.totalorder %s355, %s369
    %p371 = scmp.eq.s32.totalorder %s27, 0
    %p372 = por %p370, %p371
    %s373 = ssub.s32 %s28, %s40
    %s374 = ssub.s32 %s29, %s36
    %s375 = sor.u32 %s373, %s374
    %p376 = scmp.eq.s32.totalorder %s375, 0
    %s378 = sadd.s32 %s377, 1
    %s379 = scalar_select %p376, %s377, %s378
    %p382 = pneg %p376
    %p383 = scmp.eq.s32.totalorder %s21, 1
    %p384 = por %p382, %p383
    %p385 = scmp.ne.s32.totalorder %s377, %s380
    %p386 = scmp.eq.s32.totalorder %s21, 0
    %p387 = por %p385, %p386
    %p388 = scmp.ne.s32.totalorder %s377, %s380
    %p389 = scmp.eq.s32.totalorder %s26, 1
    %p390 = por %p388, %p389
    %p391 = scmp.ne.s32.totalorder %s380, %s381
    %p392 = scmp.eq.s32.totalorder %s26, 0
    %p393 = por %p391, %p392
    %p394 = scmp.ne.s32.totalorder %s380, %s381
    %p395 = scmp.eq.s32.totalorder %s27, 1
    %p396 = por %p394, %p395
    %p398 = scmp.ne.s32.totalorder %s381, %s397
    %p399 = scmp.eq.s32.totalorder %s27, 0
    %p400 = por %p398, %p399
    %p401 = scmp.le.s32.totalorder 1, %s21
    %p402 = scmp.lt.s32.totalorder %s21, 3
    %p403 = pnand %p401, %p402
    %p404 = pneg %p403
    // Predicated region
    $region9: #{fwd.5} parent=5 // pred_check
      _
    $region10: #{fwd.5} parent=5 // pred_check_branch
      %406 = sbr.rel (%p403) target = $region12
    $region11: #{fwd.5} parent=5 // pred_region
      %s407 = ssub.s32 %s21, 1
      // Predicated region
      $region13: #{fwd.5} parent=11 // pred_check
        %p408 = pneg %p134
      $region14: #{fwd.5} parent=11 // pred_check_branch
        %410 = sbr.rel (%p408) target = $region16
      $region15: #{fwd.5} parent=11 // pred_region
        _
      $region16: #{fwd.5} parent=11 // pred_fallthru
        _
      // Predicated region
      $region17: #{fwd.5} parent=11 // pred_check
        %p411 = pneg %p155
      $region18: #{fwd.5} parent=11 // pred_check_branch
        %413 = sbr.rel (%p411) target = $region20
      $region19: #{fwd.5} parent=11 // pred_region
        _
      $region20: #{fwd.5} parent=11 // pred_fallthru
        _
      // Predicated region
      $region21: #{fwd.5} parent=11 // pred_check
        %p414 = pneg %p176
      $region22: #{fwd.5} parent=11 // pred_check_branch
        %416 = sbr.rel (%p414) target = $region24
      $region23: #{fwd.5} parent=11 // pred_region
        _
      $region24: #{fwd.5} parent=11 // pred_fallthru
        _
      // Predicated region
      $region25: #{fwd.5} parent=11 // pred_check
        %p417 = pneg %p197
      $region26: #{fwd.5} parent=11 // pred_check_branch
        %419 = sbr.rel (%p417) target = $region28
      $region27: #{fwd.5} parent=11 // pred_region
        _
      $region28: #{fwd.5} parent=11 // pred_fallthru
        _
      // Predicated region
      $region29: #{fwd.5} parent=11 // pred_check
        %p420 = pneg %p218
      $region30: #{fwd.5} parent=11 // pred_check_branch
        %422 = sbr.rel (%p420) target = $region32
      $region31: #{fwd.5} parent=11 // pred_region
        _
      $region32: #{fwd.5} parent=11 // pred_fallthru
        _
      // Predicated region
      $region33: #{fwd.5} parent=11 // pred_check
        %p423 = pneg %p239
      $region34: #{fwd.5} parent=11 // pred_check_branch
        %425 = sbr.rel (%p423) target = $region36
      $region35: #{fwd.5} parent=11 // pred_region
        _
      $region36: #{fwd.5} parent=11 // pred_fallthru
        _
      // Predicated region
      $region37: #{fwd.5} parent=11 // pred_check
        %p426 = pneg %p260
      $region38: #{fwd.5} parent=11 // pred_check_branch
        %428 = sbr.rel (%p426) target = $region40
      $region39: #{fwd.5} parent=11 // pred_region
        _
      $region40: #{fwd.5} parent=11 // pred_fallthru
        _
      // Predicated region
      $region41: #{fwd.5} parent=11 // pred_check
        %p429 = pneg %p281
      $region42: #{fwd.5} parent=11 // pred_check_branch
        %431 = sbr.rel (%p429) target = $region44
      $region43: #{fwd.5} parent=11 // pred_region
        _
      $region44: #{fwd.5} parent=11 // pred_fallthru
        _
      // Predicated region
      $region45: #{fwd.5} parent=11 // pred_check
        %p432 = pneg %p302
      $region46: #{fwd.5} parent=11 // pred_check_branch
        %434 = sbr.rel (%p432) target = $region48
      $region47: #{fwd.5} parent=11 // pred_region
        _
      $region48: #{fwd.5} parent=11 // pred_fallthru
        _
      // Predicated region
      $region49: #{fwd.5} parent=11 // pred_check
        %p435 = pneg %p323
      $region50: #{fwd.5} parent=11 // pred_check_branch
        %437 = sbr.rel (%p435) target = $region52
      $region51: #{fwd.5} parent=11 // pred_region
        _
      $region52: #{fwd.5} parent=11 // pred_fallthru
        _
      // Predicated region
      $region53: #{fwd.5} parent=11 // pred_check
        %p438 = pneg %p344
      $region54: #{fwd.5} parent=11 // pred_check_branch
        %440 = sbr.rel (%p438) target = $region56
      $region55: #{fwd.5} parent=11 // pred_region
        _
      $region56: #{fwd.5} parent=11 // pred_fallthru
        _
      // Predicated region
      $region57: #{fwd.5} parent=11 // pred_check
        %p441 = pneg %p365
      $region58: #{fwd.5} parent=11 // pred_check_branch
        %443 = sbr.rel (%p441) target = $region60
      $region59: #{fwd.5} parent=11 // pred_region
        _
      $region60: #{fwd.5} parent=11 // pred_fallthru
        _
    $region12: #{fwd.5} parent=5 // pred_fallthru
      _
    %p444 = scmp.lt.s32.totalorder %s21, 2
    // Predicated region
    $region61: #{fwd.5} parent=5 // pred_check
      %p445 = pneg %p444
    $region62: #{fwd.5} parent=5 // pred_check_branch
      %447 = sbr.rel (%p445) target = $region64
    $region63: #{fwd.5} parent=5 // pred_region
      // Predicated region
      $region65: #{fwd.5} parent=63 // pred_check
        %p448 = pneg %p53
      $region66: #{fwd.5} parent=63 // pred_check_branch
        %450 = sbr.rel (%p448) target = $region68
      $region67: #{fwd.5} parent=63 // pred_region
        %p451 = scmp.lt.s32.totalorder %s28, 1
        %s452 = scalar_select %p451, %s28, 1
        %s453 = smul.addr %s452, 2
        %s454 = smul.addr %s453, 8
        %s455 = scalar_lea.vmem %s0, %s454
      $region68: #{fwd.5} parent=63 // pred_fallthru
        _
      // Predicated region
      $region69: #{fwd.5} parent=63 // pred_check
        %p456 = pneg %p81
      $region70: #{fwd.5} parent=63 // pred_check_branch
        %458 = sbr.rel (%p456) target = $region72
      $region71: #{fwd.5} parent=63 // pred_region
        %s459 = smul.u32 2, %s29
        %p460 = scmp.lt.s32.totalorder %s28, 1
        %s461 = scalar_select %p460, %s28, 1
        %p462 = scmp.lt.s32.totalorder %s459, 1
        %s463 = scalar_select %p462, %s459, 1
        %s464 = smul.addr %s461, 2
        %s465 = sadd.s32 %s463, %s464
        %s466 = smul.addr %s465, 8
        %s467 = scalar_lea.vmem %s1, %s466
        %s468 = smul.u32 2, %s29
      $region72: #{fwd.5} parent=63 // pred_fallthru
        _
      // Predicated region
      $region73: #{fwd.5} parent=63 // pred_check
        %p469 = pneg %p107
      $region74: #{fwd.5} parent=63 // pred_check_branch
        %471 = sbr.rel (%p469) target = $region76
      $region75: #{fwd.5} parent=63 // pred_region
        %p472 = scmp.lt.s32.totalorder %s28, 1
        %s473 = scalar_select %p472, %s28, 1
        %s474 = scalar_lea.vmem %s2, %s473
      $region76: #{fwd.5} parent=63 // pred_fallthru
        _
    $region64: #{fwd.5} parent=5 // pred_fallthru
      _
    %p475 = scmp.le.s32.totalorder 1, %s21
    %p476 = scmp.lt.s32.totalorder %s21, 3
    %p477 = pnand %p475, %p476
    %p478 = pneg %p477
    // Predicated region
    $region77: #{fwd.5} parent=5 // pred_check
      _
    $region78: #{fwd.5} parent=5 // pred_check_branch
      %480 = sbr.rel (%p477) target = $region80
    $region79: #{fwd.5} parent=5 // pred_region
      %s481 = ssub.s32 %s21, 1
      %p482 = scmp.lt.s32.totalorder %s30, 1
      %s483 = scalar_select %p482, %s30, 1
      %s484 = smul.addr %s483, 2
      %s485 = smul.addr %s484, 8
      %s486 = scalar_lea.vmem %s0, %s485
      %p487 = pneg %p59
      %p488 = pneg %p56
      %s489 = smul.u32 2, %s31
      %p490 = scmp.lt.s32.totalorder %s30, 1
      %s491 = scalar_select %p490, %s30, 1
      %p492 = scmp.lt.s32.totalorder %s489, 1
      %s493 = scalar_select %p492, %s489, 1
      %s494 = smul.addr %s491, 2
      %s495 = sadd.s32 %s493, %s494
      %s496 = smul.addr %s495, 8
      %s497 = scalar_lea.vmem %s1, %s496
      %p498 = pneg %p87
      %p499 = pneg %p84
      %p500 = scmp.lt.s32.totalorder %s30, 1
      %s501 = scalar_select %p500, %s30, 1
      %s502 = scalar_lea.vmem %s2, %s501
      %p503 = pneg %p113
      %p504 = pneg %p110
      %p505 = pneg %p134
      %p506 = pneg %p131
      %p507 = pneg %p155
      %p508 = pneg %p152
      %p509 = pneg %p176
      %p510 = pneg %p173
      %p511 = pneg %p197
      %p512 = pneg %p194
      %p513 = pneg %p218
      %p514 = pneg %p215
      %p515 = pneg %p239
      %p516 = pneg %p236
      %p517 = pneg %p260
      %p518 = pneg %p257
      %p519 = pneg %p281
      %p520 = pneg %p278
      %p521 = pneg %p302
      %p522 = pneg %p299
      %p523 = pneg %p323
      %p524 = pneg %p320
      %p525 = pneg %p344
      %p526 = pneg %p341
      %p527 = pneg %p365
      %p528 = pneg %p362
      %p529 = pneg %p393
      %p530 = pneg %p390
      %s531 = smul.u32 2, %s31
      %p532 = scmp.lt.s32.totalorder %s30, 1
      %s533 = scalar_select %p532, %s30, 1
      %p534 = scmp.lt.s32.totalorder %s531, 1
      %s535 = scalar_select %p534, %s531, 1
      %s536 = smul.addr %s533, 2
      %s537 = sadd.s32 %s535, %s536
      %s538 = smul.addr %s537, 8
      %s539 = scalar_lea.vmem %s15, %s538
      %p540 = scmp.lt.s32.totalorder %s30, 1
      %s541 = scalar_select %p540, %s30, 1
      %s542 = smul.addr %s541, 2
      %s543 = smul.addr %s542, 8
      %s544 = scalar_lea.vmem %s0, %s543
      %s545 = smul.u32 2, %s31
      %p546 = scmp.lt.s32.totalorder %s30, 1
      %s547 = scalar_select %p546, %s30, 1
      %p548 = scmp.lt.s32.totalorder %s545, 1
      %s549 = scalar_select %p548, %s545, 1
      %s550 = smul.addr %s547, 2
      %s551 = sadd.s32 %s549, %s550
      %s552 = smul.addr %s551, 8
      %s553 = scalar_lea.vmem %s1, %s552
      %s554 = smul.u32 2, %s31
      %p555 = scmp.lt.s32.totalorder %s30, 1
      %s556 = scalar_select %p555, %s30, 1
      %s557 = scalar_lea.vmem %s2, %s556
      %s558 = smul.u32 2, %s31
      %p559 = scmp.lt.s32.totalorder %s30, 1
      %s560 = scalar_select %p559, %s30, 1
      %p561 = scmp.lt.s32.totalorder %s558, 1
      %s562 = scalar_select %p561, %s558, 1
      %s563 = smul.addr %s560, 2
      %s564 = sadd.s32 %s562, %s563
      %s565 = smul.addr %s564, 8
      %s566 = scalar_lea.vmem %s15, %s565
      %s567 = smul.u32 2, %s31
      %p569 = scmp.eq.s32.totalorder %s31, 0
      // Predicated region
      $region81: #{fwd.5} parent=79 // pred_check
        %p570 = pneg %p569
      $region82: #{fwd.5} parent=79 // pred_check_branch
        %572 = sbr.rel (%p570) target = $region84
      $region83: #{fwd.5} parent=79 // pred_region
        %v573 = vld [vmem:[%s544] sm:$0xff]
        %v574 = vld [vmem:[%s544 + $0x8] sm:$0xff]
        %v575 = vpack.c.bf16 %v574, %v573
        %v576 = vld [vmem:[%s3] sm:$0xf]
        %v577 = vld [vmem:[%s3 + $0x4] sm:$0xf]
        %v578 = vld [vmem:[%s3 + $0x8] sm:$0xf]
        %v579 = vld [vmem:[%s3 + $0xc] sm:$0xf]
        %v580 = vld [vmem:[%s4] sm:$0x1]
        %v582 = vlaneseq
        %v583 = vshrl.u32 %v582, 7
        %v584 = vsub.s32 0, %v583
        %v585 = vrot.slane %v580, %v584
        %v591 = vunpack.c.l.b16 %v576
        %v592 = vunpack.c.l.b16 %v577
        %v593 = vunpack.c.l.b16 %v578
        %v594 = vunpack.c.l.b16 %v579
        %v595 = vpack.c.b16 %v592, %v591
        %v596 = vpack.c.b16 %v594, %v593
        %vm599 = vcmask 261120
        %v601 = vsel %vm599, %v575, 0
        %603 = vmatprep.subr.bf16.mxu0 0
        %604 = vmatpush1.bf16.msra.mxu0 %v595
        %605 = vmatprep.subr.bf16.mxu0 0
        %606 = vmatpush1.bf16.msra.mxu0 %v596
        %607 = vmatprep.subr.bf16.mxu0 0
        %608 = vmatpush1.bf16.msra.mxu0 0
        %609 = vmatprep.subr.bf16.mxu0 0
        %610 = vmatpush1.bf16.msra.mxu0 0
        %611 = vmatprep.subr.bf16.mxu0 0
        %612 = vmatpush1.bf16.msra.mxu0 0
        %613 = vmatprep.subr.bf16.mxu0 0
        %614 = vmatpush1.bf16.msra.mxu0 0
        %615 = vmatprep.subr.bf16.mxu0 0
        %616 = vmatpush1.bf16.msra.mxu0 0
        %617 = vmatprep.subr.bf16.mxu0 0
        %618 = vmatpush1.bf16.msra.mxu0 0
        %619 = vmatprep.subr.bf16.mxu0 0
        %620 = vmatpush1.bf16.msra.mxu0 0
        %621 = vmatprep.subr.bf16.mxu0 0
        %622 = vmatpush1.bf16.msra.mxu0 0
        %623 = vmatprep.subr.bf16.mxu0 0
        %624 = vmatpush1.bf16.msra.mxu0 0
        %625 = vmatprep.subr.bf16.mxu0 0
        %626 = vmatpush1.bf16.msra.mxu0 0
        %627 = vmatprep.subr.bf16.mxu0 0
        %628 = vmatpush1.bf16.msra.mxu0 0
        %629 = vmatprep.subr.bf16.mxu0 0
        %630 = vmatpush1.bf16.msra.mxu0 0
        %631 = vmatprep.subr.bf16.mxu0 0
        %632 = vmatpush1.bf16.msra.mxu0 0
        %633 = vmatprep.subr.bf16.mxu0 0
        %634 = vmatpush1.bf16.msra.mxu0 0
        %635 = vmatprep.mubr.bf16.mxu0 0
        %636 = vmatmul.mubr.bf16.gmra.mrb[0].mxu0 %v601
        %v637 = vpop.f32.mrb[0].mxu0
        %v638 = vadd.f32 %v585, %v637
        %v639 = vpop.f32.mrb[0].mxu0
        %v640 = vpop.f32.mrb[0].mxu0
        %v641 = vadd.f32 %v585, %v640
        %v642 = vpop.f32.mrb[0].mxu0
        %643 = vdwg.mxu0
        %v644 = vpack.c.bf16 %v641, %v638
        %vm645 = vcmask 785408
        %646 = vst.msk [vmem:[#allocation2] sm:$0xff] %vm645, %v644
      $region84: #{fwd.5} parent=79 // pred_fallthru
        _
      %v647 = vld [vmem:[%s553] sm:$0xff]
      %v648 = vld [vmem:[%s553 + $0x8] sm:$0xff]
      %v649 = vld [vmem:[%s557] sm:$0x1]
      %s650 = smul.u32 %s31, 16
      %s651 = sshra.s32 %s650, 4
      %s652 = sand.u32 %s650, 15
      %s653 = smul.addr %s651, 8
      %s654 = scalar_lea.vmem [#allocation2], %s653
      %v655 = vld [vmem:[%s654] sm:$0xff]
      %v656 = vld [vmem:[#allocation2] sm:$0xff]
      %658 = vrot.lane.b32.xlu0 %v656, 96
      %v659 = vpop.permute.xlu0 %658
      %vm660 = vcmask 64512
      %v662 = vsel %vm660, %v655, 0
      %v665 = vsel %vm660, %v659, 0
      %667 = vmatprep.subr.bf16.mxu0 0
      %668 = vmatpush1.bf16.xpose.msra.mxu0 %v665
      %669 = vmatprep.subr.bf16.mxu0 0
      %670 = vmatpush1.bf16.xpose.msra.mxu0 0
      %671 = vmatprep.subr.bf16.mxu0 0
      %672 = vmatpush1.bf16.xpose.msra.mxu0 0
      %673 = vmatprep.subr.bf16.mxu0 0
      %674 = vmatpush1.bf16.xpose.msra.mxu0 0
      %675 = vmatprep.subr.bf16.mxu0 0
      %676 = vmatpush1.bf16.xpose.msra.mxu0 0
      %677 = vmatprep.subr.bf16.mxu0 0
      %678 = vmatpush1.bf16.xpose.msra.mxu0 0
      %679 = vmatprep.subr.bf16.mxu0 0
      %680 = vmatpush1.bf16.xpose.msra.mxu0 0
      %681 = vmatprep.subr.bf16.mxu0 0
      %682 = vmatpush1.bf16.xpose.msra.mxu0 0
      %683 = vmatprep.subr.bf16.mxu0 0
      %684 = vmatpush1.bf16.xpose.msra.mxu0 0
      %685 = vmatprep.subr.bf16.mxu0 0
      %686 = vmatpush1.bf16.xpose.msra.mxu0 0
      %687 = vmatprep.subr.bf16.mxu0 0
      %688 = vmatpush1.bf16.xpose.msra.mxu0 0
      %689 = vmatprep.subr.bf16.mxu0 0
      %690 = vmatpush1.bf16.xpose.msra.mxu0 0
      %691 = vmatprep.subr.bf16.mxu0 0
      %692 = vmatpush1.bf16.xpose.msra.mxu0 0
      %693 = vmatprep.subr.bf16.mxu0 0
      %694 = vmatpush1.bf16.xpose.msra.mxu0 0
      %695 = vmatprep.subr.bf16.mxu0 0
      %696 = vmatpush1.bf16.xpose.msra.mxu0 0
      %697 = vmatprep.subr.bf16.mxu0 0
      %698 = vmatpush1.bf16.xpose.msra.mxu0 0
      %699 = vmatprep.mubr.bf16.mxu0 0
      %700 = vmatmul.mubr.bf16.gmra.mrb[0].mxu0 %v662
      %v701 = vpop.f32.mrb[0].mxu0
      %v702 = vadd.f32 0.0, %v701
      %v703 = vpop.f32.mrb[0].mxu0
      %v704 = vpop.f32.mrb[0].mxu0
      %v705 = vadd.f32 0.0, %v704
      %v706 = vpop.f32.mrb[0].mxu0
      %707 = vdwg.mxu0
      %v708 = vmul.f32 %v702, 0.35355338
      %v709 = vmul.f32 %v705, 0.35355338
      %v711 = vlaneseq
      %v712 = vshrl.u32 %v711, 7
      %v713 = vsub.s32 0, %v712
      %v714 = vrot.slane %v649, %v713
      %v716 = vadd.f32 %v708, %v714
      %v717 = vadd.f32 %v709, %v714
      %vm718 = vcmask 130048
      %v719 = vsel %vm718, %v716, -inf
      %720 = vmax.xlane.f32.xlu0 %v719
      %v721 = vpop.xlane.xlu0 %720
      %v722 = vsel %vm718, %v717, -inf
      %723 = vmax.xlane.f32.xlu0 %v722
      %v724 = vpop.xlane.xlu0 %723
      %v725 = vsub.f32 %v716, %v721
      %v726 = vsub.f32 %v717, %v724
      %v727 = vmul.f32 %v725, 1.442695
      %v728 = vpow.pop %v727
      %v729 = vmul.f32 %v726, 1.442695
      %v730 = vpow.pop %v729
      %v731 = vsel %vm718, %v728, 0.0
      %732 = vadd.xlane.f32.xlu0 %v731
      %v733 = vpop.xlane.xlu0 %732
      %v734 = vsel %vm718, %v730, 0.0
      %735 = vadd.xlane.f32.xlu0 %v734
      %v736 = vpop.xlane.xlu0 %735
      %v737 = vrcp.pop %v733
      %v738 = vrcp.pop %v736
      %v739 = vmul.f32 %v728, %v737
      %v740 = vmul.f32 %v730, %v738
      %v741 = vpack.c.bf16 %v740, %v739
      %742 = vrot.lane.b32.xlu0 %v656, 64
      %v743 = vpop.permute.xlu0 %742
      %v746 = vsel %vm718, %v741, 0
      %748 = vmatprep.subr.bf16.mxu0 0
      %749 = vmatpush1.bf16.msra.mxu0 %v743
      %750 = vmatprep.subr.bf16.mxu0 0
      %751 = vmatpush1.bf16.msra.mxu0 0
      %752 = vmatprep.subr.bf16.mxu0 0
      %753 = vmatpush1.bf16.msra.mxu0 0
      %754 = vmatprep.subr.bf16.mxu0 0
      %755 = vmatpush1.bf16.msra.mxu0 0
      %756 = vmatprep.subr.bf16.mxu0 0
      %757 = vmatpush1.bf16.msra.mxu0 0
      %758 = vmatprep.subr.bf16.mxu0 0
      %759 = vmatpush1.bf16.msra.mxu0 0
      %760 = vmatprep.subr.bf16.mxu0 0
      %761 = vmatpush1.bf16.msra.mxu0 0
      %762 = vmatprep.subr.bf16.mxu0 0
      %763 = vmatpush1.bf16.msra.mxu0 0
      %764 = vmatprep.subr.bf16.mxu0 0
      %765 = vmatpush1.bf16.msra.mxu0 0
      %766 = vmatprep.subr.bf16.mxu0 0
      %767 = vmatpush1.bf16.msra.mxu0 0
      %768 = vmatprep.subr.bf16.mxu0 0
      %769 = vmatpush1.bf16.msra.mxu0 0
      %770 = vmatprep.subr.bf16.mxu0 0
      %771 = vmatpush1.bf16.msra.mxu0 0
      %772 = vmatprep.subr.bf16.mxu0 0
      %773 = vmatpush1.bf16.msra.mxu0 0
      %774 = vmatprep.subr.bf16.mxu0 0
      %775 = vmatpush1.bf16.msra.mxu0 0
      %776 = vmatprep.subr.bf16.mxu0 0
      %777 = vmatpush1.bf16.msra.mxu0 0
      %778 = vmatprep.subr.bf16.mxu0 0
      %779 = vmatpush1.bf16.msra.mxu0 0
      %780 = vmatprep.mubr.bf16.mxu0 0
      %781 = vmatmul.mubr.bf16.gmra.mrb[0].mxu0 %v746
      %v782 = vpop.f32.mrb[0].mxu0
      %v783 = vadd.f32 0.0, %v782
      %v784 = vpop.f32.mrb[0].mxu0
      %v785 = vpop.f32.mrb[0].mxu0
      %v786 = vadd.f32 0.0, %v785
      %v787 = vpop.f32.mrb[0].mxu0
      %788 = vdwg.mxu0
      %v789 = vpack.c.bf16 %v786, %v783
      %791 = vrot.lane.b32.xlu0 %v655, 120
      %v792 = vpop.permute.xlu0 %791
      %793 = vrot.lane.b32.xlu0 %v656, 88
      %v794 = vpop.permute.xlu0 %793
      %v796 = vsel %vm660, %v792, 0
      %v799 = vsel %vm660, %v794, 0
      %801 = vmatprep.subr.bf16.mxu0 0
      %802 = vmatpush1.bf16.xpose.msra.mxu0 %v799
      %803 = vmatprep.subr.bf16.mxu0 0
      %804 = vmatpush1.bf16.xpose.msra.mxu0 0
      %805 = vmatprep.subr.bf16.mxu0 0
      %806 = vmatpush1.bf16.xpose.msra.mxu0 0
      %807 = vmatprep.subr.bf16.mxu0 0
      %808 = vmatpush1.bf16.xpose.msra.mxu0 0
      %809 = vmatprep.subr.bf16.mxu0 0
      %810 = vmatpush1.bf16.xpose.msra.mxu0 0
      %811 = vmatprep.subr.bf16.mxu0 0
      %812 = vmatpush1.bf16.xpose.msra.mxu0 0
      %813 = vmatprep.subr.bf16.mxu0 0
      %814 = vmatpush1.bf16.xpose.msra.mxu0 0
      %815 = vmatprep.subr.bf16.mxu0 0
      %816 = vmatpush1.bf16.xpose.msra.mxu0 0
      %817 = vmatprep.subr.bf16.mxu0 0
      %818 = vmatpush1.bf16.xpose.msra.mxu0 0
      %819 = vmatprep.subr.bf16.mxu0 0
      %820 = vmatpush1.bf16.xpose.msra.mxu0 0
      %821 = vmatprep.subr.bf16.mxu0 0
      %822 = vmatpush1.bf16.xpose.msra.mxu0 0
      %823 = vmatprep.subr.bf16.mxu0 0
      %824 = vmatpush1.bf16.xpose.msra.mxu0 0
      %825 = vmatprep.subr.bf16.mxu0 0
      %826 = vmatpush1.bf16.xpose.msra.mxu0 0
      %827 = vmatprep.subr.bf16.mxu0 0
      %828 = vmatpush1.bf16.xpose.msra.mxu0 0
      %829 = vmatprep.subr.bf16.mxu0 0
      %830 = vmatpush1.bf16.xpose.msra.mxu0 0
      %831 = vmatprep.subr.bf16.mxu0 0
      %832 = vmatpush1.bf16.xpose.msra.mxu0 0
      %833 = vmatprep.mubr.bf16.mxu0 0
      %834 = vmatmul.mubr.bf16.gmra.mrb[0].mxu0 %v796
      %v835 = vpop.f32.mrb[0].mxu0
      %v836 = vadd.f32 0.0, %v835
      %v837 = vpop.f32.mrb[0].mxu0
      %v838 = vpop.f32.mrb[0].mxu0
      %v839 = vadd.f32 0.0, %v838
      %v840 = vpop.f32.mrb[0].mxu0
      %841 = vdwg.mxu0
      %v842 = vmul.f32 %v836, 0.35355338
      %v843 = vmul.f32 %v839, 0.35355338
      %v844 = vadd.f32 %v842, %v714
      %v845 = vadd.f32 %v843, %v714
      %v846 = vsel %vm718, %v844, -inf
      %847 = vmax.xlane.f32.xlu0 %v846
      %v848 = vpop.xlane.xlu0 %847
      %v849 = vsel %vm718, %v845, -inf
      %850 = vmax.xlane.f32.xlu0 %v849
      %v851 = vpop.xlane.xlu0 %850
      %v852 = vsub.f32 %v844, %v848
      %v853 = vsub.f32 %v845, %v851
      %v854 = vmul.f32 %v852, 1.442695
      %v855 = vpow.pop %v854
      %v856 = vmul.f32 %v853, 1.442695
      %v857 = vpow.pop %v856
      %v858 = vsel %vm718, %v855, 0.0
      %859 = vadd.xlane.f32.xlu0 %v858
      %v860 = vpop.xlane.xlu0 %859
      %v861 = vsel %vm718, %v857, 0.0
      %862 = vadd.xlane.f32.xlu0 %v861
      %v863 = vpop.xlane.xlu0 %862
      %v864 = vrcp.pop %v860
      %v865 = vrcp.pop %v863
      %v866 = vmul.f32 %v855, %v864
      %v867 = vmul.f32 %v857, %v865
      %v868 = vpack.c.bf16 %v867, %v866
      %869 = vrot.lane.b32.xlu0 %v656, 56
      %v870 = vpop.permute.xlu0 %869
      %v873 = vsel %vm718, %v868, 0
      %875 = vmatprep.subr.bf16.mxu0 0
      %876 = vmatpush1.bf16.msra.mxu0 %v870
      %877 = vmatprep.subr.bf16.mxu0 0
      %878 = vmatpush1.bf16.msra.mxu0 0
      %879 = vmatprep.subr.bf16.mxu0 0
      %880 = vmatpush1.bf16.msra.mxu0 0
      %881 = vmatprep.subr.bf16.mxu0 0
      %882 = vmatpush1.bf16.msra.mxu0 0
      %883 = vmatprep.subr.bf16.mxu0 0
      %884 = vmatpush1.bf16.msra.mxu0 0
      %885 = vmatprep.subr.bf16.mxu0 0
      %886 = vmatpush1.bf16.msra.mxu0 0
      %887 = vmatprep.subr.bf16.mxu0 0
      %888 = vmatpush1.bf16.msra.mxu0 0
      %889 = vmatprep.subr.bf16.mxu0 0
      %890 = vmatpush1.bf16.msra.mxu0 0
      %891 = vmatprep.subr.bf16.mxu0 0
      %892 = vmatpush1.bf16.msra.mxu0 0
      %893 = vmatprep.subr.bf16.mxu0 0
      %894 = vmatpush1.bf16.msra.mxu0 0
      %895 = vmatprep.subr.bf16.mxu0 0
      %896 = vmatpush1.bf16.msra.mxu0 0
      %897 = vmatprep.subr.bf16.mxu0 0
      %898 = vmatpush1.bf16.msra.mxu0 0
      %899 = vmatprep.subr.bf16.mxu0 0
      %900 = vmatpush1.bf16.msra.mxu0 0
      %901 = vmatprep.subr.bf16.mxu0 0
      %902 = vmatpush1.bf16.msra.mxu0 0
      %903 = vmatprep.subr.bf16.mxu0 0
      %904 = vmatpush1.bf16.msra.mxu0 0
      %905 = vmatprep.subr.bf16.mxu0 0
      %906 = vmatpush1.bf16.msra.mxu0 0
      %907 = vmatprep.mubr.bf16.mxu0 0
      %908 = vmatmul.mubr.bf16.gmra.mrb[0].mxu0 %v873
      %v909 = vpop.f32.mrb[0].mxu0
      %v910 = vadd.f32 0.0, %v909
      %v911 = vpop.f32.mrb[0].mxu0
      %v912 = vpop.f32.mrb[0].mxu0
      %v913 = vadd.f32 0.0, %v912
      %v914 = vpop.f32.mrb[0].mxu0
      %915 = vdwg.mxu0
      %v916 = vpack.c.bf16 %v913, %v910
      %917 = vrot.lane.b32.xlu0 %v655, 112
      %v918 = vpop.permute.xlu0 %917
      %919 = vrot.lane.b32.xlu0 %v656, 80
      %v920 = vpop.permute.xlu0 %919
      %v922 = vsel %vm660, %v918, 0
      %v925 = vsel %vm660, %v920, 0
      %927 = vmatprep.subr.bf16.mxu0 0
      %928 = vmatpush1.bf16.xpose.msra.mxu0 %v925
      %929 = vmatprep.subr.bf16.mxu0 0
      %930 = vmatpush1.bf16.xpose.msra.mxu0 0
      %931 = vmatprep.subr.bf16.mxu0 0
      %932 = vmatpush1.bf16.xpose.msra.mxu0 0
      %933 = vmatprep.subr.bf16.mxu0 0
      %934 = vmatpush1.bf16.xpose.msra.mxu0 0
      %935 = vmatprep.subr.bf16.mxu0 0
      %936 = vmatpush1.bf16.xpose.msra.mxu0 0
      %937 = vmatprep.subr.bf16.mxu0 0
      %938 = vmatpush1.bf16.xpose.msra.mxu0 0
      %939 = vmatprep.subr.bf16.mxu0 0
      %940 = vmatpush1.bf16.xpose.msra.mxu0 0
      %941 = vmatprep.subr.bf16.mxu0 0
      %942 = vmatpush1.bf16.xpose.msra.mxu0 0
      %943 = vmatprep.subr.bf16.mxu0 0
      %944 = vmatpush1.bf16.xpose.msra.mxu0 0
      %945 = vmatprep.subr.bf16.mxu0 0
      %946 = vmatpush1.bf16.xpose.msra.mxu0 0
      %947 = vmatprep.subr.bf16.mxu0 0
      %948 = vmatpush1.bf16.xpose.msra.mxu0 0
      %949 = vmatprep.subr.bf16.mxu0 0
      %950 = vmatpush1.bf16.xpose.msra.mxu0 0
      %951 = vmatprep.subr.bf16.mxu0 0
      %952 = vmatpush1.bf16.xpose.msra.mxu0 0
      %953 = vmatprep.subr.bf16.mxu0 0
      %954 = vmatpush1.bf16.xpose.msra.mxu0 0
      %955 = vmatprep.subr.bf16.mxu0 0
      %956 = vmatpush1.bf16.xpose.msra.mxu0 0
      %957 = vmatprep.subr.bf16.mxu0 0
      %958 = vmatpush1.bf16.xpose.msra.mxu0 0
      %959 = vmatprep.mubr.bf16.mxu0 0
      %960 = vmatmul.mubr.bf16.gmra.mrb[0].mxu0 %v922
      %v961 = vpop.f32.mrb[0].mxu0
      %v962 = vadd.f32 0.0, %v961
      %v963 = vpop.f32.mrb[0].mxu0
      %v964 = vpop.f32.mrb[0].mxu0
      %v965 = vadd.f32 0.0, %v964
      %v966 = vpop.f32.mrb[0].mxu0
      %967 = vdwg.mxu0
      %v968 = vmul.f32 %v962, 0.35355338
      %v969 = vmul.f32 %v965, 0.35355338
      %v970 = vadd.f32 %v968, %v714
      %v971 = vadd.f32 %v969, %v714
      %v972 = vsel %vm718, %v970, -inf
      %973 = vmax.xlane.f32.xlu0 %v972
      %v974 = vpop.xlane.xlu0 %973
      %v975 = vsel %vm718, %v971, -inf
      %976 = vmax.xlane.f32.xlu0 %v975
      %v977 = vpop.xlane.xlu0 %976
      %v978 = vsub.f32 %v970, %v974
      %v979 = vsub.f32 %v971, %v977
      %v980 = vmul.f32 %v978, 1.442695
      %v981 = vpow.pop %v980
      %v982 = vmul.f32 %v979, 1.442695
      %v983 = vpow.pop %v982
      %v984 = vsel %vm718, %v981, 0.0
      %985 = vadd.xlane.f32.xlu0 %v984
      %v986 = vpop.xlane.xlu0 %985
      %v987 = vsel %vm718, %v983, 0.0
      %988 = vadd.xlane.f32.xlu0 %v987
      %v989 = vpop.xlane.xlu0 %988
      %v990 = vrcp.pop %v986
      %v991 = vrcp.pop %v989
      %v992 = vmul.f32 %v981, %v990
      %v993 = vmul.f32 %v983, %v991
      %v994 = vpack.c.bf16 %v993, %v992
      %995 = vrot.lane.b32.xlu0 %v656, 48
      %v996 = vpop.permute.xlu0 %995
      %v999 = vsel %vm718, %v994, 0
      %1001 = vmatprep.subr.bf16.mxu0 0
      %1002 = vmatpush1.bf16.msra.mxu0 %v996
      %1003 = vmatprep.subr.bf16.mxu0 0
      %1004 = vmatpush1.bf16.msra.mxu0 0
      %1005 = vmatprep.subr.bf16.mxu0 0
      %1006 = vmatpush1.bf16.msra.mxu0 0
      %1007 = vmatprep.subr.bf16.mxu0 0
      %1008 = vmatpush1.bf16.msra.mxu0 0
      %1009 = vmatprep.subr.bf16.mxu0 0
      %1010 = vmatpush1.bf16.msra.mxu0 0
      %1011 = vmatprep.subr.bf16.mxu0 0
      %1012 = vmatpush1.bf16.msra.mxu0 0
      %1013 = vmatprep.subr.bf16.mxu0 0
      %1014 = vmatpush1.bf16.msra.mxu0 0
      %1015 = vmatprep.subr.bf16.mxu0 0
      %1016 = vmatpush1.bf16.msra.mxu0 0
      %1017 = vmatprep.subr.bf16.mxu0 0
      %1018 = vmatpush1.bf16.msra.mxu0 0
      %1019 = vmatprep.subr.bf16.mxu0 0
      %1020 = vmatpush1.bf16.msra.mxu0 0
      %1021 = vmatprep.subr.bf16.mxu0 0
      %1022 = vmatpush1.bf16.msra.mxu0 0
      %1023 = vmatprep.subr.bf16.mxu0 0
      %1024 = vmatpush1.bf16.msra.mxu0 0
      %1025 = vmatprep.subr.bf16.mxu0 0
      %1026 = vmatpush1.bf16.msra.mxu0 0
      %1027 = vmatprep.subr.bf16.mxu0 0
      %1028 = vmatpush1.bf16.msra.mxu0 0
      %1029 = vmatprep.subr.bf16.mxu0 0
      %1030 = vmatpush1.bf16.msra.mxu0 0
      %1031 = vmatprep.subr.bf16.mxu0 0
      %1032 = vmatpush1.bf16.msra.mxu0 0
      %1033 = vmatprep.mubr.bf16.mxu0 0
      %1034 = vmatmul.mubr.bf16.gmra.mrb[0].mxu0 %v999
      %v1035 = vpop.f32.mrb[0].mxu0
      %v1036 = vadd.f32 0.0, %v1035
      %v1037 = vpop.f32.mrb[0].mxu0
      %v1038 = vpop.f32.mrb[0].mxu0
      %v1039 = vadd.f32 0.0, %v1038
      %v1040 = vpop.f32.mrb[0].mxu0
      %1041 = vdwg.mxu0
      %v1042 = vpack.c.bf16 %v1039, %v1036
      %1043 = vrot.lane.b32.xlu0 %v655, 104
      %v1044 = vpop.permute.xlu0 %1043
      %1045 = vrot.lane.b32.xlu0 %v656, 72
      %v1046 = vpop.permute.xlu0 %1045
      %v1048 = vsel %vm660, %v1044, 0
      %v1051 = vsel %vm660, %v1046, 0
      %1053 = vmatprep.subr.bf16.mxu0 0
      %1054 = vmatpush1.bf16.xpose.msra.mxu0 %v1051
      %1055 = vmatprep.subr.bf16.mxu0 0
      %1056 = vmatpush1.bf16.xpose.msra.mxu0 0
      %1057 = vmatprep.subr.bf16.mxu0 0
      %1058 = vmatpush1.bf16.xpose.msra.mxu0 0
      %1059 = vmatprep.subr.bf16.mxu0 0
      %1060 = vmatpush1.bf16.xpose.msra.mxu0 0
      %1061 = vmatprep.subr.bf16.mxu0 0
      %1062 = vmatpush1.bf16.xpose.msra.mxu0 0
      %1063 = vmatprep.subr.bf16.mxu0 0
      %1064 = vmatpush1.bf16.xpose.msra.mxu0 0
      %1065 = vmatprep.subr.bf16.mxu0 0
      %1066 = vmatpush1.bf16.xpose.msra.mxu0 0
      %1067 = vmatprep.subr.bf16.mxu0 0
      %1068 = vmatpush1.bf16.xpose.msra.mxu0 0
      %1069 = vmatprep.subr.bf16.mxu0 0
      %1070 = vmatpush1.bf16.xpose.msra.mxu0 0
      %1071 = vmatprep.subr.bf16.mxu0 0
      %1072 = vmatpush1.bf16.xpose.msra.mxu0 0
      %1073 = vmatprep.subr.bf16.mxu0 0
      %1074 = vmatpush1.bf16.xpose.msra.mxu0 0
      %1075 = vmatprep.subr.bf16.mxu0 0
      %1076 = vmatpush1.bf16.xpose.msra.mxu0 0
      %1077 = vmatprep.subr.bf16.mxu0 0
      %1078 = vmatpush1.bf16.xpose.msra.mxu0 0
      %1079 = vmatprep.subr.bf16.mxu0 0
      %1080 = vmatpush1.bf16.xpose.msra.mxu0 0
      %1081 = vmatprep.subr.bf16.mxu0 0
      %1082 = vmatpush1.bf16.xpose.msra.mxu0 0
      %1083 = vmatprep.subr.bf16.mxu0 0
      %1084 = vmatpush1.bf16.xpose.msra.mxu0 0
      %1085 = vmatprep.mubr.bf16.mxu0 0
      %1086 = vmatmul.mubr.bf16.gmra.mrb[0].mxu0 %v1048
      %v1087 = vpop.f32.mrb[0].mxu0
      %v1088 = vadd.f32 0.0, %v1087
      %v1089 = vpop.f32.mrb[0].mxu0
      %v1090 = vpop.f32.mrb[0].mxu0
      %v1091 = vadd.f32 0.0, %v1090
      %v1092 = vpop.f32.mrb[0].mxu0
      %1093 = vdwg.mxu0
      %v1094 = vmul.f32 %v1088, 0.35355338
      %v1095 = vmul.f32 %v1091, 0.35355338
      %v1096 = vadd.f32 %v1094, %v714
      %v1097 = vadd.f32 %v1095, %v714
      %v1098 = vsel %vm718, %v1096, -inf
      %1099 = vmax.xlane.f32.xlu0 %v1098
      %v1100 = vpop.xlane.xlu0 %1099
      %v1101 = vsel %vm718, %v1097, -inf
      %1102 = vmax.xlane.f32.xlu0 %v1101
      %v1103 = vpop.xlane.xlu0 %1102
      %v1104 = vsub.f32 %v1096, %v1100
      %v1105 = vsub.f32 %v1097, %v1103
      %v1106 = vmul.f32 %v1104, 1.442695
      %v1107 = vpow.pop %v1106
      %v1108 = vmul.f32 %v1105, 1.442695
      %v1109 = vpow.pop %v1108
      %v1110 = vsel %vm718, %v1107, 0.0
      %1111 = vadd.xlane.f32.xlu0 %v1110
      %v1112 = vpop.xlane.xlu0 %1111
      %v1113 = vsel %vm718, %v1109, 0.0
      %1114 = vadd.xlane.f32.xlu0 %v1113
      %v1115 = vpop.xlane.xlu0 %1114
      %v1116 = vrcp.pop %v1112
      %v1117 = vrcp.pop %v1115
      %v1118 = vmul.f32 %v1107, %v1116
      %v1119 = vmul.f32 %v1109, %v1117
      %v1120 = vpack.c.bf16 %v1119, %v1118
      %1121 = vrot.lane.b32.xlu0 %v656, 40
      %v1122 = vpop.permute.xlu0 %1121
      %v1125 = vsel %vm718, %v1120, 0
      %1127 = vmatprep.subr.bf16.mxu0 0
      %1128 = vmatpush1.bf16.msra.mxu0 %v1122
      %1129 = vmatprep.subr.bf16.mxu0 0
      %1130 = vmatpush1.bf16.msra.mxu0 0
      %1131 = vmatprep.subr.bf16.mxu0 0
      %1132 = vmatpush1.bf16.msra.mxu0 0
      %1133 = vmatprep.subr.bf16.mxu0 0
      %1134 = vmatpush1.bf16.msra.mxu0 0
      %1135 = vmatprep.subr.bf16.mxu0 0
      %1136 = vmatpush1.bf16.msra.mxu0 0
      %1137 = vmatprep.subr.bf16.mxu0 0
      %1138 = vmatpush1.bf16.msra.mxu0 0
      %1139 = vmatprep.subr.bf16.mxu0 0
      %1140 = vmatpush1.bf16.msra.mxu0 0
      %1141 = vmatprep.subr.bf16.mxu0 0
      %1142 = vmatpush1.bf16.msra.mxu0 0
      %1143 = vmatprep.subr.bf16.mxu0 0
      %1144 = vmatpush1.bf16.msra.mxu0 0
      %1145 = vmatprep.subr.bf16.mxu0 0
      %1146 = vmatpush1.bf16.msra.mxu0 0
      %1147 = vmatprep.subr.bf16.mxu0 0
      %1148 = vmatpush1.bf16.msra.mxu0 0
      %1149 = vmatprep.subr.bf16.mxu0 0
      %1150 = vmatpush1.bf16.msra.mxu0 0
      %1151 = vmatprep.subr.bf16.mxu0 0
      %1152 = vmatpush1.bf16.msra.mxu0 0
      %1153 = vmatprep.subr.bf16.mxu0 0
      %1154 = vmatpush1.bf16.msra.mxu0 0
      %1155 = vmatprep.subr.bf16.mxu0 0
      %1156 = vmatpush1.bf16.msra.mxu0 0
      %1157 = vmatprep.subr.bf16.mxu0 0
      %1158 = vmatpush1.bf16.msra.mxu0 0
      %1159 = vmatprep.mubr.bf16.mxu0 0
      %1160 = vmatmul.mubr.bf16.gmra.mrb[0].mxu0 %v1125
      %v1161 = vpop.f32.mrb[0].mxu0
      %v1162 = vadd.f32 0.0, %v1161
      %v1163 = vpop.f32.mrb[0].mxu0
      %v1164 = vpop.f32.mrb[0].mxu0
      %v1165 = vadd.f32 0.0, %v1164
      %v1166 = vpop.f32.mrb[0].mxu0
      %1167 = vdwg.mxu0
      %v1168 = vpack.c.bf16 %v1165, %v1162
      %1170 = vrot.lane.b32.xlu0 %v916, 8
      %v1171 = vpop.permute.xlu0 %1170
      %1173 = vrot.lane.b32.xlu0 %v1042, 16
      %v1174 = vpop.permute.xlu0 %1173
      %1176 = vrot.lane.b32.xlu0 %v1168, 24
      %v1177 = vpop.permute.xlu0 %1176
      %v1180 = vsel %vm660, %v789, %v1171
      %v1182 = vsel %vm718, %v1180, %v1174
      %vm1183 = vcmask 195584
      %v1185 = vsel %vm1183, %v1182, %v1177
      %vm1187 = vcmask 261120
      %1188 = vst.msk [vmem:[#allocation3] sm:$0xff] %vm1187, %v1185
      %v1189 = vld [vmem:[#allocation3] sm:$0xff]
      %v1190 = vld [vmem:[%s5] sm:$0xf]
      %v1191 = vld [vmem:[%s5 + $0x4] sm:$0xf]
      %v1192 = vld [vmem:[%s5 + $0x8] sm:$0xf]
      %v1193 = vld [vmem:[%s5 + $0xc] sm:$0xf]
      %v1194 = vld [vmem:[%s6] sm:$0x1]
      %v1196 = vlaneseq
      %v1197 = vshrl.u32 %v1196, 7
      %v1198 = vsub.s32 0, %v1197
      %v1199 = vrot.slane %v1194, %v1198
      %v1205 = vunpack.c.l.b16 %v1190
      %v1206 = vunpack.c.l.b16 %v1191
      %v1207 = vunpack.c.l.b16 %v1192
      %v1208 = vunpack.c.l.b16 %v1193
      %v1209 = vpack.c.b16 %v1206, %v1205
      %v1210 = vpack.c.b16 %v1208, %v1207
      %v1214 = vsel %vm1187, %v1189, 0
      %1216 = vmatprep.subr.bf16.mxu0 0
      %1217 = vmatpush1.bf16.msra.mxu0 %v1209
      %1218 = vmatprep.subr.bf16.mxu0 0
      %1219 = vmatpush1.bf16.msra.mxu0 %v1210
      %1220 = vmatprep.subr.bf16.mxu0 0
      %1221 = vmatpush1.bf16.msra.mxu0 0
      %1222 = vmatprep.subr.bf16.mxu0 0
      %1223 = vmatpush1.bf16.msra.mxu0 0
      %1224 = vmatprep.subr.bf16.mxu0 0
      %1225 = vmatpush1.bf16.msra.mxu0 0
      %1226 = vmatprep.subr.bf16.mxu0 0
      %1227 = vmatpush1.bf16.msra.mxu0 0
      %1228 = vmatprep.subr.bf16.mxu0 0
      %1229 = vmatpush1.bf16.msra.mxu0 0
      %1230 = vmatprep.subr.bf16.mxu0 0
      %1231 = vmatpush1.bf16.msra.mxu0 0
      %1232 = vmatprep.subr.bf16.mxu0 0
      %1233 = vmatpush1.bf16.msra.mxu0 0
      %1234 = vmatprep.subr.bf16.mxu0 0
      %1235 = vmatpush1.bf16.msra.mxu0 0
      %1236 = vmatprep.subr.bf16.mxu0 0
      %1237 = vmatpush1.bf16.msra.mxu0 0
      %1238 = vmatprep.subr.bf16.mxu0 0
      %1239 = vmatpush1.bf16.msra.mxu0 0
      %1240 = vmatprep.subr.bf16.mxu0 0
      %1241 = vmatpush1.bf16.msra.mxu0 0
      %1242 = vmatprep.subr.bf16.mxu0 0
      %1243 = vmatpush1.bf16.msra.mxu0 0
      %1244 = vmatprep.subr.bf16.mxu0 0
      %1245 = vmatpush1.bf16.msra.mxu0 0
      %1246 = vmatprep.subr.bf16.mxu0 0
      %1247 = vmatpush1.bf16.msra.mxu0 0
      %1248 = vmatprep.mubr.bf16.mxu0 0
      %1249 = vmatmul.mubr.bf16.gmra.mrb[0].mxu0 %v1214
      %v1250 = vpop.f32.mrb[0].mxu0
      %v1251 = vadd.f32 %v1199, %v1250
      %v1252 = vpop.f32.mrb[0].mxu0
      %v1253 = vpop.f32.mrb[0].mxu0
      %v1254 = vadd.f32 %v1199, %v1253
      %v1255 = vpop.f32.mrb[0].mxu0
      %1256 = vdwg.mxu0
      %v1257 = vadd.f32 %v647, %v1251
      %v1258 = vadd.f32 %v648, %v1254
      %v1259 = vld [vmem:[%s7] sm:$0x1]
      %v1260 = vld [vmem:[%s8] sm:$0x1]
      %v1261 = vsel %vm1187, %v1257, 0.0
      %1262 = vadd.xlane.f32.xlu0 %v1261
      %v1263 = vpop.xlane.xlu0 %1262
      %v1264 = vsel %vm1187, %v1258, 0.0
      %1265 = vadd.xlane.f32.xlu0 %v1264
      %v1266 = vpop.xlane.xlu0 %1265
      %v1267 = vrcp.pop 32.0
      %v1268 = vmul.f32 %v1263, %v1267
      %v1269 = vmul.f32 %v1266, %v1267
      %v1270 = vsub.f32 %v1257, %v1268
      %v1271 = vsub.f32 %v1258, %v1269
      %v1272 = vmul.f32 %v1270, %v1270
      %v1273 = vmul.f32 %v1271, %v1271
      %v1274 = vsel %vm1187, %v1272, 0.0
      %1275 = vadd.xlane.f32.xlu0 %v1274
      %v1276 = vpop.xlane.xlu0 %1275
      %v1277 = vsel %vm1187, %v1273, 0.0
      %1278 = vadd.xlane.f32.xlu0 %v1277
      %v1279 = vpop.xlane.xlu0 %1278
      %v1280 = vmul.f32 %v1276, %v1267
      %v1281 = vmul.f32 %v1279, %v1267
      %v1282 = vadd.f32 %v1280, 1e-06
      %v1283 = vadd.f32 %v1281, 1e-06
      %v1284 = vrsqrt.pop %v1282
      %v1285 = vrsqrt.pop %v1283
      %v1286 = vmul.f32 %v1270, %v1284
      %v1287 = vmul.f32 %v1271, %v1285
      %v1289 = vlaneseq
      %v1290 = vshrl.u32 %v1289, 7
      %v1291 = vsub.s32 0, %v1290
      %v1292 = vrot.slane %v1259, %v1291
      %v1294 = vmul.f32 %v1286, %v1292
      %v1295 = vmul.f32 %v1287, %v1292
      %v1297 = vlaneseq
      %v1298 = vshrl.u32 %v1297, 7
      %v1299 = vsub.s32 0, %v1298
      %v1300 = vrot.slane %v1260, %v1299
      %v1302 = vadd.f32 %v1294, %v1300
      %v1303 = vadd.f32 %v1295, %v1300
      %v1304 = vpack.c.bf16 %v1303, %v1302
      %v1305 = vld [vmem:[%s9] sm:$0xf]
      %v1306 = vld [vmem:[%s9 + $0x4] sm:$0xf]
      %v1307 = vld [vmem:[%s9 + $0x8] sm:$0xf]
      %v1308 = vld [vmem:[%s9 + $0xc] sm:$0xf]
      %v1309 = vld [vmem:[%s10] sm:$0x1]
      %v1311 = vlaneseq
      %v1312 = vshrl.u32 %v1311, 7
      %v1313 = vsub.s32 0, %v1312
      %v1314 = vrot.slane %v1309, %v1313
      %v1320 = vunpack.c.l.b16 %v1305
      %v1321 = vunpack.c.l.b16 %v1306
      %v1322 = vunpack.c.l.b16 %v1307
      %v1323 = vunpack.c.l.b16 %v1308
      %v1324 = vpack.c.b16 %v1321, %v1320
      %v1325 = vpack.c.b16 %v1323, %v1322
      %v1329 = vsel %vm1187, %v1304, 0
      %1331 = vmatprep.subr.bf16.mxu0 0
      %1332 = vmatpush1.bf16.msra.mxu0 %v1324
      %1333 = vmatprep.subr.bf16.mxu0 0
      %1334 = vmatpush1.bf16.msra.mxu0 %v1325
      %1335 = vmatprep.subr.bf16.mxu0 0
      %1336 = vmatpush1.bf16.msra.mxu0 0
      %1337 = vmatprep.subr.bf16.mxu0 0
      %1338 = vmatpush1.bf16.msra.mxu0 0
      %1339 = vmatprep.subr.bf16.mxu0 0
      %1340 = vmatpush1.bf16.msra.mxu0 0
      %1341 = vmatprep.subr.bf16.mxu0 0
      %1342 = vmatpush1.bf16.msra.mxu0 0
      %1343 = vmatprep.subr.bf16.mxu0 0
      %1344 = vmatpush1.bf16.msra.mxu0 0
      %1345 = vmatprep.subr.bf16.mxu0 0
      %1346 = vmatpush1.bf16.msra.mxu0 0
      %1347 = vmatprep.subr.bf16.mxu0 0
      %1348 = vmatpush1.bf16.msra.mxu0 0
      %1349 = vmatprep.subr.bf16.mxu0 0
      %1350 = vmatpush1.bf16.msra.mxu0 0
      %1351 = vmatprep.subr.bf16.mxu0 0
      %1352 = vmatpush1.bf16.msra.mxu0 0
      %1353 = vmatprep.subr.bf16.mxu0 0
      %1354 = vmatpush1.bf16.msra.mxu0 0
      %1355 = vmatprep.subr.bf16.mxu0 0
      %1356 = vmatpush1.bf16.msra.mxu0 0
      %1357 = vmatprep.subr.bf16.mxu0 0
      %1358 = vmatpush1.bf16.msra.mxu0 0
      %1359 = vmatprep.subr.bf16.mxu0 0
      %1360 = vmatpush1.bf16.msra.mxu0 0
      %1361 = vmatprep.subr.bf16.mxu0 0
      %1362 = vmatpush1.bf16.msra.mxu0 0
      %1363 = vmatprep.mubr.bf16.mxu0 0
      %1364 = vmatmul.mubr.bf16.gmra.mrb[0].mxu0 %v1329
      %v1365 = vpop.f32.mrb[0].mxu0
      %v1366 = vadd.f32 %v1314, %v1365
      %v1367 = vpop.f32.mrb[0].mxu0
      %v1368 = vpop.f32.mrb[0].mxu0
      %v1369 = vadd.f32 %v1314, %v1368
      %v1370 = vpop.f32.mrb[0].mxu0
      %1371 = vdwg.mxu0
      %v1372 = vmul.f32 %v1366, 0.5
      %v1373 = vmul.f32 %v1369, 0.5
      %v1374 = vmul.f32 %v1366, 0.044715
      %v1375 = vmul.f32 %v1369, 0.044715
      %v1376 = vmul.f32 %v1374, %v1366
      %v1377 = vmul.f32 %v1375, %v1369
      %v1378 = vmul.f32 %v1376, %v1366
      %v1379 = vmul.f32 %v1377, %v1369
      %v1380 = vadd.f32 %v1366, %v1378
      %v1381 = vadd.f32 %v1369, %v1379
      %v1382 = vmul.f32 %v1380, 0.7978846
      %v1383 = vmul.f32 %v1381, 0.7978846
      %v1384 = vtanh.pop %v1382
      %v1385 = vtanh.pop %v1383
      %v1386 = vadd.f32 %v1384, 1.0
      %v1387 = vadd.f32 %v1385, 1.0
      %v1388 = vmul.f32 %v1372, %v1386
      %v1389 = vmul.f32 %v1373, %v1387
      %v1390 = vpack.c.bf16 %v1389, %v1388
      %v1391 = vld [vmem:[%s11] sm:$0xf]
      %v1392 = vld [vmem:[%s11 + $0x4] sm:$0xf]
      %v1393 = vld [vmem:[%s11 + $0x8] sm:$0xf]
      %v1394 = vld [vmem:[%s11 + $0xc] sm:$0xf]
      %v1395 = vld [vmem:[%s11 + $0x10] sm:$0xf]
      %v1396 = vld [vmem:[%s11 + $0x14] sm:$0xf]
      %v1397 = vld [vmem:[%s11 + $0x18] sm:$0xf]
      %v1398 = vld [vmem:[%s11 + $0x1c] sm:$0xf]
      %v1399 = vld [vmem:[%s12] sm:$0x1]
      %v1401 = vlaneseq
      %v1402 = vshrl.u32 %v1401, 7
      %v1403 = vsub.s32 0, %v1402
      %v1404 = vrot.slane %v1399, %v1403
      %v1414 = vunpack.c.l.b16 %v1391
      %v1415 = vunpack.c.l.b16 %v1392
      %v1416 = vunpack.c.l.b16 %v1393
      %v1417 = vunpack.c.l.b16 %v1394
      %v1418 = vunpack.c.l.b16 %v1395
      %v1419 = vunpack.c.l.b16 %v1396
      %v1420 = vunpack.c.l.b16 %v1397
      %v1421 = vunpack.c.l.b16 %v1398
      %v1422 = vpack.c.b16 %v1415, %v1414
      %v1423 = vpack.c.b16 %v1417, %v1416
      %v1424 = vpack.c.b16 %v1419, %v1418
      %v1425 = vpack.c.b16 %v1421, %v1420
      %vm1430 = vcmask 523264
      %v1432 = vsel %vm1430, %v1390, 0
      %1434 = vmatprep.subr.bf16.mxu0 0
      %1435 = vmatpush1.bf16.msra.mxu0 %v1422
      %1436 = vmatprep.subr.bf16.mxu0 0
      %1437 = vmatpush1.bf16.msra.mxu0 %v1423
      %1438 = vmatprep.subr.bf16.mxu0 0
      %1439 = vmatpush1.bf16.msra.mxu0 %v1424
      %1440 = vmatprep.subr.bf16.mxu0 0
      %1441 = vmatpush1.bf16.msra.mxu0 %v1425
      %1442 = vmatprep.subr.bf16.mxu0 0
      %1443 = vmatpush1.bf16.msra.mxu0 0
      %1444 = vmatprep.subr.bf16.mxu0 0
      %1445 = vmatpush1.bf16.msra.mxu0 0
      %1446 = vmatprep.subr.bf16.mxu0 0
      %1447 = vmatpush1.bf16.msra.mxu0 0
      %1448 = vmatprep.subr.bf16.mxu0 0
      %1449 = vmatpush1.bf16.msra.mxu0 0
      %1450 = vmatprep.subr.bf16.mxu0 0
      %1451 = vmatpush1.bf16.msra.mxu0 0
      %1452 = vmatprep.subr.bf16.mxu0 0
      %1453 = vmatpush1.bf16.msra.mxu0 0
      %1454 = vmatprep.subr.bf16.mxu0 0
      %1455 = vmatpush1.bf16.msra.mxu0 0
      %1456 = vmatprep.subr.bf16.mxu0 0
      %1457 = vmatpush1.bf16.msra.mxu0 0
      %1458 = vmatprep.subr.bf16.mxu0 0
      %1459 = vmatpush1.bf16.msra.mxu0 0
      %1460 = vmatprep.subr.bf16.mxu0 0
      %1461 = vmatpush1.bf16.msra.mxu0 0
      %1462 = vmatprep.subr.bf16.mxu0 0
      %1463 = vmatpush1.bf16.msra.mxu0 0
      %1464 = vmatprep.subr.bf16.mxu0 0
      %1465 = vmatpush1.bf16.msra.mxu0 0
      %1466 = vmatprep.mubr.bf16.mxu0 0
      %1467 = vmatmul.mubr.bf16.gmra.mrb[0].mxu0 %v1432
      %v1468 = vpop.f32.mrb[0].mxu0
      %v1469 = vadd.f32 %v1404, %v1468
      %v1470 = vpop.f32.mrb[0].mxu0
      %v1471 = vpop.f32.mrb[0].mxu0
      %v1472 = vadd.f32 %v1404, %v1471
      %v1473 = vpop.f32.mrb[0].mxu0
      %1474 = vdwg.mxu0
      %v1475 = vadd.f32 %v1302, %v1469
      %v1476 = vadd.f32 %v1303, %v1472
      %v1477 = vld [vmem:[%s13] sm:$0x1]
      %v1478 = vld [vmem:[%s14] sm:$0x1]
      %v1479 = vsel %vm1187, %v1475, 0.0
      %1480 = vadd.xlane.f32.xlu0 %v1479
      %v1481 = vpop.xlane.xlu0 %1480
      %v1482 = vsel %vm1187, %v1476, 0.0
      %1483 = vadd.xlane.f32.xlu0 %v1482
      %v1484 = vpop.xlane.xlu0 %1483
      %v1485 = vmul.f32 %v1481, %v1267
      %v1486 = vmul.f32 %v1484, %v1267
      %v1487 = vsub.f32 %v1475, %v1485
      %v1488 = vsub.f32 %v1476, %v1486
      %v1489 = vmul.f32 %v1487, %v1487
      %v1490 = vmul.f32 %v1488, %v1488
      %v1491 = vsel %vm1187, %v1489, 0.0
      %1492 = vadd.xlane.f32.xlu0 %v1491
      %v1493 = vpop.xlane.xlu0 %1492
      %v1494 = vsel %vm1187, %v1490, 0.0
      %1495 = vadd.xlane.f32.xlu0 %v1494
      %v1496 = vpop.xlane.xlu0 %1495
      %v1497 = vmul.f32 %v1493, %v1267
      %v1498 = vmul.f32 %v1496, %v1267
      %v1499 = vadd.f32 %v1497, 1e-06
      %v1500 = vadd.f32 %v1498, 1e-06
      %v1501 = vrsqrt.pop %v1499
      %v1502 = vrsqrt.pop %v1500
      %v1503 = vmul.f32 %v1487, %v1501
      %v1504 = vmul.f32 %v1488, %v1502
      %v1506 = vlaneseq
      %v1507 = vshrl.u32 %v1506, 7
      %v1508 = vsub.s32 0, %v1507
      %v1509 = vrot.slane %v1477, %v1508
      %v1511 = vmul.f32 %v1503, %v1509
      %v1512 = vmul.f32 %v1504, %v1509
      %v1514 = vlaneseq
      %v1515 = vshrl.u32 %v1514, 7
      %v1516 = vsub.s32 0, %v1515
      %v1517 = vrot.slane %v1478, %v1516
      %v1519 = vadd.f32 %v1511, %v1517
      %v1520 = vadd.f32 %v1512, %v1517
      %1521 = vst.msk [vmem:[%s566] sm:$0xff] %vm1187, %v1519
      %1522 = vst.msk [vmem:[%s566 + $0x8] sm:$0xff] %vm1187, %v1520
      %s1523 = smul.u32 2, %s31
      %p1524 = scmp.lt.s32.totalorder %s30, 1
      %s1525 = scalar_select %p1524, %s30, 1
      %p1526 = scmp.lt.s32.totalorder %s1523, 1
      %s1527 = scalar_select %p1526, %s1523, 1
      %s1528 = smul.addr %s1525, 2
      %s1529 = sadd.s32 %s1527, %s1528
      %s1530 = smul.addr %s1529, 8
      %s1531 = scalar_lea.vmem %s15, %s1530
      // Predicated region
      $region85: #{fwd.5} parent=79 // pred_check
        %p1532 = pneg %p390
      $region86: #{fwd.5} parent=79 // pred_check_branch
        %1534 = sbr.rel (%p1532) target = $region88
      $region87: #{fwd.5} parent=79 // pred_region
        %s1535 = smul.u32 2, %s31
      $region88: #{fwd.5} parent=79 // pred_fallthru
        _
    $region80: #{fwd.5} parent=5 // pred_fallthru
      _
    %p1536 = scmp.le.s32.totalorder 2, %s21
    // Predicated region
    $region89: #{fwd.5} parent=5 // pred_check
      %p1537 = pneg %p1536
    $region90: #{fwd.5} parent=5 // pred_check_branch
      %1539 = sbr.rel (%p1537) target = $region92
    $region91: #{fwd.5} parent=5 // pred_region
      %s1540 = ssub.s32 %s21, 2
      // Predicated region
      $region93: #{fwd.5} parent=91 // pred_check
        %p1541 = pneg %p396
      $region94: #{fwd.5} parent=91 // pred_check_branch
        %1543 = sbr.rel (%p1541) target = $region96
      $region95: #{fwd.5} parent=91 // pred_region
        %s1544 = smul.u32 2, %s33
        %p1545 = scmp.lt.s32.totalorder %s32, 1
        %s1546 = scalar_select %p1545, %s32, 1
        %p1547 = scmp.lt.s32.totalorder %s1544, 1
        %s1548 = scalar_select %p1547, %s1544, 1
        %s1549 = smul.addr %s1546, 2
        %s1550 = sadd.s32 %s1548, %s1549
        %s1551 = smul.addr %s1550, 8
        %s1552 = scalar_lea.vmem %s15, %s1551
      $region96: #{fwd.5} parent=91 // pred_fallthru
        _
    $region92: #{fwd.5} parent=5 // pred_fallthru
      _
  $region6: #{fwd.5} parent=0 // loop_footer
    %s25 = sadd.s32 1, %s21
  $region7: #{fwd.5} parent=0 // loop_footer_branch
    %20 = sbr.rel target = $region3
  $region8: #{fwd.5} parent=0 // loop_exit
    _

</llo_original>
